<compile_context>
chip_gen: v7x
topology: tpu7x:2x2x1
jax: 0.10.0
libtpu: 0.0.40
codegen_flags: <defaults>
</compile_context>

<pallas_src>
import functools
import math

import jax
import jax.numpy as jnp
from jax.experimental import pallas as pl
from jax.experimental.pallas import tpu as pltpu


# --------------------------------------------------------------------------- kernel
def _fused_block_kernel(xcol_ref, w1_ref, b1_ref, wd_ref, w2_ref, b2_ref,
                        emb_ref, wemb_ref, bemb_ref, o_ref, pad_ref, *,
                        B, OH, OW, P):
    """Entire BasicDownBlock forward for the whole (tiny) batch in one invocation."""
    M = B * OH * OW

    # ---- time-embedding MLP: ReLU(emb @ W + b) -> (B, P) f32 (fused, no extra launch)
    emb_out = jnp.dot(emb_ref[...], wemb_ref[...], preferred_element_type=jnp.float32)
    emb_out = jnp.maximum(emb_out + bemb_ref[...], 0.0)

    xcol = xcol_ref[...]                                            # (M, 9*Cin) bf16

    # ---- conv1 + folded bn1: ONE K=9*Cin matmul, then ReLU, then per-sample emb add
    y1 = jnp.dot(xcol, w1_ref[...], preferred_element_type=jnp.float32) + b1_ref[...]
    y1 = jnp.maximum(y1, 0.0)                                       # (M, P) f32
    y1 = y1.reshape(B, OH * OW, P) + emb_out[:, None, :]            # broadcast emb[b]

    # ---- downsample identity: reuses the SAME im2col operand, single K=9*Cin matmul
    identity = jnp.dot(xcol, wd_ref[...], preferred_element_type=jnp.float32)  # (M, P)

    # ---- conv2 (stride 1) + folded bn2, entirely from VMEM:
    #      write the bf16 intermediate into a zero-padded VMEM scratch, then
    #      accumulate the 9 taps into an f32 value that already carries
    #      residual + bn2 bias; finish with the fused ReLU.
    pad_ref[...] = jnp.zeros(pad_ref.shape, pad_ref.dtype)
    pad_ref[:, 1:OH + 1, 1:OW + 1, :] = y1.astype(jnp.bfloat16).reshape(B, OH, OW, P)

    acc = identity + b2_ref[...]                                    # (M, P) f32
    for dy in range(3):
        for dx in range(3):
            tap = pad_ref[:, dy:dy + OH, dx:dx + OW, :].reshape(M, P)   # bf16
            acc = acc + jnp.dot(tap, w2_ref[dy * 3 + dx],
                                preferred_element_type=jnp.float32)

    o_ref[...] = jnp.maximum(acc, 0.0).reshape(B, OH, OW, P)


# --------------------------------------------------------------------------- helpers
def bn_fold(bn, eps=1e-5):
    # eval-mode BatchNorm folded to per-channel scale/bias
    s = bn["gamma"] / jnp.sqrt(bn["var"] + eps)
    b = bn["beta"] - bn["mean"] * s
    return s, b


def im2col_3x3(x_bf16, stride, pad=1):
    """(B,H,W,C) -> (B*OH*OW, 9*C) bf16, tap-major / channel-minor column order."""
    B, H, W, C = x_bf16.shape
    OH = (H + 2 * pad - 3) // stride + 1
    OW = (W + 2 * pad - 3) // stride + 1
    xp = jnp.pad(x_bf16, ((0, 0), (pad, pad), (pad, pad), (0, 0)))
    cols = [xp[:, dy::stride, dx::stride, :][:, :OH, :OW, :]
            for dy in range(3) for dx in range(3)]
    xcol = jnp.concatenate(cols, axis=-1)                           # (B, OH, OW, 9*C)
    return xcol.reshape(B * OH * OW, 9 * C), OH, OW


# --------------------------------------------------------------------------- wrapper
def basic_down_block(p, x, emb, *, stride=2):
    """Matches BasicDownBlock.forward: conv1-bn1-relu (+emb), conv2-bn2, +identity, relu."""
    B, H, W, Cin = x.shape
    P = p["conv1"].shape[-1]
    E = emb.shape[-1]

    s1, b1 = bn_fold(p["bn1"])
    s2, b2 = bn_fold(p["bn2"])

    down_w = p.get("down_w")
    if down_w is None:
        # identity shortcut only valid when shapes already match (PyTorch contract)
        assert stride == 1 and Cin == P, "downsample required when stride!=1 or Cin!=planes"
        down_w = jnp.zeros((3, 3, Cin, P), jnp.float32).at[1, 1].set(jnp.eye(Cin, dtype=jnp.float32))

    # im2col of x (shared by conv1 and the downsample conv), bf16, tap-major columns
    xcol, OH, OW = im2col_3x3(x.astype(jnp.bfloat16), stride)
    M, K1 = xcol.shape                                              # (B*OH*OW, 9*Cin)

    # fold BN scales into weights; biases stay in the f32 epilogue
    w1 = (p["conv1"] * s1.reshape(1, 1, 1, P)).reshape(K1, P).astype(jnp.bfloat16)
    wd = down_w.reshape(K1, P).astype(jnp.bfloat16)
    w2 = (p["conv2"] * s2.reshape(1, 1, 1, P)).reshape(9, P, P).astype(jnp.bfloat16)
    b1r = b1.reshape(1, P).astype(jnp.float32)
    b2r = b2.reshape(1, P).astype(jnp.float32)
    wemb = p["emb_w"].astype(jnp.bfloat16)
    bemb = p["emb_b"].reshape(1, P).astype(jnp.float32)
    embb = emb.astype(jnp.bfloat16)

    kern = functools.partial(_fused_block_kernel, B=B, OH=OH, OW=OW, P=P)
    return pl.pallas_call(
        kern,
        out_shape=jax.ShapeDtypeStruct((B, OH, OW, P), jnp.float32),
        grid=(1,),
        in_specs=[
            pl.BlockSpec((M, K1), lambda i: (0, 0)),        # im2col of x
            pl.BlockSpec((K1, P), lambda i: (0, 0)),        # conv1 weights (bn1 folded)
            pl.BlockSpec((1, P), lambda i: (0, 0)),         # bn1 bias
            pl.BlockSpec((K1, P), lambda i: (0, 0)),        # downsample conv weights
            pl.BlockSpec((9, P, P), lambda i: (0, 0, 0)),   # conv2 weights (bn2 folded)
            pl.BlockSpec((1, P), lambda i: (0, 0)),         # bn2 bias
            pl.BlockSpec((B, E), lambda i: (0, 0)),         # emb input
            pl.BlockSpec((E, P), lambda i: (0, 0)),         # emb linear weight
            pl.BlockSpec((1, P), lambda i: (0, 0)),         # emb linear bias
        ],
        out_specs=pl.BlockSpec((B, OH, OW, P), lambda i: (0, 0, 0, 0)),
        scratch_shapes=[pltpu.VMEM((B, OH + 2, OW + 2, P), jnp.bfloat16)],
        compiler_params=pltpu.CompilerParams(dimension_semantics=("arbitrary",)),
    )(xcol, w1, b1r, wd, w2, b2r, embb, wemb, bemb)


# --------------------------------------------------------------------------- pure-JAX reference
def reference_block(p, x, emb, *, stride=2):
    def conv(xv, wv, st):
        return jax.lax.conv_general_dilated(
            xv.astype(jnp.bfloat16), wv.astype(jnp.bfloat16),
            window_strides=(st, st), padding=((1, 1), (1, 1)),
            dimension_numbers=("NHWC", "HWIO", "NHWC"),
            preferred_element_type=jnp.float32)

    s1, b1 = bn_fold(p["bn1"])
    s2, b2 = bn_fold(p["bn2"])
    emb_out = jnp.maximum(
        jnp.dot(emb.astype(jnp.bfloat16), p["emb_w"].astype(jnp.bfloat16),
                preferred_element_type=jnp.float32) + p["emb_b"], 0.0)
    out = conv(x, p["conv1"] * s1.reshape(1, 1, 1, -1), stride) + b1
    out = jnp.maximum(out, 0.0) + emb_out[:, None, None, :]
    identity = conv(x, p["down_w"], stride) if p.get("down_w") is not None else x
    out = conv(out, p["conv2"] * s2.reshape(1, 1, 1, -1), 1) + b2
    return jnp.maximum(out + identity, 0.0)


# --------------------------------------------------------------------------- deterministic init
class KeyGen:
    def __init__(self, seed):
        self.key = jax.random.PRNGKey(seed)

    def __call__(self):
        self.key, k = jax.random.split(self.key)
        return k


def init_block(seed, inplanes, planes, emb_channels):
    kg = KeyGen(seed)

    def conv_w(kh, kw, ci, co):
        return jax.random.normal(kg(), (kh, kw, ci, co), jnp.float32) / math.sqrt(kh * kw * ci)

    def bn(c):
        return dict(gamma=1.0 + 0.1 * jax.random.normal(kg(), (c,), jnp.float32),
                    beta=0.1 * jax.random.normal(kg(), (c,), jnp.float32),
                    mean=0.1 * jax.random.normal(kg(), (c,), jnp.float32),
                    var=1.0 + 0.1 * jax.random.uniform(kg(), (c,), jnp.float32))

    emb_w = jax.random.normal(kg(), (emb_channels, planes), jnp.float32) / math.sqrt(emb_channels)
    emb_b = 0.01 * jax.random.normal(kg(), (planes,), jnp.float32)
    return dict(emb_w=emb_w, emb_b=emb_b,
                conv1=conv_w(3, 3, inplanes, planes), bn1=bn(planes),
                conv2=conv_w(3, 3, planes, planes), bn2=bn(planes),
                down_w=conv_w(3, 3, inplanes, planes))   # downsample = conv3x3(inplanes, planes, stride)


# --------------------------------------------------------------------------- main
if __name__ == "__main__":
    INPLANES, PLANES, EMB_CH, STRIDE = 16, 32, 32, 2
    B, H, W = 2, 16, 16

    params = init_block(0, INPLANES, PLANES, EMB_CH)

    key = jax.random.PRNGKey(0)
    kx, ke = jax.random.split(key)
    x = jax.random.normal(kx, (B, H, W, INPLANES), jnp.float32)      # NHWC
    emb = jax.random.normal(ke, (B, EMB_CH), jnp.float32)

    @jax.jit
    def run(params, x, emb):
        return basic_down_block(params, x, emb, stride=STRIDE)

    out = run(params, x, emb)
    jax.block_until_ready(out)

    assert out.shape == (B, H // STRIDE, W // STRIDE, PLANES)
    assert bool(jnp.all(jnp.isfinite(out)))

    ref = reference_block(params, x, emb, stride=STRIDE)
    err = float(jnp.max(jnp.abs(out - ref)))
    assert err < 5e-2, f"max abs error vs reference = {err}"

    print("KERNEL_OK")
</pallas_src>

<mosaic_0001>
module attributes {stable_mosaic.version = 11 : i64} {
  func.func @_fused_block_kernel(%arg0: i32, %arg1: memref<128x144xbf16, #tpu.memory_space<vmem>>, %arg2: memref<144x32xbf16, #tpu.memory_space<vmem>>, %arg3: memref<1x32xf32, #tpu.memory_space<vmem>>, %arg4: memref<144x32xbf16, #tpu.memory_space<vmem>>, %arg5: memref<9x32x32xbf16, #tpu.memory_space<vmem>>, %arg6: memref<1x32xf32, #tpu.memory_space<vmem>>, %arg7: memref<2x32xbf16, #tpu.memory_space<vmem>>, %arg8: memref<32x32xbf16, #tpu.memory_space<vmem>>, %arg9: memref<1x32xf32, #tpu.memory_space<vmem>>, %arg10: memref<2x8x8x32xf32, #tpu.memory_space<vmem>>, %arg11: memref<2x10x10x32xbf16, #tpu.memory_space<vmem>>) attributes {dimension_semantics = [#tpu.dimension_semantics<arbitrary>], iteration_bounds = array<i64: 1>, scalar_prefetch = 0 : i64, scratch_operands = 1 : i64, tpu.core_type = #tpu.core_type<tc>, window_params = [{pipeline_mode = #tpu.pipeline_mode<synchronous>, transform_indices = @transform_0, window_bounds = array<i64: 128, 144>}, {pipeline_mode = #tpu.pipeline_mode<synchronous>, transform_indices = @transform_1, window_bounds = array<i64: 144, 32>}, {pipeline_mode = #tpu.pipeline_mode<synchronous>, transform_indices = @transform_2, window_bounds = array<i64: 1, 32>}, {pipeline_mode = #tpu.pipeline_mode<synchronous>, transform_indices = @transform_3, window_bounds = array<i64: 144, 32>}, {pipeline_mode = #tpu.pipeline_mode<synchronous>, transform_indices = @transform_4, window_bounds = array<i64: 9, 32, 32>}, {pipeline_mode = #tpu.pipeline_mode<synchronous>, transform_indices = @transform_5, window_bounds = array<i64: 1, 32>}, {pipeline_mode = #tpu.pipeline_mode<synchronous>, transform_indices = @transform_6, window_bounds = array<i64: 2, 32>}, {pipeline_mode = #tpu.pipeline_mode<synchronous>, transform_indices = @transform_7, window_bounds = array<i64: 32, 32>}, {pipeline_mode = #tpu.pipeline_mode<synchronous>, transform_indices = @transform_8, window_bounds = array<i64: 1, 32>}, {pipeline_mode = #tpu.pipeline_mode<synchronous>, transform_indices = @transform_9, window_bounds = array<i64: 2, 8, 8, 32>}]} {
    %c0 = arith.constant 0 : index
    %c0_0 = arith.constant 0 : index
    %0 = vector.load %arg7[%c0, %c0_0] : memref<2x32xbf16, #tpu.memory_space<vmem>>, vector<2x32xbf16>
    %c0_1 = arith.constant 0 : index
    %c0_2 = arith.constant 0 : index
    %1 = vector.load %arg8[%c0_1, %c0_2] : memref<32x32xbf16, #tpu.memory_space<vmem>>, vector<32x32xbf16>
    %cst = arith.constant dense<0.000000e+00> : vector<2x32xf32>
    %2 = tpu.matmul %0, %1, %cst {dimension_numbers = #tpu.dot_dimension_numbers<[1], [0], [0], [1], [0, 0, 1, 1], [], []>} : vector<2x32xbf16>, vector<32x32xbf16>, vector<2x32xf32> -> vector<2x32xf32>
    %c0_3 = arith.constant 0 : index
    %c0_4 = arith.constant 0 : index
    %3 = vector.load %arg9[%c0_3, %c0_4] : memref<1x32xf32, #tpu.memory_space<vmem>>, vector<1x32xf32>
    %4 = vector.broadcast %3 : vector<1x32xf32> to vector<2x32xf32>
    %5 = arith.addf %2, %4 : vector<2x32xf32>
    %cst_5 = arith.constant 0.000000e+00 : f32
    %6 = vector.broadcast %cst_5 : f32 to vector<2x32xf32>
    %7 = arith.maximumf %5, %6 : vector<2x32xf32>
    %c0_6 = arith.constant 0 : index
    %c0_7 = arith.constant 0 : index
    %8 = vector.load %arg1[%c0_6, %c0_7] : memref<128x144xbf16, #tpu.memory_space<vmem>>, vector<128x144xbf16>
    %c0_8 = arith.constant 0 : index
    %c0_9 = arith.constant 0 : index
    %9 = vector.load %arg2[%c0_8, %c0_9] : memref<144x32xbf16, #tpu.memory_space<vmem>>, vector<144x32xbf16>
    %cst_10 = arith.constant dense<0.000000e+00> : vector<128x32xf32>
    %10 = tpu.matmul %8, %9, %cst_10 {dimension_numbers = #tpu.dot_dimension_numbers<[1], [0], [0], [1], [0, 0, 1, 1], [], []>} : vector<128x144xbf16>, vector<144x32xbf16>, vector<128x32xf32> -> vector<128x32xf32>
    %c0_11 = arith.constant 0 : index
    %c0_12 = arith.constant 0 : index
    %11 = vector.load %arg3[%c0_11, %c0_12] : memref<1x32xf32, #tpu.memory_space<vmem>>, vector<1x32xf32>
    %12 = vector.broadcast %11 : vector<1x32xf32> to vector<128x32xf32>
    %13 = arith.addf %10, %12 : vector<128x32xf32>
    %cst_13 = arith.constant 0.000000e+00 : f32
    %14 = vector.broadcast %cst_13 : f32 to vector<128x32xf32>
    %15 = arith.maximumf %13, %14 : vector<128x32xf32>
    %16 = vector.shape_cast %15 : vector<128x32xf32> to vector<2x64x32xf32>
    %17 = vector.shape_cast %7 : vector<2x32xf32> to vector<2x1x32xf32>
    %18 = vector.broadcast %17 : vector<2x1x32xf32> to vector<2x64x32xf32>
    %19 = arith.addf %16, %18 : vector<2x64x32xf32>
    %c0_14 = arith.constant 0 : index
    %c0_15 = arith.constant 0 : index
    %20 = vector.load %arg4[%c0_14, %c0_15] : memref<144x32xbf16, #tpu.memory_space<vmem>>, vector<144x32xbf16>
    %cst_16 = arith.constant dense<0.000000e+00> : vector<128x32xf32>
    %21 = tpu.matmul %8, %20, %cst_16 {dimension_numbers = #tpu.dot_dimension_numbers<[1], [0], [0], [1], [0, 0, 1, 1], [], []>} : vector<128x144xbf16>, vector<144x32xbf16>, vector<128x32xf32> -> vector<128x32xf32>
    %cst_17 = arith.constant 0.000000e+00 : bf16
    %22 = vector.broadcast %cst_17 : bf16 to vector<2x10x10x32xbf16>
    %c0_18 = arith.constant 0 : index
    %c0_19 = arith.constant 0 : index
    %c0_20 = arith.constant 0 : index
    %c0_21 = arith.constant 0 : index
    %23 = vector.load %arg11[%c0_18, %c0_19, %c0_20, %c0_21] : memref<2x10x10x32xbf16, #tpu.memory_space<vmem>>, vector<2x10x10x32xbf16>
    tpu.vector_store %arg11[%c0_18, %c0_19, %c0_20, %c0_21], %22 {strides = array<i32>} : memref<2x10x10x32xbf16, #tpu.memory_space<vmem>>, vector<2x10x10x32xbf16>,
    %24 = arith.truncf %19 : vector<2x64x32xf32> to vector<2x64x32xbf16>
    %25 = vector.shape_cast %24 : vector<2x64x32xbf16> to vector<2x8x8x32xbf16>
    %c0_22 = arith.constant 0 : index
    %c1 = arith.constant 1 : index
    %c1_23 = arith.constant 1 : index
    %c0_24 = arith.constant 0 : index
    %26 = vector.load %arg11[%c0_22, %c1, %c1_23, %c0_24] : memref<2x10x10x32xbf16, #tpu.memory_space<vmem>>, vector<2x8x8x32xbf16>
    tpu.vector_store %arg11[%c0_22, %c1, %c1_23, %c0_24], %25 {strides = array<i32>} : memref<2x10x10x32xbf16, #tpu.memory_space<vmem>>, vector<2x8x8x32xbf16>,
    %c0_25 = arith.constant 0 : index
    %c0_26 = arith.constant 0 : index
    %27 = vector.load %arg6[%c0_25, %c0_26] : memref<1x32xf32, #tpu.memory_space<vmem>>, vector<1x32xf32>
    %28 = vector.broadcast %27 : vector<1x32xf32> to vector<128x32xf32>
    %29 = arith.addf %21, %28 : vector<128x32xf32>
    %c0_27 = arith.constant 0 : index
    %c0_28 = arith.constant 0 : index
    %c0_29 = arith.constant 0 : index
    %c0_30 = arith.constant 0 : index
    %30 = vector.load %arg11[%c0_27, %c0_28, %c0_29, %c0_30] : memref<2x10x10x32xbf16, #tpu.memory_space<vmem>>, vector<2x8x8x32xbf16>
    %31 = vector.shape_cast %30 : vector<2x8x8x32xbf16> to vector<128x32xbf16>
    %c0_31 = arith.constant 0 : index
    %c0_32 = arith.constant 0 : index
    %c0_33 = arith.constant 0 : index
    %32 = vector.load %arg5[%c0_31, %c0_32, %c0_33] : memref<9x32x32xbf16, #tpu.memory_space<vmem>>, vector<1x32x32xbf16>
    %33 = vector.shape_cast %32 : vector<1x32x32xbf16> to vector<32x32xbf16>
    %cst_34 = arith.constant dense<0.000000e+00> : vector<128x32xf32>
    %34 = tpu.matmul %31, %33, %cst_34 {dimension_numbers = #tpu.dot_dimension_numbers<[1], [0], [0], [1], [0, 0, 1, 1], [], []>} : vector<128x32xbf16>, vector<32x32xbf16>, vector<128x32xf32> -> vector<128x32xf32>
    %35 = arith.addf %29, %34 : vector<128x32xf32>
    %c0_35 = arith.constant 0 : index
    %c0_36 = arith.constant 0 : index
    %c1_37 = arith.constant 1 : index
    %c0_38 = arith.constant 0 : index
    %36 = vector.load %arg11[%c0_35, %c0_36, %c1_37, %c0_38] : memref<2x10x10x32xbf16, #tpu.memory_space<vmem>>, vector<2x8x8x32xbf16>
    %37 = vector.shape_cast %36 : vector<2x8x8x32xbf16> to vector<128x32xbf16>
    %c1_39 = arith.constant 1 : index
    %c0_40 = arith.constant 0 : index
    %c0_41 = arith.constant 0 : index
    %38 = vector.load %arg5[%c1_39, %c0_40, %c0_41] : memref<9x32x32xbf16, #tpu.memory_space<vmem>>, vector<1x32x32xbf16>
    %39 = vector.shape_cast %38 : vector<1x32x32xbf16> to vector<32x32xbf16>
    %cst_42 = arith.constant dense<0.000000e+00> : vector<128x32xf32>
    %40 = tpu.matmul %37, %39, %cst_42 {dimension_numbers = #tpu.dot_dimension_numbers<[1], [0], [0], [1], [0, 0, 1, 1], [], []>} : vector<128x32xbf16>, vector<32x32xbf16>, vector<128x32xf32> -> vector<128x32xf32>
    %41 = arith.addf %35, %40 : vector<128x32xf32>
    %c0_43 = arith.constant 0 : index
    %c0_44 = arith.constant 0 : index
    %c2 = arith.constant 2 : index
    %c0_45 = arith.constant 0 : index
    %42 = vector.load %arg11[%c0_43, %c0_44, %c2, %c0_45] : memref<2x10x10x32xbf16, #tpu.memory_space<vmem>>, vector<2x8x8x32xbf16>
    %43 = vector.shape_cast %42 : vector<2x8x8x32xbf16> to vector<128x32xbf16>
    %c2_46 = arith.constant 2 : index
    %c0_47 = arith.constant 0 : index
    %c0_48 = arith.constant 0 : index
    %44 = vector.load %arg5[%c2_46, %c0_47, %c0_48] : memref<9x32x32xbf16, #tpu.memory_space<vmem>>, vector<1x32x32xbf16>
    %45 = vector.shape_cast %44 : vector<1x32x32xbf16> to vector<32x32xbf16>
    %cst_49 = arith.constant dense<0.000000e+00> : vector<128x32xf32>
    %46 = tpu.matmul %43, %45, %cst_49 {dimension_numbers = #tpu.dot_dimension_numbers<[1], [0], [0], [1], [0, 0, 1, 1], [], []>} : vector<128x32xbf16>, vector<32x32xbf16>, vector<128x32xf32> -> vector<128x32xf32>
    %47 = arith.addf %41, %46 : vector<128x32xf32>
    %c0_50 = arith.constant 0 : index
    %c1_51 = arith.constant 1 : index
    %c0_52 = arith.constant 0 : index
    %c0_53 = arith.constant 0 : index
    %48 = vector.load %arg11[%c0_50, %c1_51, %c0_52, %c0_53] : memref<2x10x10x32xbf16, #tpu.memory_space<vmem>>, vector<2x8x8x32xbf16>
    %49 = vector.shape_cast %48 : vector<2x8x8x32xbf16> to vector<128x32xbf16>
    %c3 = arith.constant 3 : index
    %c0_54 = arith.constant 0 : index
    %c0_55 = arith.constant 0 : index
    %50 = vector.load %arg5[%c3, %c0_54, %c0_55] : memref<9x32x32xbf16, #tpu.memory_space<vmem>>, vector<1x32x32xbf16>
    %51 = vector.shape_cast %50 : vector<1x32x32xbf16> to vector<32x32xbf16>
    %cst_56 = arith.constant dense<0.000000e+00> : vector<128x32xf32>
    %52 = tpu.matmul %49, %51, %cst_56 {dimension_numbers = #tpu.dot_dimension_numbers<[1], [0], [0], [1], [0, 0, 1, 1], [], []>} : vector<128x32xbf16>, vector<32x32xbf16>, vector<128x32xf32> -> vector<128x32xf32>
    %53 = arith.addf %47, %52 : vector<128x32xf32>
    %c0_57 = arith.constant 0 : index
    %c1_58 = arith.constant 1 : index
    %c1_59 = arith.constant 1 : index
    %c0_60 = arith.constant 0 : index
    %54 = vector.load %arg11[%c0_57, %c1_58, %c1_59, %c0_60] : memref<2x10x10x32xbf16, #tpu.memory_space<vmem>>, vector<2x8x8x32xbf16>
    %55 = vector.shape_cast %54 : vector<2x8x8x32xbf16> to vector<128x32xbf16>
    %c4 = arith.constant 4 : index
    %c0_61 = arith.constant 0 : index
    %c0_62 = arith.constant 0 : index
    %56 = vector.load %arg5[%c4, %c0_61, %c0_62] : memref<9x32x32xbf16, #tpu.memory_space<vmem>>, vector<1x32x32xbf16>
    %57 = vector.shape_cast %56 : vector<1x32x32xbf16> to vector<32x32xbf16>
    %cst_63 = arith.constant dense<0.000000e+00> : vector<128x32xf32>
    %58 = tpu.matmul %55, %57, %cst_63 {dimension_numbers = #tpu.dot_dimension_numbers<[1], [0], [0], [1], [0, 0, 1, 1], [], []>} : vector<128x32xbf16>, vector<32x32xbf16>, vector<128x32xf32> -> vector<128x32xf32>
    %59 = arith.addf %53, %58 : vector<128x32xf32>
    %c0_64 = arith.constant 0 : index
    %c1_65 = arith.constant 1 : index
    %c2_66 = arith.constant 2 : index
    %c0_67 = arith.constant 0 : index
    %60 = vector.load %arg11[%c0_64, %c1_65, %c2_66, %c0_67] : memref<2x10x10x32xbf16, #tpu.memory_space<vmem>>, vector<2x8x8x32xbf16>
    %61 = vector.shape_cast %60 : vector<2x8x8x32xbf16> to vector<128x32xbf16>
    %c5 = arith.constant 5 : index
    %c0_68 = arith.constant 0 : index
    %c0_69 = arith.constant 0 : index
    %62 = vector.load %arg5[%c5, %c0_68, %c0_69] : memref<9x32x32xbf16, #tpu.memory_space<vmem>>, vector<1x32x32xbf16>
    %63 = vector.shape_cast %62 : vector<1x32x32xbf16> to vector<32x32xbf16>
    %cst_70 = arith.constant dense<0.000000e+00> : vector<128x32xf32>
    %64 = tpu.matmul %61, %63, %cst_70 {dimension_numbers = #tpu.dot_dimension_numbers<[1], [0], [0], [1], [0, 0, 1, 1], [], []>} : vector<128x32xbf16>, vector<32x32xbf16>, vector<128x32xf32> -> vector<128x32xf32>
    %65 = arith.addf %59, %64 : vector<128x32xf32>
    %c0_71 = arith.constant 0 : index
    %c2_72 = arith.constant 2 : index
    %c0_73 = arith.constant 0 : index
    %c0_74 = arith.constant 0 : index
    %66 = vector.load %arg11[%c0_71, %c2_72, %c0_73, %c0_74] : memref<2x10x10x32xbf16, #tpu.memory_space<vmem>>, vector<2x8x8x32xbf16>
    %67 = vector.shape_cast %66 : vector<2x8x8x32xbf16> to vector<128x32xbf16>
    %c6 = arith.constant 6 : index
    %c0_75 = arith.constant 0 : index
    %c0_76 = arith.constant 0 : index
    %68 = vector.load %arg5[%c6, %c0_75, %c0_76] : memref<9x32x32xbf16, #tpu.memory_space<vmem>>, vector<1x32x32xbf16>
    %69 = vector.shape_cast %68 : vector<1x32x32xbf16> to vector<32x32xbf16>
    %cst_77 = arith.constant dense<0.000000e+00> : vector<128x32xf32>
    %70 = tpu.matmul %67, %69, %cst_77 {dimension_numbers = #tpu.dot_dimension_numbers<[1], [0], [0], [1], [0, 0, 1, 1], [], []>} : vector<128x32xbf16>, vector<32x32xbf16>, vector<128x32xf32> -> vector<128x32xf32>
    %71 = arith.addf %65, %70 : vector<128x32xf32>
    %c0_78 = arith.constant 0 : index
    %c2_79 = arith.constant 2 : index
    %c1_80 = arith.constant 1 : index
    %c0_81 = arith.constant 0 : index
    %72 = vector.load %arg11[%c0_78, %c2_79, %c1_80, %c0_81] : memref<2x10x10x32xbf16, #tpu.memory_space<vmem>>, vector<2x8x8x32xbf16>
    %73 = vector.shape_cast %72 : vector<2x8x8x32xbf16> to vector<128x32xbf16>
    %c7 = arith.constant 7 : index
    %c0_82 = arith.constant 0 : index
    %c0_83 = arith.constant 0 : index
    %74 = vector.load %arg5[%c7, %c0_82, %c0_83] : memref<9x32x32xbf16, #tpu.memory_space<vmem>>, vector<1x32x32xbf16>
    %75 = vector.shape_cast %74 : vector<1x32x32xbf16> to vector<32x32xbf16>
    %cst_84 = arith.constant dense<0.000000e+00> : vector<128x32xf32>
    %76 = tpu.matmul %73, %75, %cst_84 {dimension_numbers = #tpu.dot_dimension_numbers<[1], [0], [0], [1], [0, 0, 1, 1], [], []>} : vector<128x32xbf16>, vector<32x32xbf16>, vector<128x32xf32> -> vector<128x32xf32>
    %77 = arith.addf %71, %76 : vector<128x32xf32>
    %c0_85 = arith.constant 0 : index
    %c2_86 = arith.constant 2 : index
    %c2_87 = arith.constant 2 : index
    %c0_88 = arith.constant 0 : index
    %78 = vector.load %arg11[%c0_85, %c2_86, %c2_87, %c0_88] : memref<2x10x10x32xbf16, #tpu.memory_space<vmem>>, vector<2x8x8x32xbf16>
    %79 = vector.shape_cast %78 : vector<2x8x8x32xbf16> to vector<128x32xbf16>
    %c8 = arith.constant 8 : index
    %c0_89 = arith.constant 0 : index
    %c0_90 = arith.constant 0 : index
    %80 = vector.load %arg5[%c8, %c0_89, %c0_90] : memref<9x32x32xbf16, #tpu.memory_space<vmem>>, vector<1x32x32xbf16>
    %81 = vector.shape_cast %80 : vector<1x32x32xbf16> to vector<32x32xbf16>
    %cst_91 = arith.constant dense<0.000000e+00> : vector<128x32xf32>
    %82 = tpu.matmul %79, %81, %cst_91 {dimension_numbers = #tpu.dot_dimension_numbers<[1], [0], [0], [1], [0, 0, 1, 1], [], []>} : vector<128x32xbf16>, vector<32x32xbf16>, vector<128x32xf32> -> vector<128x32xf32>
    %83 = arith.addf %77, %82 : vector<128x32xf32>
    %cst_92 = arith.constant 0.000000e+00 : f32
    %84 = vector.broadcast %cst_92 : f32 to vector<128x32xf32>
    %85 = arith.maximumf %83, %84 : vector<128x32xf32>
    %86 = vector.shape_cast %85 : vector<128x32xf32> to vector<2x8x8x32xf32>
    %c0_93 = arith.constant 0 : index
    %c0_94 = arith.constant 0 : index
    %c0_95 = arith.constant 0 : index
    %c0_96 = arith.constant 0 : index
    %87 = vector.load %arg10[%c0_93, %c0_94, %c0_95, %c0_96] : memref<2x8x8x32xf32, #tpu.memory_space<vmem>>, vector<2x8x8x32xf32>
    tpu.vector_store %arg10[%c0_93, %c0_94, %c0_95, %c0_96], %86 {strides = array<i32>} : memref<2x8x8x32xf32, #tpu.memory_space<vmem>>, vector<2x8x8x32xf32>,
    return
  }
  func.func @transform_0(%arg0: i32) -> (i32, i32) {
    %c0_i32 = arith.constant 0 : i32
    %c0_i32_0 = arith.constant 0 : i32
    %c0_i32_1 = arith.constant 0 : i32
    return %c0_i32, %c0_i32_0 : i32, i32
  }
  func.func @transform_1(%arg0: i32) -> (i32, i32) {
    %c0_i32 = arith.constant 0 : i32
    %c0_i32_0 = arith.constant 0 : i32
    %c0_i32_1 = arith.constant 0 : i32
    return %c0_i32, %c0_i32_0 : i32, i32
  }
  func.func @transform_2(%arg0: i32) -> (i32, i32) {
    %c0_i32 = arith.constant 0 : i32
    %c0_i32_0 = arith.constant 0 : i32
    %c0_i32_1 = arith.constant 0 : i32
    return %c0_i32, %c0_i32_0 : i32, i32
  }
  func.func @transform_3(%arg0: i32) -> (i32, i32) {
    %c0_i32 = arith.constant 0 : i32
    %c0_i32_0 = arith.constant 0 : i32
    %c0_i32_1 = arith.constant 0 : i32
    return %c0_i32, %c0_i32_0 : i32, i32
  }
  func.func @transform_4(%arg0: i32) -> (i32, i32, i32) {
    %c0_i32 = arith.constant 0 : i32
    %c0_i32_0 = arith.constant 0 : i32
    %c0_i32_1 = arith.constant 0 : i32
    %c0_i32_2 = arith.constant 0 : i32
    return %c0_i32, %c0_i32_0, %c0_i32_1 : i32, i32, i32
  }
  func.func @transform_5(%arg0: i32) -> (i32, i32) {
    %c0_i32 = arith.constant 0 : i32
    %c0_i32_0 = arith.constant 0 : i32
    %c0_i32_1 = arith.constant 0 : i32
    return %c0_i32, %c0_i32_0 : i32, i32
  }
  func.func @transform_6(%arg0: i32) -> (i32, i32) {
    %c0_i32 = arith.constant 0 : i32
    %c0_i32_0 = arith.constant 0 : i32
    %c0_i32_1 = arith.constant 0 : i32
    return %c0_i32, %c0_i32_0 : i32, i32
  }
  func.func @transform_7(%arg0: i32) -> (i32, i32) {
    %c0_i32 = arith.constant 0 : i32
    %c0_i32_0 = arith.constant 0 : i32
    %c0_i32_1 = arith.constant 0 : i32
    return %c0_i32, %c0_i32_0 : i32, i32
  }
  func.func @transform_8(%arg0: i32) -> (i32, i32) {
    %c0_i32 = arith.constant 0 : i32
    %c0_i32_0 = arith.constant 0 : i32
    %c0_i32_1 = arith.constant 0 : i32
    return %c0_i32, %c0_i32_0 : i32, i32
  }
  func.func @transform_9(%arg0: i32) -> (i32, i32, i32, i32) {
    %c0_i32 = arith.constant 0 : i32
    %c0_i32_0 = arith.constant 0 : i32
    %c0_i32_1 = arith.constant 0 : i32
    %c0_i32_2 = arith.constant 0 : i32
    %c0_i32_3 = arith.constant 0 : i32
    return %c0_i32, %c0_i32_0, %c0_i32_1, %c0_i32_2 : i32, i32, i32, i32
  }
}

</mosaic_0001>

<llo_original>
// kernel: run.1
$region0: #{run.1}
  #allocation0 [shape = 'u32[]', space=smem, size = 0x4, offset = 0x4, fixed_abs, tag = 'smem constant byte address 0x4 - core index']
  #allocation1 [shape = 'u32[144,128]{1,0:T(1,128)}', space=vmem, size = 0x12000, scoped, tag = 'internal scratch']
  #allocation2 [shape = 'bf16[2,10,10,32]{3,2,1,0:T(8,128)(2,1)}', space=vmem, size = 0x14000, scoped, tag = 'scratch operand']
  %s0 = inlined_call_operand.vmem [shape: bf16[128,144], index: 0, kind: input, shape index: {}]
  %s1 = inlined_call_operand.vmem [shape: bf16[144,32], index: 1, kind: input, shape index: {}]
  %s2 = inlined_call_operand.vmem [shape: f32[1,32], index: 2, kind: input, shape index: {}]
  %s3 = inlined_call_operand.vmem [shape: bf16[144,32], index: 3, kind: input, shape index: {}]
  %s4 = inlined_call_operand.vmem [shape: bf16[9,32,32], index: 4, kind: input, shape index: {}]
  %s5 = inlined_call_operand.vmem [shape: f32[1,32], index: 5, kind: input, shape index: {}]
  %s6 = inlined_call_operand.vmem [shape: bf16[2,32], index: 6, kind: input, shape index: {}]
  %s7 = inlined_call_operand.vmem [shape: bf16[32,32], index: 7, kind: input, shape index: {}]
  %s8 = inlined_call_operand.vmem [shape: f32[1,32], index: 8, kind: input, shape index: {}]
  %s9 = inlined_call_operand.hbm [shape: f32[2,8,8,32], index: 9, kind: output, shape index: {}]
  %s10 = sld [smem:[#allocation0]]
  $region46: #{run.1} parent=0
    _
  %s12 = ssub.s32 1, %s10
  %s13 = scalar_select 0, %s12, %s10
  $region1: #{run.1} parent=0
    #allocation3 [shape = 'u8[65536]{0}', space=vmem, size = 0x10000, scoped, tag = 'output window, operand 0, single buffered']
    #allocation4 [shape = 's32[1]{0}', space=sflag, size = 0x4, scoped, tag = 'scoped memory for run.1']
    %14 = vsyncpa [#allocation4], 0
    // Predicated region
    $region2: #{run.1} parent=1 // pred_check
      _
    $region3: #{run.1} parent=1 // pred_check_branch
      %16 = sbr.rel (0) target = $region5
    $region4: #{run.1} parent=1 // pred_region
      _
    $region5: #{run.1} parent=1 // pred_fallthru
      _
    // Predicated region
    $region6: #{run.1} parent=1 // pred_check
      _
    $region7: #{run.1} parent=1 // pred_check_branch
      %18 = sbr.rel (0) target = $region9
    $region8: #{run.1} parent=1 // pred_region
      _
    $region9: #{run.1} parent=1 // pred_fallthru
      _
    // Predicated region
    $region10: #{run.1} parent=1 // pred_check
      _
    $region11: #{run.1} parent=1 // pred_check_branch
      %20 = sbr.rel (0) target = $region13
    $region12: #{run.1} parent=1 // pred_region
      _
    $region13: #{run.1} parent=1 // pred_fallthru
      _
    // Predicated region
    $region14: #{run.1} parent=1 // pred_check
      _
    $region15: #{run.1} parent=1 // pred_check_branch
      %22 = sbr.rel (0) target = $region17
    $region16: #{run.1} parent=1 // pred_region
      _
    $region17: #{run.1} parent=1 // pred_fallthru
      _
    // Predicated region
    $region18: #{run.1} parent=1 // pred_check
      _
    $region19: #{run.1} parent=1 // pred_check_branch
      %24 = sbr.rel (0) target = $region21
    $region20: #{run.1} parent=1 // pred_region
      _
    $region21: #{run.1} parent=1 // pred_fallthru
      _
    // Predicated region
    $region22: #{run.1} parent=1 // pred_check
      _
    $region23: #{run.1} parent=1 // pred_check_branch
      %26 = sbr.rel (0) target = $region25
    $region24: #{run.1} parent=1 // pred_region
      _
    $region25: #{run.1} parent=1 // pred_fallthru
      _
    // Predicated region
    $region26: #{run.1} parent=1 // pred_check
      _
    $region27: #{run.1} parent=1 // pred_check_branch
      %28 = sbr.rel (0) target = $region29
    $region28: #{run.1} parent=1 // pred_region
      _
    $region29: #{run.1} parent=1 // pred_fallthru
      _
    // Predicated region
    $region30: #{run.1} parent=1 // pred_check
      _
    $region31: #{run.1} parent=1 // pred_check_branch
      %30 = sbr.rel (0) target = $region33
    $region32: #{run.1} parent=1 // pred_region
      _
    $region33: #{run.1} parent=1 // pred_fallthru
      _
    // Predicated region
    $region34: #{run.1} parent=1 // pred_check
      _
    $region35: #{run.1} parent=1 // pred_check_branch
      %32 = sbr.rel (0) target = $region37
    $region36: #{run.1} parent=1 // pred_region
      _
    $region37: #{run.1} parent=1 // pred_fallthru
      _
    %v34 = vld [vmem:[%s6] sm:$0x1]
    %v35 = vld [vmem:[%s7] sm:$0xf]
    %v36 = vld [vmem:[%s7 + $0x4] sm:$0xf]
    %v37 = vld [vmem:[%s7 + $0x8] sm:$0xf]
    %v38 = vld [vmem:[%s7 + $0xc] sm:$0xf]
    %v39 = vld [vmem:[%s8] sm:$0x1]
    %v41 = vlaneseq
    %v42 = vshrl.u32 %v41, 7
    %v43 = vsub.s32 0, %v42
    %v44 = vrot.slane %v39, %v43
    %v50 = vunpack.c.l.b16 %v35
    %v51 = vunpack.c.l.b16 %v36
    %v52 = vunpack.c.l.b16 %v37
    %v53 = vunpack.c.l.b16 %v38
    %v54 = vpack.c.b16 %v51, %v50
    %v55 = vpack.c.b16 %v53, %v52
    %vm58 = vcmask 261120
    %v60 = vsel %vm58, %v34, 0
    %62 = vmatprep.subr.bf16.mxu0 0
    %63 = vmatpush1.bf16.msra.mxu0 %v54
    %64 = vmatprep.subr.bf16.mxu0 0
    %65 = vmatpush1.bf16.msra.mxu0 %v55
    %66 = vmatprep.subr.bf16.mxu0 0
    %67 = vmatpush1.bf16.msra.mxu0 0
    %68 = vmatprep.subr.bf16.mxu0 0
    %69 = vmatpush1.bf16.msra.mxu0 0
    %70 = vmatprep.subr.bf16.mxu0 0
    %71 = vmatpush1.bf16.msra.mxu0 0
    %72 = vmatprep.subr.bf16.mxu0 0
    %73 = vmatpush1.bf16.msra.mxu0 0
    %74 = vmatprep.subr.bf16.mxu0 0
    %75 = vmatpush1.bf16.msra.mxu0 0
    %76 = vmatprep.subr.bf16.mxu0 0
    %77 = vmatpush1.bf16.msra.mxu0 0
    %78 = vmatprep.subr.bf16.mxu0 0
    %79 = vmatpush1.bf16.msra.mxu0 0
    %80 = vmatprep.subr.bf16.mxu0 0
    %81 = vmatpush1.bf16.msra.mxu0 0
    %82 = vmatprep.subr.bf16.mxu0 0
    %83 = vmatpush1.bf16.msra.mxu0 0
    %84 = vmatprep.subr.bf16.mxu0 0
    %85 = vmatpush1.bf16.msra.mxu0 0
    %86 = vmatprep.subr.bf16.mxu0 0
    %87 = vmatpush1.bf16.msra.mxu0 0
    %88 = vmatprep.subr.bf16.mxu0 0
    %89 = vmatpush1.bf16.msra.mxu0 0
    %90 = vmatprep.subr.bf16.mxu0 0
    %91 = vmatpush1.bf16.msra.mxu0 0
    %92 = vmatprep.subr.bf16.mxu0 0
    %93 = vmatpush1.bf16.msra.mxu0 0
    %94 = vmatprep.mubr.bf16.mxu0 0
    %95 = vmatmul.mubr.bf16.gmra.mrb[0].mxu0 %v60
    %v96 = vpop.f32.mrb[0].mxu0
    %v97 = vadd.f32 %v44, %v96
    %v98 = vpop.f32.mrb[0].mxu0
    %v99 = vpop.f32.mrb[0].mxu0
    %v100 = vpop.f32.mrb[0].mxu0
    %101 = vdwg.mxu0
    %v102 = vmax.f32 %v97, 0.0
    %v103 = vld [vmem:[%s0] sm:$0xff]
    %v104 = vld [vmem:[%s0 + $0x8] sm:$0xff]
    %v105 = vld [vmem:[%s0 + $0x10] sm:$0xff]
    %v106 = vld [vmem:[%s0 + $0x18] sm:$0xff]
    %v107 = vld [vmem:[%s0 + $0x20] sm:$0xff]
    %v108 = vld [vmem:[%s0 + $0x28] sm:$0xff]
    %v109 = vld [vmem:[%s0 + $0x30] sm:$0xff]
    %v110 = vld [vmem:[%s0 + $0x38] sm:$0xff]
    %v111 = vld [vmem:[%s0 + $0x40] sm:$0xff]
    %v112 = vld [vmem:[%s0 + $0x48] sm:$0xff]
    %v113 = vld [vmem:[%s0 + $0x50] sm:$0xff]
    %v114 = vld [vmem:[%s0 + $0x58] sm:$0xff]
    %v115 = vld [vmem:[%s0 + $0x60] sm:$0xff]
    %v116 = vld [vmem:[%s0 + $0x68] sm:$0xff]
    %v117 = vld [vmem:[%s0 + $0x70] sm:$0xff]
    %v118 = vld [vmem:[%s0 + $0x78] sm:$0xff]
    %v119 = vld [vmem:[%s1] sm:$0xf]
    %v120 = vld [vmem:[%s1 + $0x4] sm:$0xf]
    %v121 = vld [vmem:[%s1 + $0x8] sm:$0xf]
    %v122 = vld [vmem:[%s1 + $0xc] sm:$0xf]
    %v123 = vld [vmem:[%s1 + $0x10] sm:$0xf]
    %v124 = vld [vmem:[%s1 + $0x14] sm:$0xf]
    %v125 = vld [vmem:[%s1 + $0x18] sm:$0xf]
    %v126 = vld [vmem:[%s1 + $0x1c] sm:$0xf]
    %v127 = vld [vmem:[%s1 + $0x20] sm:$0xf]
    %v128 = vld [vmem:[%s1 + $0x24] sm:$0xf]
    %v129 = vld [vmem:[%s1 + $0x28] sm:$0xf]
    %v130 = vld [vmem:[%s1 + $0x2c] sm:$0xf]
    %v131 = vld [vmem:[%s1 + $0x30] sm:$0xf]
    %v132 = vld [vmem:[%s1 + $0x34] sm:$0xf]
    %v133 = vld [vmem:[%s1 + $0x38] sm:$0xf]
    %v134 = vld [vmem:[%s1 + $0x3c] sm:$0xf]
    %v135 = vld [vmem:[%s1 + $0x40] sm:$0xf]
    %v136 = vld [vmem:[%s1 + $0x44] sm:$0xf]
    %v137 = vld [vmem:[%s2] sm:$0x1]
    %v139 = vlaneseq
    %v140 = vshrl.u32 %v139, 7
    %v141 = vsub.s32 0, %v140
    %v142 = vrot.slane %v137, %v141
    %v160 = vunpack.c.l.b16 %v103
    %v161 = vunpack.c.h.b16 %v103
    %v162 = vunpack.c.l.b16 %v104
    %v163 = vunpack.c.h.b16 %v104
    %v164 = vunpack.c.l.b16 %v105
    %v165 = vunpack.c.h.b16 %v105
    %v166 = vunpack.c.l.b16 %v106
    %v167 = vunpack.c.h.b16 %v106
    %v168 = vunpack.c.l.b16 %v107
    %v169 = vunpack.c.h.b16 %v107
    %v170 = vunpack.c.l.b16 %v108
    %v171 = vunpack.c.h.b16 %v108
    %v172 = vunpack.c.l.b16 %v109
    %v173 = vunpack.c.h.b16 %v109
    %v174 = vunpack.c.l.b16 %v110
    %v175 = vunpack.c.h.b16 %v110
    %v176 = vunpack.c.l.b16 %v111
    %v177 = vunpack.c.h.b16 %v111
    %v178 = vunpack.c.l.b16 %v112
    %v179 = vunpack.c.h.b16 %v112
    %v180 = vunpack.c.l.b16 %v113
    %v181 = vunpack.c.h.b16 %v113
    %v182 = vunpack.c.l.b16 %v114
    %v183 = vunpack.c.h.b16 %v114
    %v184 = vunpack.c.l.b16 %v115
    %v185 = vunpack.c.h.b16 %v115
    %v186 = vunpack.c.l.b16 %v116
    %v187 = vunpack.c.h.b16 %v116
    %v188 = vunpack.c.l.b16 %v117
    %v189 = vunpack.c.h.b16 %v117
    %v190 = vunpack.c.l.b16 %v118
    %v191 = vunpack.c.h.b16 %v118
    %v192 = vpack.c.b16 %v162, %v160
    %v193 = vpack.c.b16 %v163, %v161
    %v194 = vpack.c.b16 %v166, %v164
    %v195 = vpack.c.b16 %v167, %v165
    %v196 = vpack.c.b16 %v170, %v168
    %v197 = vpack.c.b16 %v171, %v169
    %v198 = vpack.c.b16 %v174, %v172
    %v199 = vpack.c.b16 %v175, %v173
    %v200 = vpack.c.b16 %v178, %v176
    %v201 = vpack.c.b16 %v179, %v177
    %v202 = vpack.c.b16 %v182, %v180
    %v203 = vpack.c.b16 %v183, %v181
    %v204 = vpack.c.b16 %v186, %v184
    %v205 = vpack.c.b16 %v187, %v185
    %v206 = vpack.c.b16 %v190, %v188
    %v207 = vpack.c.b16 %v191, %v189
    %v234 = vunpack.c.l.b16 %v119
    %v235 = vunpack.c.l.b16 %v120
    %v236 = vunpack.c.l.b16 %v121
    %v237 = vunpack.c.l.b16 %v122
    %v238 = vunpack.c.l.b16 %v123
    %v239 = vunpack.c.l.b16 %v124
    %v240 = vunpack.c.l.b16 %v125
    %v241 = vunpack.c.l.b16 %v126
    %v242 = vunpack.c.l.b16 %v127
    %v243 = vunpack.c.l.b16 %v128
    %v244 = vunpack.c.l.b16 %v129
    %v245 = vunpack.c.l.b16 %v130
    %v246 = vunpack.c.l.b16 %v131
    %v247 = vunpack.c.l.b16 %v132
    %v248 = vunpack.c.l.b16 %v133
    %v249 = vunpack.c.l.b16 %v134
    %v250 = vunpack.c.l.b16 %v135
    %v251 = vunpack.c.l.b16 %v136
    %v252 = vpack.c.b16 %v235, %v234
    %v253 = vpack.c.b16 %v237, %v236
    %v254 = vpack.c.b16 %v239, %v238
    %v255 = vpack.c.b16 %v241, %v240
    %v256 = vpack.c.b16 %v243, %v242
    %v257 = vpack.c.b16 %v245, %v244
    %v258 = vpack.c.b16 %v247, %v246
    %v259 = vpack.c.b16 %v249, %v248
    %v260 = vpack.c.b16 %v251, %v250
    %vm270 = vcmask 130048
    %v272 = vsel %vm270, %v193, 0
    %v275 = vsel %vm270, %v195, 0
    %v278 = vsel %vm270, %v197, 0
    %v281 = vsel %vm270, %v199, 0
    %v284 = vsel %vm270, %v201, 0
    %v287 = vsel %vm270, %v203, 0
    %v290 = vsel %vm270, %v205, 0
    %v293 = vsel %vm270, %v207, 0
    %295 = vmatprep.subr.bf16.mxu0 0
    %296 = vmatpush1.bf16.msra.mxu0 %v252
    %297 = vmatprep.subr.bf16.mxu0 0
    %298 = vmatpush1.bf16.msra.mxu0 %v253
    %299 = vmatprep.subr.bf16.mxu0 0
    %300 = vmatpush1.bf16.msra.mxu0 %v254
    %301 = vmatprep.subr.bf16.mxu0 0
    %302 = vmatpush1.bf16.msra.mxu0 %v255
    %303 = vmatprep.subr.bf16.mxu0 0
    %304 = vmatpush1.bf16.msra.mxu0 %v256
    %305 = vmatprep.subr.bf16.mxu0 0
    %306 = vmatpush1.bf16.msra.mxu0 %v257
    %307 = vmatprep.subr.bf16.mxu0 0
    %308 = vmatpush1.bf16.msra.mxu0 %v258
    %309 = vmatprep.subr.bf16.mxu0 0
    %310 = vmatpush1.bf16.msra.mxu0 %v259
    %311 = vmatprep.subr.bf16.mxu0 0
    %312 = vmatpush1.bf16.msra.mxu0 %v260
    %313 = vmatprep.subr.bf16.mxu0 0
    %314 = vmatpush1.bf16.msra.mxu0 0
    %315 = vmatprep.subr.bf16.mxu0 0
    %316 = vmatpush1.bf16.msra.mxu0 0
    %317 = vmatprep.subr.bf16.mxu0 0
    %318 = vmatpush1.bf16.msra.mxu0 0
    %319 = vmatprep.subr.bf16.mxu0 0
    %320 = vmatpush1.bf16.msra.mxu0 0
    %321 = vmatprep.subr.bf16.mxu0 0
    %322 = vmatpush1.bf16.msra.mxu0 0
    %323 = vmatprep.subr.bf16.mxu0 0
    %324 = vmatpush1.bf16.msra.mxu0 0
    %325 = vmatprep.subr.bf16.mxu0 0
    %326 = vmatpush1.bf16.msra.mxu0 0
    %327 = vmatprep.mubr.bf16.mxu0 %v272
    %328 = vmatmul.mubr.bf16.gmra.mrb[0].mxu0 %v192
    %v329 = vpop.f32.mrb[0].mxu0
    %v330 = vadd.f32 %v142, %v329
    %v331 = vpop.f32.mrb[0].mxu0
    %v332 = vpop.f32.mrb[0].mxu0
    %v333 = vadd.f32 %v142, %v332
    %v334 = vpop.f32.mrb[0].mxu0
    %335 = vmatprep.mubr.bf16.mxu0 %v275
    %336 = vmatmul.mubr.bf16.gmra.mrb[0].mxu0 %v194
    %v337 = vpop.f32.mrb[0].mxu0
    %v338 = vadd.f32 %v142, %v337
    %v339 = vpop.f32.mrb[0].mxu0
    %v340 = vpop.f32.mrb[0].mxu0
    %v341 = vadd.f32 %v142, %v340
    %v342 = vpop.f32.mrb[0].mxu0
    %343 = vmatprep.mubr.bf16.mxu0 %v278
    %344 = vmatmul.mubr.bf16.gmra.mrb[0].mxu0 %v196
    %v345 = vpop.f32.mrb[0].mxu0
    %v346 = vadd.f32 %v142, %v345
    %v347 = vpop.f32.mrb[0].mxu0
    %v348 = vpop.f32.mrb[0].mxu0
    %v349 = vadd.f32 %v142, %v348
    %v350 = vpop.f32.mrb[0].mxu0
    %351 = vmatprep.mubr.bf16.mxu0 %v281
    %352 = vmatmul.mubr.bf16.gmra.mrb[0].mxu0 %v198
    %v353 = vpop.f32.mrb[0].mxu0
    %v354 = vadd.f32 %v142, %v353
    %v355 = vpop.f32.mrb[0].mxu0
    %v356 = vpop.f32.mrb[0].mxu0
    %v357 = vadd.f32 %v142, %v356
    %v358 = vpop.f32.mrb[0].mxu0
    %359 = vmatprep.mubr.bf16.mxu0 %v284
    %360 = vmatmul.mubr.bf16.gmra.mrb[0].mxu0 %v200
    %v361 = vpop.f32.mrb[0].mxu0
    %v362 = vadd.f32 %v142, %v361
    %v363 = vpop.f32.mrb[0].mxu0
    %v364 = vpop.f32.mrb[0].mxu0
    %v365 = vadd.f32 %v142, %v364
    %v366 = vpop.f32.mrb[0].mxu0
    %367 = vmatprep.mubr.bf16.mxu0 %v287
    %368 = vmatmul.mubr.bf16.gmra.mrb[0].mxu0 %v202
    %v369 = vpop.f32.mrb[0].mxu0
    %v370 = vadd.f32 %v142, %v369
    %v371 = vpop.f32.mrb[0].mxu0
    %v372 = vpop.f32.mrb[0].mxu0
    %v373 = vadd.f32 %v142, %v372
    %v374 = vpop.f32.mrb[0].mxu0
    %375 = vmatprep.mubr.bf16.mxu0 %v290
    %376 = vmatmul.mubr.bf16.gmra.mrb[0].mxu0 %v204
    %v377 = vpop.f32.mrb[0].mxu0
    %v378 = vadd.f32 %v142, %v377
    %v379 = vpop.f32.mrb[0].mxu0
    %v380 = vpop.f32.mrb[0].mxu0
    %v381 = vadd.f32 %v142, %v380
    %v382 = vpop.f32.mrb[0].mxu0
    %383 = vmatprep.mubr.bf16.mxu0 %v293
    %384 = vmatmul.mubr.bf16.gmra.mrb[0].mxu0 %v206
    %v385 = vpop.f32.mrb[0].mxu0
    %v386 = vadd.f32 %v142, %v385
    %v387 = vpop.f32.mrb[0].mxu0
    %v388 = vpop.f32.mrb[0].mxu0
    %v389 = vadd.f32 %v142, %v388
    %v390 = vpop.f32.mrb[0].mxu0
    %391 = vdwg.mxu0
    %v392 = vmax.f32 %v330, 0.0
    %v393 = vmax.f32 %v333, 0.0
    %v394 = vmax.f32 %v338, 0.0
    %v395 = vmax.f32 %v341, 0.0
    %v396 = vmax.f32 %v346, 0.0
    %v397 = vmax.f32 %v349, 0.0
    %v398 = vmax.f32 %v354, 0.0
    %v399 = vmax.f32 %v357, 0.0
    %v400 = vmax.f32 %v362, 0.0
    %v401 = vmax.f32 %v365, 0.0
    %v402 = vmax.f32 %v370, 0.0
    %v403 = vmax.f32 %v373, 0.0
    %v404 = vmax.f32 %v378, 0.0
    %v405 = vmax.f32 %v381, 0.0
    %v406 = vmax.f32 %v386, 0.0
    %v407 = vmax.f32 %v389, 0.0
    %v410 = vunpack.c.l.s4 1966171168
    %v411 = vunpack.c.0.s8 %v410
    %v412 = vlaneseq
    %v413 = vshrl.u32 %v412, 7
    %v414 = vsub.s32 %v411, %v413
    %v415 = vrot.slane %v102, %v414
    %v416 = vcombine.high %v415, %v415
    %v418 = vunpack.c.l.s4 1966171168
    %v419 = vunpack.c.0.s8 %v418
    %v420 = vlaneseq
    %v421 = vshrl.u32 %v420, 7
    %v422 = vsub.s32 %v419, %v421
    %v423 = vrot.slane %v415, %v422
    %v425 = vunpack.c.l.s4 1966171168
    %v426 = vunpack.c.0.s8 %v425
    %v427 = vlaneseq
    %v428 = vshrl.u32 %v427, 7
    %v429 = vsub.s32 %v426, %v428
    %v430 = vrot.slane %v416, %v429
    %v431 = vlaneseq
    %v432 = vshrl.u32 %v431, 7
    %v433 = vsub.s32 0, %v432
    %v434 = vrot.slane %v423, %v433
    %v435 = vlaneseq
    %v436 = vshrl.u32 %v435, 7
    %v437 = vsub.s32 0, %v436
    %v438 = vrot.slane %v430, %v437
    %v441 = vadd.f32 %v392, %v434
    %v442 = vadd.f32 %v393, %v434
    %v443 = vadd.f32 %v394, %v434
    %v444 = vadd.f32 %v395, %v434
    %v445 = vadd.f32 %v396, %v434
    %v446 = vadd.f32 %v397, %v434
    %v447 = vadd.f32 %v398, %v434
    %v448 = vadd.f32 %v399, %v434
    %v449 = vadd.f32 %v400, %v438
    %v450 = vadd.f32 %v401, %v438
    %v451 = vadd.f32 %v402, %v438
    %v452 = vadd.f32 %v403, %v438
    %v453 = vadd.f32 %v404, %v438
    %v454 = vadd.f32 %v405, %v438
    %v455 = vadd.f32 %v406, %v438
    %v456 = vadd.f32 %v407, %v438
    %v457 = vld [vmem:[%s3] sm:$0xf]
    %v458 = vld [vmem:[%s3 + $0x4] sm:$0xf]
    %v459 = vld [vmem:[%s3 + $0x8] sm:$0xf]
    %v460 = vld [vmem:[%s3 + $0xc] sm:$0xf]
    %v461 = vld [vmem:[%s3 + $0x10] sm:$0xf]
    %v462 = vld [vmem:[%s3 + $0x14] sm:$0xf]
    %v463 = vld [vmem:[%s3 + $0x18] sm:$0xf]
    %v464 = vld [vmem:[%s3 + $0x1c] sm:$0xf]
    %v465 = vld [vmem:[%s3 + $0x20] sm:$0xf]
    %v466 = vld [vmem:[%s3 + $0x24] sm:$0xf]
    %v467 = vld [vmem:[%s3 + $0x28] sm:$0xf]
    %v468 = vld [vmem:[%s3 + $0x2c] sm:$0xf]
    %v469 = vld [vmem:[%s3 + $0x30] sm:$0xf]
    %v470 = vld [vmem:[%s3 + $0x34] sm:$0xf]
    %v471 = vld [vmem:[%s3 + $0x38] sm:$0xf]
    %v472 = vld [vmem:[%s3 + $0x3c] sm:$0xf]
    %v473 = vld [vmem:[%s3 + $0x40] sm:$0xf]
    %v474 = vld [vmem:[%s3 + $0x44] sm:$0xf]
    %vm475 = vcmask 257024
    %476 = vst.msk [vmem:[#allocation2] sm:$0xf] %vm475, 0
    %vm477 = vcmask 253952
    %478 = vst.msk [vmem:[#allocation2 + $0x4] sm:$0x1] %vm477, 0
    %479 = vst.msk [vmem:[#allocation2 + $0x8] sm:$0xf] %vm475, 0
    %480 = vst.msk [vmem:[#allocation2 + $0xc] sm:$0x1] %vm477, 0
    %481 = vst.msk [vmem:[#allocation2 + $0x10] sm:$0xf] %vm475, 0
    %482 = vst.msk [vmem:[#allocation2 + $0x14] sm:$0x1] %vm477, 0
    %483 = vst.msk [vmem:[#allocation2 + $0x18] sm:$0xf] %vm475, 0
    %484 = vst.msk [vmem:[#allocation2 + $0x1c] sm:$0x1] %vm477, 0
    %485 = vst.msk [vmem:[#allocation2 + $0x20] sm:$0xf] %vm475, 0
    %486 = vst.msk [vmem:[#allocation2 + $0x24] sm:$0x1] %vm477, 0
    %487 = vst.msk [vmem:[#allocation2 + $0x28] sm:$0xf] %vm475, 0
    %488 = vst.msk [vmem:[#allocation2 + $0x2c] sm:$0x1] %vm477, 0
    %489 = vst.msk [vmem:[#allocation2 + $0x30] sm:$0xf] %vm475, 0
    %490 = vst.msk [vmem:[#allocation2 + $0x34] sm:$0x1] %vm477, 0
    %491 = vst.msk [vmem:[#allocation2 + $0x38] sm:$0xf] %vm475, 0
    %492 = vst.msk [vmem:[#allocation2 + $0x3c] sm:$0x1] %vm477, 0
    %493 = vst.msk [vmem:[#allocation2 + $0x40] sm:$0xf] %vm475, 0
    %494 = vst.msk [vmem:[#allocation2 + $0x44] sm:$0x1] %vm477, 0
    %495 = vst.msk [vmem:[#allocation2 + $0x48] sm:$0xf] %vm475, 0
    %496 = vst.msk [vmem:[#allocation2 + $0x4c] sm:$0x1] %vm477, 0
    %497 = vst.msk [vmem:[#allocation2 + $0x50] sm:$0xf] %vm475, 0
    %498 = vst.msk [vmem:[#allocation2 + $0x54] sm:$0x1] %vm477, 0
    %499 = vst.msk [vmem:[#allocation2 + $0x58] sm:$0xf] %vm475, 0
    %500 = vst.msk [vmem:[#allocation2 + $0x5c] sm:$0x1] %vm477, 0
    %501 = vst.msk [vmem:[#allocation2 + $0x60] sm:$0xf] %vm475, 0
    %502 = vst.msk [vmem:[#allocation2 + $0x64] sm:$0x1] %vm477, 0
    %503 = vst.msk [vmem:[#allocation2 + $0x68] sm:$0xf] %vm475, 0
    %504 = vst.msk [vmem:[#allocation2 + $0x6c] sm:$0x1] %vm477, 0
    %505 = vst.msk [vmem:[#allocation2 + $0x70] sm:$0xf] %vm475, 0
    %506 = vst.msk [vmem:[#allocation2 + $0x74] sm:$0x1] %vm477, 0
    %507 = vst.msk [vmem:[#allocation2 + $0x78] sm:$0xf] %vm475, 0
    %508 = vst.msk [vmem:[#allocation2 + $0x7c] sm:$0x1] %vm477, 0
    %509 = vst.msk [vmem:[#allocation2 + $0x80] sm:$0xf] %vm475, 0
    %510 = vst.msk [vmem:[#allocation2 + $0x84] sm:$0x1] %vm477, 0
    %511 = vst.msk [vmem:[#allocation2 + $0x88] sm:$0xf] %vm475, 0
    %512 = vst.msk [vmem:[#allocation2 + $0x8c] sm:$0x1] %vm477, 0
    %513 = vst.msk [vmem:[#allocation2 + $0x90] sm:$0xf] %vm475, 0
    %514 = vst.msk [vmem:[#allocation2 + $0x94] sm:$0x1] %vm477, 0
    %515 = vst.msk [vmem:[#allocation2 + $0x98] sm:$0xf] %vm475, 0
    %516 = vst.msk [vmem:[#allocation2 + $0x9c] sm:$0x1] %vm477, 0
    %v517 = vpack.c.bf16 %v442, %v441
    %v518 = vpack.c.bf16 %v444, %v443
    %v519 = vpack.c.bf16 %v446, %v445
    %v520 = vpack.c.bf16 %v448, %v447
    %v521 = vpack.c.bf16 %v450, %v449
    %v522 = vpack.c.bf16 %v452, %v451
    %v523 = vpack.c.bf16 %v454, %v453
    %v524 = vpack.c.bf16 %v456, %v455
    %v533 = vunpack.c.l.b16 %v517
    %v534 = vunpack.c.h.b16 %v517
    %v535 = vunpack.c.l.b16 %v518
    %v536 = vunpack.c.h.b16 %v518
    %v537 = vunpack.c.l.b16 %v519
    %v538 = vunpack.c.h.b16 %v519
    %v539 = vunpack.c.l.b16 %v520
    %v540 = vunpack.c.h.b16 %v520
    %v541 = vunpack.c.l.b16 %v521
    %v542 = vunpack.c.h.b16 %v521
    %v543 = vunpack.c.l.b16 %v522
    %v544 = vunpack.c.h.b16 %v522
    %v545 = vunpack.c.l.b16 %v523
    %v546 = vunpack.c.h.b16 %v523
    %v547 = vunpack.c.l.b16 %v524
    %v548 = vunpack.c.h.b16 %v524
    %v549 = vpack.c.b16 %v533, %v533
    %v550 = vpack.c.b16 %v534, %v534
    %v551 = vpack.c.b16 %v535, %v535
    %v552 = vpack.c.b16 %v536, %v536
    %v553 = vpack.c.b16 %v537, %v537
    %v554 = vpack.c.b16 %v538, %v538
    %v555 = vpack.c.b16 %v539, %v539
    %v556 = vpack.c.b16 %v540, %v540
    %v557 = vpack.c.b16 %v541, %v541
    %v558 = vpack.c.b16 %v542, %v542
    %v559 = vpack.c.b16 %v543, %v543
    %v560 = vpack.c.b16 %v544, %v544
    %v561 = vpack.c.b16 %v545, %v545
    %v562 = vpack.c.b16 %v546, %v546
    %v563 = vpack.c.b16 %v547, %v547
    %v564 = vpack.c.b16 %v548, %v548
    %v566 = vshrl.u32 %v549, 16
    %v568 = vrot.slane %v566, 7
    %v569 = vshll.u32 %v549, 16
    %v571 = vor.u32 %v568, %v569
    %v572 = vrot.slane %v568, 4
    %v574 = vshrl.u32 %v550, 16
    %v576 = vrot.slane %v574, 7
    %v577 = vshll.u32 %v550, 16
    %v579 = vor.u32 %v576, %v577
    %v580 = vrot.slane %v576, 4
    %v582 = vshrl.u32 %v551, 16
    %v584 = vrot.slane %v582, 7
    %v585 = vshll.u32 %v551, 16
    %v587 = vor.u32 %v584, %v585
    %v588 = vrot.slane %v584, 4
    %v590 = vshrl.u32 %v552, 16
    %v592 = vrot.slane %v590, 7
    %v593 = vshll.u32 %v552, 16
    %v595 = vor.u32 %v592, %v593
    %v596 = vrot.slane %v592, 4
    %v598 = vshrl.u32 %v553, 16
    %v600 = vrot.slane %v598, 7
    %v601 = vshll.u32 %v553, 16
    %v603 = vor.u32 %v600, %v601
    %v604 = vrot.slane %v600, 4
    %v606 = vshrl.u32 %v554, 16
    %v608 = vrot.slane %v606, 7
    %v609 = vshll.u32 %v554, 16
    %v611 = vor.u32 %v608, %v609
    %v612 = vrot.slane %v608, 4
    %v614 = vshrl.u32 %v555, 16
    %v616 = vrot.slane %v614, 7
    %v617 = vshll.u32 %v555, 16
    %v619 = vor.u32 %v616, %v617
    %v620 = vrot.slane %v616, 4
    %v622 = vshrl.u32 %v556, 16
    %v624 = vrot.slane %v622, 7
    %v625 = vshll.u32 %v556, 16
    %v627 = vor.u32 %v624, %v625
    %v628 = vrot.slane %v624, 4
    %v630 = vshrl.u32 %v557, 16
    %v632 = vrot.slane %v630, 7
    %v633 = vshll.u32 %v557, 16
    %v635 = vor.u32 %v632, %v633
    %v636 = vrot.slane %v632, 4
    %v638 = vshrl.u32 %v558, 16
    %v640 = vrot.slane %v638, 7
    %v641 = vshll.u32 %v558, 16
    %v643 = vor.u32 %v640, %v641
    %v644 = vrot.slane %v640, 4
    %v646 = vshrl.u32 %v559, 16
    %v648 = vrot.slane %v646, 7
    %v649 = vshll.u32 %v559, 16
    %v651 = vor.u32 %v648, %v649
    %v652 = vrot.slane %v648, 4
    %v654 = vshrl.u32 %v560, 16
    %v656 = vrot.slane %v654, 7
    %v657 = vshll.u32 %v560, 16
    %v659 = vor.u32 %v656, %v657
    %v660 = vrot.slane %v656, 4
    %v662 = vshrl.u32 %v561, 16
    %v664 = vrot.slane %v662, 7
    %v665 = vshll.u32 %v561, 16
    %v667 = vor.u32 %v664, %v665
    %v668 = vrot.slane %v664, 4
    %v670 = vshrl.u32 %v562, 16
    %v672 = vrot.slane %v670, 7
    %v673 = vshll.u32 %v562, 16
    %v675 = vor.u32 %v672, %v673
    %v676 = vrot.slane %v672, 4
    %v678 = vshrl.u32 %v563, 16
    %v680 = vrot.slane %v678, 7
    %v681 = vshll.u32 %v563, 16
    %v683 = vor.u32 %v680, %v681
    %v684 = vrot.slane %v680, 4
    %v686 = vshrl.u32 %v564, 16
    %v688 = vrot.slane %v686, 7
    %v689 = vshll.u32 %v564, 16
    %v691 = vor.u32 %v688, %v689
    %v692 = vrot.slane %v688, 4
    %s725 = scalar_lea.vmem [#allocation2], 8
    %vm726 = vcmask 257024
    %vm727 = vsmask.f32 7938
    %vm728 = vmand %vm726, %vm727
    %v729 = vld [vmem:[%s725] sm:$0xf]
    %v730 = vsel %vm728, %v571, %v729
    %731 = vst [vmem:[%s725] sm:$0xf] %v730
    %vm732 = vcmask 253952
    %vm733 = vsmask.f32 256
    %vm734 = vmand %vm732, %vm733
    %v735 = vld [vmem:[%s725 + $0x4] sm:$0x1]
    %v736 = vsel %vm734, %v572, %v735
    %737 = vst [vmem:[%s725 + $0x4] sm:$0x1] %v736
    %v738 = vld [vmem:[%s725 + $0x8] sm:$0xf]
    %v739 = vsel %vm728, %v579, %v738
    %740 = vst [vmem:[%s725 + $0x8] sm:$0xf] %v739
    %v741 = vld [vmem:[%s725 + $0xc] sm:$0x1]
    %v742 = vsel %vm734, %v580, %v741
    %743 = vst [vmem:[%s725 + $0xc] sm:$0x1] %v742
    %v744 = vld [vmem:[%s725 + $0x10] sm:$0xf]
    %v745 = vsel %vm728, %v587, %v744
    %746 = vst [vmem:[%s725 + $0x10] sm:$0xf] %v745
    %v747 = vld [vmem:[%s725 + $0x14] sm:$0x1]
    %v748 = vsel %vm734, %v588, %v747
    %749 = vst [vmem:[%s725 + $0x14] sm:$0x1] %v748
    %v750 = vld [vmem:[%s725 + $0x18] sm:$0xf]
    %v751 = vsel %vm728, %v595, %v750
    %752 = vst [vmem:[%s725 + $0x18] sm:$0xf] %v751
    %v753 = vld [vmem:[%s725 + $0x1c] sm:$0x1]
    %v754 = vsel %vm734, %v596, %v753
    %755 = vst [vmem:[%s725 + $0x1c] sm:$0x1] %v754
    %v756 = vld [vmem:[%s725 + $0x20] sm:$0xf]
    %v757 = vsel %vm728, %v603, %v756
    %758 = vst [vmem:[%s725 + $0x20] sm:$0xf] %v757
    %v759 = vld [vmem:[%s725 + $0x24] sm:$0x1]
    %v760 = vsel %vm734, %v604, %v759
    %761 = vst [vmem:[%s725 + $0x24] sm:$0x1] %v760
    %v762 = vld [vmem:[%s725 + $0x28] sm:$0xf]
    %v763 = vsel %vm728, %v611, %v762
    %764 = vst [vmem:[%s725 + $0x28] sm:$0xf] %v763
    %v765 = vld [vmem:[%s725 + $0x2c] sm:$0x1]
    %v766 = vsel %vm734, %v612, %v765
    %767 = vst [vmem:[%s725 + $0x2c] sm:$0x1] %v766
    %v768 = vld [vmem:[%s725 + $0x30] sm:$0xf]
    %v769 = vsel %vm728, %v619, %v768
    %770 = vst [vmem:[%s725 + $0x30] sm:$0xf] %v769
    %v771 = vld [vmem:[%s725 + $0x34] sm:$0x1]
    %v772 = vsel %vm734, %v620, %v771
    %773 = vst [vmem:[%s725 + $0x34] sm:$0x1] %v772
    %v774 = vld [vmem:[%s725 + $0x38] sm:$0xf]
    %v775 = vsel %vm728, %v627, %v774
    %776 = vst [vmem:[%s725 + $0x38] sm:$0xf] %v775
    %v777 = vld [vmem:[%s725 + $0x3c] sm:$0x1]
    %v778 = vsel %vm734, %v628, %v777
    %779 = vst [vmem:[%s725 + $0x3c] sm:$0x1] %v778
    %v780 = vld [vmem:[%s725 + $0x50] sm:$0xf]
    %v781 = vsel %vm728, %v635, %v780
    %782 = vst [vmem:[%s725 + $0x50] sm:$0xf] %v781
    %v783 = vld [vmem:[%s725 + $0x54] sm:$0x1]
    %v784 = vsel %vm734, %v636, %v783
    %785 = vst [vmem:[%s725 + $0x54] sm:$0x1] %v784
    %v786 = vld [vmem:[%s725 + $0x58] sm:$0xf]
    %v787 = vsel %vm728, %v643, %v786
    %788 = vst [vmem:[%s725 + $0x58] sm:$0xf] %v787
    %v789 = vld [vmem:[%s725 + $0x5c] sm:$0x1]
    %v790 = vsel %vm734, %v644, %v789
    %791 = vst [vmem:[%s725 + $0x5c] sm:$0x1] %v790
    %v792 = vld [vmem:[%s725 + $0x60] sm:$0xf]
    %v793 = vsel %vm728, %v651, %v792
    %794 = vst [vmem:[%s725 + $0x60] sm:$0xf] %v793
    %v795 = vld [vmem:[%s725 + $0x64] sm:$0x1]
    %v796 = vsel %vm734, %v652, %v795
    %797 = vst [vmem:[%s725 + $0x64] sm:$0x1] %v796
    %v798 = vld [vmem:[%s725 + $0x68] sm:$0xf]
    %v799 = vsel %vm728, %v659, %v798
    %800 = vst [vmem:[%s725 + $0x68] sm:$0xf] %v799
    %v801 = vld [vmem:[%s725 + $0x6c] sm:$0x1]
    %v802 = vsel %vm734, %v660, %v801
    %803 = vst [vmem:[%s725 + $0x6c] sm:$0x1] %v802
    %v804 = vld [vmem:[%s725 + $0x70] sm:$0xf]
    %v805 = vsel %vm728, %v667, %v804
    %806 = vst [vmem:[%s725 + $0x70] sm:$0xf] %v805
    %v807 = vld [vmem:[%s725 + $0x74] sm:$0x1]
    %v808 = vsel %vm734, %v668, %v807
    %809 = vst [vmem:[%s725 + $0x74] sm:$0x1] %v808
    %v810 = vld [vmem:[%s725 + $0x78] sm:$0xf]
    %v811 = vsel %vm728, %v675, %v810
    %812 = vst [vmem:[%s725 + $0x78] sm:$0xf] %v811
    %v813 = vld [vmem:[%s725 + $0x7c] sm:$0x1]
    %v814 = vsel %vm734, %v676, %v813
    %815 = vst [vmem:[%s725 + $0x7c] sm:$0x1] %v814
    %v816 = vld [vmem:[%s725 + $0x80] sm:$0xf]
    %v817 = vsel %vm728, %v683, %v816
    %818 = vst [vmem:[%s725 + $0x80] sm:$0xf] %v817
    %v819 = vld [vmem:[%s725 + $0x84] sm:$0x1]
    %v820 = vsel %vm734, %v684, %v819
    %821 = vst [vmem:[%s725 + $0x84] sm:$0x1] %v820
    %v822 = vld [vmem:[%s725 + $0x88] sm:$0xf]
    %v823 = vsel %vm728, %v691, %v822
    %824 = vst [vmem:[%s725 + $0x88] sm:$0xf] %v823
    %v825 = vld [vmem:[%s725 + $0x8c] sm:$0x1]
    %v826 = vsel %vm734, %v692, %v825
    %827 = vst [vmem:[%s725 + $0x8c] sm:$0x1] %v826
    %v828 = vld [vmem:[%s5] sm:$0x1]
    %v830 = vlaneseq
    %v831 = vshrl.u32 %v830, 7
    %v832 = vsub.s32 0, %v831
    %v833 = vrot.slane %v828, %v832
    %v853 = vunpack.c.l.b16 %v457
    %v854 = vunpack.c.l.b16 %v458
    %v855 = vunpack.c.l.b16 %v459
    %v856 = vunpack.c.l.b16 %v460
    %v857 = vunpack.c.l.b16 %v461
    %v858 = vunpack.c.l.b16 %v462
    %v859 = vunpack.c.l.b16 %v463
    %v860 = vunpack.c.l.b16 %v464
    %v861 = vunpack.c.l.b16 %v465
    %v862 = vunpack.c.l.b16 %v466
    %v863 = vunpack.c.l.b16 %v467
    %v864 = vunpack.c.l.b16 %v468
    %v865 = vunpack.c.l.b16 %v469
    %v866 = vunpack.c.l.b16 %v470
    %v867 = vunpack.c.l.b16 %v471
    %v868 = vunpack.c.l.b16 %v472
    %v869 = vunpack.c.l.b16 %v473
    %v870 = vunpack.c.l.b16 %v474
    %v871 = vpack.c.b16 %v854, %v853
    %v872 = vpack.c.b16 %v856, %v855
    %v873 = vpack.c.b16 %v858, %v857
    %v874 = vpack.c.b16 %v860, %v859
    %v875 = vpack.c.b16 %v862, %v861
    %v876 = vpack.c.b16 %v864, %v863
    %v877 = vpack.c.b16 %v866, %v865
    %v878 = vpack.c.b16 %v868, %v867
    %v879 = vpack.c.b16 %v870, %v869
    %889 = vmatprep.subr.bf16.mxu0 0
    %890 = vmatpush1.bf16.msra.mxu0 %v871
    %891 = vmatprep.subr.bf16.mxu0 0
    %892 = vmatpush1.bf16.msra.mxu0 %v872
    %893 = vmatprep.subr.bf16.mxu0 0
    %894 = vmatpush1.bf16.msra.mxu0 %v873
    %895 = vmatprep.subr.bf16.mxu0 0
    %896 = vmatpush1.bf16.msra.mxu0 %v874
    %897 = vmatprep.subr.bf16.mxu0 0
    %898 = vmatpush1.bf16.msra.mxu0 %v875
    %899 = vmatprep.subr.bf16.mxu0 0
    %900 = vmatpush1.bf16.msra.mxu0 %v876
    %901 = vmatprep.subr.bf16.mxu0 0
    %902 = vmatpush1.bf16.msra.mxu0 %v877
    %903 = vmatprep.subr.bf16.mxu0 0
    %904 = vmatpush1.bf16.msra.mxu0 %v878
    %905 = vmatprep.subr.bf16.mxu0 0
    %906 = vmatpush1.bf16.msra.mxu0 %v879
    %907 = vmatprep.subr.bf16.mxu0 0
    %908 = vmatpush1.bf16.msra.mxu0 0
    %909 = vmatprep.subr.bf16.mxu0 0
    %910 = vmatpush1.bf16.msra.mxu0 0
    %911 = vmatprep.subr.bf16.mxu0 0
    %912 = vmatpush1.bf16.msra.mxu0 0
    %913 = vmatprep.subr.bf16.mxu0 0
    %914 = vmatpush1.bf16.msra.mxu0 0
    %915 = vmatprep.subr.bf16.mxu0 0
    %916 = vmatpush1.bf16.msra.mxu0 0
    %917 = vmatprep.subr.bf16.mxu0 0
    %918 = vmatpush1.bf16.msra.mxu0 0
    %919 = vmatprep.subr.bf16.mxu0 0
    %920 = vmatpush1.bf16.msra.mxu0 0
    %921 = vmatprep.mubr.bf16.mxu0 %v272
    %922 = vmatmul.mubr.bf16.gmra.mrb[0].mxu0 %v192
    %v923 = vpop.f32.mrb[0].mxu0
    %v924 = vadd.f32 %v833, %v923
    %v925 = vpop.f32.mrb[0].mxu0
    %v926 = vpop.f32.mrb[0].mxu0
    %v927 = vadd.f32 %v833, %v926
    %v928 = vpop.f32.mrb[0].mxu0
    %929 = vmatprep.mubr.bf16.mxu0 %v275
    %930 = vmatmul.mubr.bf16.gmra.mrb[0].mxu0 %v194
    %v931 = vpop.f32.mrb[0].mxu0
    %v932 = vadd.f32 %v833, %v931
    %v933 = vpop.f32.mrb[0].mxu0
    %v934 = vpop.f32.mrb[0].mxu0
    %v935 = vadd.f32 %v833, %v934
    %v936 = vpop.f32.mrb[0].mxu0
    %937 = vmatprep.mubr.bf16.mxu0 %v278
    %938 = vmatmul.mubr.bf16.gmra.mrb[0].mxu0 %v196
    %v939 = vpop.f32.mrb[0].mxu0
    %v940 = vadd.f32 %v833, %v939
    %v941 = vpop.f32.mrb[0].mxu0
    %v942 = vpop.f32.mrb[0].mxu0
    %v943 = vadd.f32 %v833, %v942
    %v944 = vpop.f32.mrb[0].mxu0
    %945 = vmatprep.mubr.bf16.mxu0 %v281
    %946 = vmatmul.mubr.bf16.gmra.mrb[0].mxu0 %v198
    %v947 = vpop.f32.mrb[0].mxu0
    %v948 = vadd.f32 %v833, %v947
    %v949 = vpop.f32.mrb[0].mxu0
    %v950 = vpop.f32.mrb[0].mxu0
    %v951 = vadd.f32 %v833, %v950
    %v952 = vpop.f32.mrb[0].mxu0
    %953 = vmatprep.mubr.bf16.mxu0 %v284
    %954 = vmatmul.mubr.bf16.gmra.mrb[0].mxu0 %v200
    %v955 = vpop.f32.mrb[0].mxu0
    %v956 = vadd.f32 %v833, %v955
    %v957 = vpop.f32.mrb[0].mxu0
    %v958 = vpop.f32.mrb[0].mxu0
    %v959 = vadd.f32 %v833, %v958
    %v960 = vpop.f32.mrb[0].mxu0
    %961 = vmatprep.mubr.bf16.mxu0 %v287
    %962 = vmatmul.mubr.bf16.gmra.mrb[0].mxu0 %v202
    %v963 = vpop.f32.mrb[0].mxu0
    %v964 = vadd.f32 %v833, %v963
    %v965 = vpop.f32.mrb[0].mxu0
    %v966 = vpop.f32.mrb[0].mxu0
    %v967 = vadd.f32 %v833, %v966
    %v968 = vpop.f32.mrb[0].mxu0
    %969 = vmatprep.mubr.bf16.mxu0 %v290
    %970 = vmatmul.mubr.bf16.gmra.mrb[0].mxu0 %v204
    %v971 = vpop.f32.mrb[0].mxu0
    %v972 = vadd.f32 %v833, %v971
    %v973 = vpop.f32.mrb[0].mxu0
    %v974 = vpop.f32.mrb[0].mxu0
    %v975 = vadd.f32 %v833, %v974
    %v976 = vpop.f32.mrb[0].mxu0
    %977 = vmatprep.mubr.bf16.mxu0 %v293
    %978 = vmatmul.mubr.bf16.gmra.mrb[0].mxu0 %v206
    %v979 = vpop.f32.mrb[0].mxu0
    %v980 = vadd.f32 %v833, %v979
    %v981 = vpop.f32.mrb[0].mxu0
    %v982 = vpop.f32.mrb[0].mxu0
    %v983 = vadd.f32 %v833, %v982
    %v984 = vpop.f32.mrb[0].mxu0
    %985 = vdwg.mxu0
    %v986 = vld [vmem:[#allocation2] sm:$0xf]
    %v987 = vld [vmem:[#allocation2 + $0x8] sm:$0xf]
    %v988 = vld [vmem:[#allocation2 + $0x10] sm:$0xf]
    %v989 = vld [vmem:[#allocation2 + $0x18] sm:$0xf]
    %v990 = vld [vmem:[#allocation2 + $0x20] sm:$0xf]
    %v991 = vld [vmem:[#allocation2 + $0x28] sm:$0xf]
    %v992 = vld [vmem:[#allocation2 + $0x30] sm:$0xf]
    %v993 = vld [vmem:[#allocation2 + $0x38] sm:$0xf]
    %v994 = vld [vmem:[#allocation2 + $0x50] sm:$0xf]
    %v995 = vld [vmem:[#allocation2 + $0x58] sm:$0xf]
    %v996 = vld [vmem:[#allocation2 + $0x60] sm:$0xf]
    %v997 = vld [vmem:[#allocation2 + $0x68] sm:$0xf]
    %v998 = vld [vmem:[#allocation2 + $0x70] sm:$0xf]
    %v999 = vld [vmem:[#allocation2 + $0x78] sm:$0xf]
    %v1000 = vld [vmem:[#allocation2 + $0x80] sm:$0xf]
    %v1001 = vld [vmem:[#allocation2 + $0x88] sm:$0xf]
    %v1002 = vld [vmem:[%s4] sm:$0xf]
    %v1003 = vld [vmem:[%s4 + $0x4] sm:$0xf]
    %v1004 = vld [vmem:[%s4 + $0x8] sm:$0xf]
    %v1005 = vld [vmem:[%s4 + $0xc] sm:$0xf]
    %v1022 = vunpack.c.l.b16 %v986
    %v1023 = vunpack.c.l.b16 %v987
    %v1024 = vunpack.c.l.b16 %v988
    %v1025 = vunpack.c.l.b16 %v989
    %v1026 = vunpack.c.l.b16 %v990
    %v1027 = vunpack.c.l.b16 %v991
    %v1028 = vunpack.c.l.b16 %v992
    %v1029 = vunpack.c.l.b16 %v993
    %v1030 = vunpack.c.l.b16 %v994
    %v1031 = vunpack.c.l.b16 %v995
    %v1032 = vunpack.c.l.b16 %v996
    %v1033 = vunpack.c.l.b16 %v997
    %v1034 = vunpack.c.l.b16 %v998
    %v1035 = vunpack.c.l.b16 %v999
    %v1036 = vunpack.c.l.b16 %v1000
    %v1037 = vunpack.c.l.b16 %v1001
    %v1038 = vpack.c.b16 %v1023, %v1022
    %v1039 = vpack.c.b16 %v1025, %v1024
    %v1040 = vpack.c.b16 %v1027, %v1026
    %v1041 = vpack.c.b16 %v1029, %v1028
    %v1042 = vpack.c.b16 %v1031, %v1030
    %v1043 = vpack.c.b16 %v1033, %v1032
    %v1044 = vpack.c.b16 %v1035, %v1034
    %v1045 = vpack.c.b16 %v1037, %v1036
    %v1050 = vunpack.c.l.b16 %v1002
    %v1051 = vunpack.c.l.b16 %v1003
    %v1052 = vunpack.c.l.b16 %v1004
    %v1053 = vunpack.c.l.b16 %v1005
    %v1054 = vpack.c.b16 %v1051, %v1050
    %v1055 = vpack.c.b16 %v1053, %v1052
    %v1059 = vsel %vm58, %v1038, 0
    %v1062 = vsel %vm58, %v1039, 0
    %v1065 = vsel %vm58, %v1040, 0
    %v1068 = vsel %vm58, %v1041, 0
    %v1071 = vsel %vm58, %v1042, 0
    %v1074 = vsel %vm58, %v1043, 0
    %v1077 = vsel %vm58, %v1044, 0
    %v1080 = vsel %vm58, %v1045, 0
    %1082 = vmatprep.subr.bf16.mxu0 0
    %1083 = vmatpush1.bf16.msra.mxu0 %v1054
    %1084 = vmatprep.subr.bf16.mxu0 0
    %1085 = vmatpush1.bf16.msra.mxu0 %v1055
    %1086 = vmatprep.subr.bf16.mxu0 0
    %1087 = vmatpush1.bf16.msra.mxu0 0
    %1088 = vmatprep.subr.bf16.mxu0 0
    %1089 = vmatpush1.bf16.msra.mxu0 0
    %1090 = vmatprep.subr.bf16.mxu0 0
    %1091 = vmatpush1.bf16.msra.mxu0 0
    %1092 = vmatprep.subr.bf16.mxu0 0
    %1093 = vmatpush1.bf16.msra.mxu0 0
    %1094 = vmatprep.subr.bf16.mxu0 0
    %1095 = vmatpush1.bf16.msra.mxu0 0
    %1096 = vmatprep.subr.bf16.mxu0 0
    %1097 = vmatpush1.bf16.msra.mxu0 0
    %1098 = vmatprep.subr.bf16.mxu0 0
    %1099 = vmatpush1.bf16.msra.mxu0 0
    %1100 = vmatprep.subr.bf16.mxu0 0
    %1101 = vmatpush1.bf16.msra.mxu0 0
    %1102 = vmatprep.subr.bf16.mxu0 0
    %1103 = vmatpush1.bf16.msra.mxu0 0
    %1104 = vmatprep.subr.bf16.mxu0 0
    %1105 = vmatpush1.bf16.msra.mxu0 0
    %1106 = vmatprep.subr.bf16.mxu0 0
    %1107 = vmatpush1.bf16.msra.mxu0 0
    %1108 = vmatprep.subr.bf16.mxu0 0
    %1109 = vmatpush1.bf16.msra.mxu0 0
    %1110 = vmatprep.subr.bf16.mxu0 0
    %1111 = vmatpush1.bf16.msra.mxu0 0
    %1112 = vmatprep.subr.bf16.mxu0 0
    %1113 = vmatpush1.bf16.msra.mxu0 0
    %1114 = vmatprep.mubr.bf16.mxu0 0
    %1115 = vmatmul.mubr.bf16.gmra.mrb[0].mxu0 %v1059
    %v1116 = vpop.f32.mrb[0].mxu0
    %v1117 = vadd.f32 0.0, %v1116
    %v1118 = vpop.f32.mrb[0].mxu0
    %v1119 = vpop.f32.mrb[0].mxu0
    %v1120 = vadd.f32 0.0, %v1119
    %v1121 = vpop.f32.mrb[0].mxu0
    %1122 = vmatprep.mubr.bf16.mxu0 0
    %1123 = vmatmul.mubr.bf16.gmra.mrb[0].mxu0 %v1062
    %v1124 = vpop.f32.mrb[0].mxu0
    %v1125 = vadd.f32 0.0, %v1124
    %v1126 = vpop.f32.mrb[0].mxu0
    %v1127 = vpop.f32.mrb[0].mxu0
    %v1128 = vadd.f32 0.0, %v1127
    %v1129 = vpop.f32.mrb[0].mxu0
    %1130 = vmatprep.mubr.bf16.mxu0 0
    %1131 = vmatmul.mubr.bf16.gmra.mrb[0].mxu0 %v1065
    %v1132 = vpop.f32.mrb[0].mxu0
    %v1133 = vadd.f32 0.0, %v1132
    %v1134 = vpop.f32.mrb[0].mxu0
    %v1135 = vpop.f32.mrb[0].mxu0
    %v1136 = vadd.f32 0.0, %v1135
    %v1137 = vpop.f32.mrb[0].mxu0
    %1138 = vmatprep.mubr.bf16.mxu0 0
    %1139 = vmatmul.mubr.bf16.gmra.mrb[0].mxu0 %v1068
    %v1140 = vpop.f32.mrb[0].mxu0
    %v1141 = vadd.f32 0.0, %v1140
    %v1142 = vpop.f32.mrb[0].mxu0
    %v1143 = vpop.f32.mrb[0].mxu0
    %v1144 = vadd.f32 0.0, %v1143
    %v1145 = vpop.f32.mrb[0].mxu0
    %1146 = vmatprep.mubr.bf16.mxu0 0
    %1147 = vmatmul.mubr.bf16.gmra.mrb[0].mxu0 %v1071
    %v1148 = vpop.f32.mrb[0].mxu0
    %v1149 = vadd.f32 0.0, %v1148
    %v1150 = vpop.f32.mrb[0].mxu0
    %v1151 = vpop.f32.mrb[0].mxu0
    %v1152 = vadd.f32 0.0, %v1151
    %v1153 = vpop.f32.mrb[0].mxu0
    %1154 = vmatprep.mubr.bf16.mxu0 0
    %1155 = vmatmul.mubr.bf16.gmra.mrb[0].mxu0 %v1074
    %v1156 = vpop.f32.mrb[0].mxu0
    %v1157 = vadd.f32 0.0, %v1156
    %v1158 = vpop.f32.mrb[0].mxu0
    %v1159 = vpop.f32.mrb[0].mxu0
    %v1160 = vadd.f32 0.0, %v1159
    %v1161 = vpop.f32.mrb[0].mxu0
    %1162 = vmatprep.mubr.bf16.mxu0 0
    %1163 = vmatmul.mubr.bf16.gmra.mrb[0].mxu0 %v1077
    %v1164 = vpop.f32.mrb[0].mxu0
    %v1165 = vadd.f32 0.0, %v1164
    %v1166 = vpop.f32.mrb[0].mxu0
    %v1167 = vpop.f32.mrb[0].mxu0
    %v1168 = vadd.f32 0.0, %v1167
    %v1169 = vpop.f32.mrb[0].mxu0
    %1170 = vmatprep.mubr.bf16.mxu0 0
    %1171 = vmatmul.mubr.bf16.gmra.mrb[0].mxu0 %v1080
    %v1172 = vpop.f32.mrb[0].mxu0
    %v1173 = vadd.f32 0.0, %v1172
    %v1174 = vpop.f32.mrb[0].mxu0
    %v1175 = vpop.f32.mrb[0].mxu0
    %v1176 = vadd.f32 0.0, %v1175
    %v1177 = vpop.f32.mrb[0].mxu0
    %1178 = vdwg.mxu0
    %v1179 = vadd.f32 %v924, %v1117
    %v1180 = vadd.f32 %v927, %v1120
    %v1181 = vadd.f32 %v932, %v1125
    %v1182 = vadd.f32 %v935, %v1128
    %v1183 = vadd.f32 %v940, %v1133
    %v1184 = vadd.f32 %v943, %v1136
    %v1185 = vadd.f32 %v948, %v1141
    %v1186 = vadd.f32 %v951, %v1144
    %v1187 = vadd.f32 %v956, %v1149
    %v1188 = vadd.f32 %v959, %v1152
    %v1189 = vadd.f32 %v964, %v1157
    %v1190 = vadd.f32 %v967, %v1160
    %v1191 = vadd.f32 %v972, %v1165
    %v1192 = vadd.f32 %v975, %v1168
    %v1193 = vadd.f32 %v980, %v1173
    %v1194 = vadd.f32 %v983, %v1176
    %v1195 = vld [vmem:[#allocation2] sm:$0xf]
    %v1196 = vld [vmem:[#allocation2 + $0x4] sm:$0x1]
    %v1197 = vld [vmem:[#allocation2 + $0x8] sm:$0xf]
    %v1198 = vld [vmem:[#allocation2 + $0xc] sm:$0x1]
    %v1199 = vld [vmem:[#allocation2 + $0x10] sm:$0xf]
    %v1200 = vld [vmem:[#allocation2 + $0x14] sm:$0x1]
    %v1201 = vld [vmem:[#allocation2 + $0x18] sm:$0xf]
    %v1202 = vld [vmem:[#allocation2 + $0x1c] sm:$0x1]
    %v1203 = vld [vmem:[#allocation2 + $0x20] sm:$0xf]
    %v1204 = vld [vmem:[#allocation2 + $0x24] sm:$0x1]
    %v1205 = vld [vmem:[#allocation2 + $0x28] sm:$0xf]
    %v1206 = vld [vmem:[#allocation2 + $0x2c] sm:$0x1]
    %v1207 = vld [vmem:[#allocation2 + $0x30] sm:$0xf]
    %v1208 = vld [vmem:[#allocation2 + $0x34] sm:$0x1]
    %v1209 = vld [vmem:[#allocation2 + $0x38] sm:$0xf]
    %v1210 = vld [vmem:[#allocation2 + $0x3c] sm:$0x1]
    %v1211 = vld [vmem:[#allocation2 + $0x50] sm:$0xf]
    %v1212 = vld [vmem:[#allocation2 + $0x54] sm:$0x1]
    %v1213 = vld [vmem:[#allocation2 + $0x58] sm:$0xf]
    %v1214 = vld [vmem:[#allocation2 + $0x5c] sm:$0x1]
    %v1215 = vld [vmem:[#allocation2 + $0x60] sm:$0xf]
    %v1216 = vld [vmem:[#allocation2 + $0x64] sm:$0x1]
    %v1217 = vld [vmem:[#allocation2 + $0x68] sm:$0xf]
    %v1218 = vld [vmem:[#allocation2 + $0x6c] sm:$0x1]
    %v1219 = vld [vmem:[#allocation2 + $0x70] sm:$0xf]
    %v1220 = vld [vmem:[#allocation2 + $0x74] sm:$0x1]
    %v1221 = vld [vmem:[#allocation2 + $0x78] sm:$0xf]
    %v1222 = vld [vmem:[#allocation2 + $0x7c] sm:$0x1]
    %v1223 = vld [vmem:[#allocation2 + $0x80] sm:$0xf]
    %v1224 = vld [vmem:[#allocation2 + $0x84] sm:$0x1]
    %v1225 = vld [vmem:[#allocation2 + $0x88] sm:$0xf]
    %v1226 = vld [vmem:[#allocation2 + $0x8c] sm:$0x1]
    %vm1227 = vsmask.f32 3328
    %vm1228 = vsmask.f32 7440
    %vm1229 = vmor %vm1227, %vm1228
    %v1231 = vshrl.u32 %v1195, 16
    %v1233 = vrot.slane %v1231, 4
    %v1234 = vshll.u32 %v1195, 16
    %v1236 = vrot.slane %v1234, 5
    %v1237 = vor.u32 %v1233, %v1236
    %v1238 = vrot.slane %v1237, 4
    %v1240 = vshll.u32 %v1196, 16
    %v1242 = vrot.slane %v1240, 5
    %v1243 = vsel %vm1229, %v1238, %v1242
    %v1245 = vshrl.u32 %v1197, 16
    %v1247 = vrot.slane %v1245, 4
    %v1248 = vshll.u32 %v1197, 16
    %v1250 = vrot.slane %v1248, 5
    %v1251 = vor.u32 %v1247, %v1250
    %v1252 = vrot.slane %v1251, 4
    %v1254 = vshll.u32 %v1198, 16
    %v1256 = vrot.slane %v1254, 5
    %v1257 = vsel %vm1229, %v1252, %v1256
    %v1259 = vshrl.u32 %v1199, 16
    %v1261 = vrot.slane %v1259, 4
    %v1262 = vshll.u32 %v1199, 16
    %v1264 = vrot.slane %v1262, 5
    %v1265 = vor.u32 %v1261, %v1264
    %v1266 = vrot.slane %v1265, 4
    %v1268 = vshll.u32 %v1200, 16
    %v1270 = vrot.slane %v1268, 5
    %v1271 = vsel %vm1229, %v1266, %v1270
    %v1273 = vshrl.u32 %v1201, 16
    %v1275 = vrot.slane %v1273, 4
    %v1276 = vshll.u32 %v1201, 16
    %v1278 = vrot.slane %v1276, 5
    %v1279 = vor.u32 %v1275, %v1278
    %v1280 = vrot.slane %v1279, 4
    %v1282 = vshll.u32 %v1202, 16
    %v1284 = vrot.slane %v1282, 5
    %v1285 = vsel %vm1229, %v1280, %v1284
    %v1287 = vshrl.u32 %v1203, 16
    %v1289 = vrot.slane %v1287, 4
    %v1290 = vshll.u32 %v1203, 16
    %v1292 = vrot.slane %v1290, 5
    %v1293 = vor.u32 %v1289, %v1292
    %v1294 = vrot.slane %v1293, 4
    %v1296 = vshll.u32 %v1204, 16
    %v1298 = vrot.slane %v1296, 5
    %v1299 = vsel %vm1229, %v1294, %v1298
    %v1301 = vshrl.u32 %v1205, 16
    %v1303 = vrot.slane %v1301, 4
    %v1304 = vshll.u32 %v1205, 16
    %v1306 = vrot.slane %v1304, 5
    %v1307 = vor.u32 %v1303, %v1306
    %v1308 = vrot.slane %v1307, 4
    %v1310 = vshll.u32 %v1206, 16
    %v1312 = vrot.slane %v1310, 5
    %v1313 = vsel %vm1229, %v1308, %v1312
    %v1315 = vshrl.u32 %v1207, 16
    %v1317 = vrot.slane %v1315, 4
    %v1318 = vshll.u32 %v1207, 16
    %v1320 = vrot.slane %v1318, 5
    %v1321 = vor.u32 %v1317, %v1320
    %v1322 = vrot.slane %v1321, 4
    %v1324 = vshll.u32 %v1208, 16
    %v1326 = vrot.slane %v1324, 5
    %v1327 = vsel %vm1229, %v1322, %v1326
    %v1329 = vshrl.u32 %v1209, 16
    %v1331 = vrot.slane %v1329, 4
    %v1332 = vshll.u32 %v1209, 16
    %v1334 = vrot.slane %v1332, 5
    %v1335 = vor.u32 %v1331, %v1334
    %v1336 = vrot.slane %v1335, 4
    %v1338 = vshll.u32 %v1210, 16
    %v1340 = vrot.slane %v1338, 5
    %v1341 = vsel %vm1229, %v1336, %v1340
    %v1343 = vshrl.u32 %v1211, 16
    %v1345 = vrot.slane %v1343, 4
    %v1346 = vshll.u32 %v1211, 16
    %v1348 = vrot.slane %v1346, 5
    %v1349 = vor.u32 %v1345, %v1348
    %v1350 = vrot.slane %v1349, 4
    %v1352 = vshll.u32 %v1212, 16
    %v1354 = vrot.slane %v1352, 5
    %v1355 = vsel %vm1229, %v1350, %v1354
    %v1357 = vshrl.u32 %v1213, 16
    %v1359 = vrot.slane %v1357, 4
    %v1360 = vshll.u32 %v1213, 16
    %v1362 = vrot.slane %v1360, 5
    %v1363 = vor.u32 %v1359, %v1362
    %v1364 = vrot.slane %v1363, 4
    %v1366 = vshll.u32 %v1214, 16
    %v1368 = vrot.slane %v1366, 5
    %v1369 = vsel %vm1229, %v1364, %v1368
    %v1371 = vshrl.u32 %v1215, 16
    %v1373 = vrot.slane %v1371, 4
    %v1374 = vshll.u32 %v1215, 16
    %v1376 = vrot.slane %v1374, 5
    %v1377 = vor.u32 %v1373, %v1376
    %v1378 = vrot.slane %v1377, 4
    %v1380 = vshll.u32 %v1216, 16
    %v1382 = vrot.slane %v1380, 5
    %v1383 = vsel %vm1229, %v1378, %v1382
    %v1385 = vshrl.u32 %v1217, 16
    %v1387 = vrot.slane %v1385, 4
    %v1388 = vshll.u32 %v1217, 16
    %v1390 = vrot.slane %v1388, 5
    %v1391 = vor.u32 %v1387, %v1390
    %v1392 = vrot.slane %v1391, 4
    %v1394 = vshll.u32 %v1218, 16
    %v1396 = vrot.slane %v1394, 5
    %v1397 = vsel %vm1229, %v1392, %v1396
    %v1399 = vshrl.u32 %v1219, 16
    %v1401 = vrot.slane %v1399, 4
    %v1402 = vshll.u32 %v1219, 16
    %v1404 = vrot.slane %v1402, 5
    %v1405 = vor.u32 %v1401, %v1404
    %v1406 = vrot.slane %v1405, 4
    %v1408 = vshll.u32 %v1220, 16
    %v1410 = vrot.slane %v1408, 5
    %v1411 = vsel %vm1229, %v1406, %v1410
    %v1413 = vshrl.u32 %v1221, 16
    %v1415 = vrot.slane %v1413, 4
    %v1416 = vshll.u32 %v1221, 16
    %v1418 = vrot.slane %v1416, 5
    %v1419 = vor.u32 %v1415, %v1418
    %v1420 = vrot.slane %v1419, 4
    %v1422 = vshll.u32 %v1222, 16
    %v1424 = vrot.slane %v1422, 5
    %v1425 = vsel %vm1229, %v1420, %v1424
    %v1427 = vshrl.u32 %v1223, 16
    %v1429 = vrot.slane %v1427, 4
    %v1430 = vshll.u32 %v1223, 16
    %v1432 = vrot.slane %v1430, 5
    %v1433 = vor.u32 %v1429, %v1432
    %v1434 = vrot.slane %v1433, 4
    %v1436 = vshll.u32 %v1224, 16
    %v1438 = vrot.slane %v1436, 5
    %v1439 = vsel %vm1229, %v1434, %v1438
    %v1441 = vshrl.u32 %v1225, 16
    %v1443 = vrot.slane %v1441, 4
    %v1444 = vshll.u32 %v1225, 16
    %v1446 = vrot.slane %v1444, 5
    %v1447 = vor.u32 %v1443, %v1446
    %v1448 = vrot.slane %v1447, 4
    %v1450 = vshll.u32 %v1226, 16
    %v1452 = vrot.slane %v1450, 5
    %v1453 = vsel %vm1229, %v1448, %v1452
    %s1454 = scalar_lea.vmem %s4, 16
    %v1455 = vld [vmem:[%s1454] sm:$0xf]
    %v1456 = vld [vmem:[%s1454 + $0x4] sm:$0xf]
    %v1457 = vld [vmem:[%s1454 + $0x8] sm:$0xf]
    %v1458 = vld [vmem:[%s1454 + $0xc] sm:$0xf]
    %v1459 = vunpack.c.l.b16 %v1243
    %v1460 = vunpack.c.l.b16 %v1257
    %v1461 = vunpack.c.l.b16 %v1271
    %v1462 = vunpack.c.l.b16 %v1285
    %v1463 = vunpack.c.l.b16 %v1299
    %v1464 = vunpack.c.l.b16 %v1313
    %v1465 = vunpack.c.l.b16 %v1327
    %v1466 = vunpack.c.l.b16 %v1341
    %v1467 = vunpack.c.l.b16 %v1355
    %v1468 = vunpack.c.l.b16 %v1369
    %v1469 = vunpack.c.l.b16 %v1383
    %v1470 = vunpack.c.l.b16 %v1397
    %v1471 = vunpack.c.l.b16 %v1411
    %v1472 = vunpack.c.l.b16 %v1425
    %v1473 = vunpack.c.l.b16 %v1439
    %v1474 = vunpack.c.l.b16 %v1453
    %v1475 = vpack.c.b16 %v1460, %v1459
    %v1476 = vpack.c.b16 %v1462, %v1461
    %v1477 = vpack.c.b16 %v1464, %v1463
    %v1478 = vpack.c.b16 %v1466, %v1465
    %v1479 = vpack.c.b16 %v1468, %v1467
    %v1480 = vpack.c.b16 %v1470, %v1469
    %v1481 = vpack.c.b16 %v1472, %v1471
    %v1482 = vpack.c.b16 %v1474, %v1473
    %v1487 = vunpack.c.l.b16 %v1455
    %v1488 = vunpack.c.l.b16 %v1456
    %v1489 = vunpack.c.l.b16 %v1457
    %v1490 = vunpack.c.l.b16 %v1458
    %v1491 = vpack.c.b16 %v1488, %v1487
    %v1492 = vpack.c.b16 %v1490, %v1489
    %v1496 = vsel %vm58, %v1475, 0
    %v1499 = vsel %vm58, %v1476, 0
    %v1502 = vsel %vm58, %v1477, 0
    %v1505 = vsel %vm58, %v1478, 0
    %v1508 = vsel %vm58, %v1479, 0
    %v1511 = vsel %vm58, %v1480, 0
    %v1514 = vsel %vm58, %v1481, 0
    %v1517 = vsel %vm58, %v1482, 0
    %1519 = vmatprep.subr.bf16.mxu0 0
    %1520 = vmatpush1.bf16.msra.mxu0 %v1491
    %1521 = vmatprep.subr.bf16.mxu0 0
    %1522 = vmatpush1.bf16.msra.mxu0 %v1492
    %1523 = vmatprep.subr.bf16.mxu0 0
    %1524 = vmatpush1.bf16.msra.mxu0 0
    %1525 = vmatprep.subr.bf16.mxu0 0
    %1526 = vmatpush1.bf16.msra.mxu0 0
    %1527 = vmatprep.subr.bf16.mxu0 0
    %1528 = vmatpush1.bf16.msra.mxu0 0
    %1529 = vmatprep.subr.bf16.mxu0 0
    %1530 = vmatpush1.bf16.msra.mxu0 0
    %1531 = vmatprep.subr.bf16.mxu0 0
    %1532 = vmatpush1.bf16.msra.mxu0 0
    %1533 = vmatprep.subr.bf16.mxu0 0
    %1534 = vmatpush1.bf16.msra.mxu0 0
    %1535 = vmatprep.subr.bf16.mxu0 0
    %1536 = vmatpush1.bf16.msra.mxu0 0
    %1537 = vmatprep.subr.bf16.mxu0 0
    %1538 = vmatpush1.bf16.msra.mxu0 0
    %1539 = vmatprep.subr.bf16.mxu0 0
    %1540 = vmatpush1.bf16.msra.mxu0 0
    %1541 = vmatprep.subr.bf16.mxu0 0
    %1542 = vmatpush1.bf16.msra.mxu0 0
    %1543 = vmatprep.subr.bf16.mxu0 0
    %1544 = vmatpush1.bf16.msra.mxu0 0
    %1545 = vmatprep.subr.bf16.mxu0 0
    %1546 = vmatpush1.bf16.msra.mxu0 0
    %1547 = vmatprep.subr.bf16.mxu0 0
    %1548 = vmatpush1.bf16.msra.mxu0 0
    %1549 = vmatprep.subr.bf16.mxu0 0
    %1550 = vmatpush1.bf16.msra.mxu0 0
    %1551 = vmatprep.mubr.bf16.mxu0 0
    %1552 = vmatmul.mubr.bf16.gmra.mrb[0].mxu0 %v1496
    %v1553 = vpop.f32.mrb[0].mxu0
    %v1554 = vadd.f32 0.0, %v1553
    %v1555 = vpop.f32.mrb[0].mxu0
    %v1556 = vpop.f32.mrb[0].mxu0
    %v1557 = vadd.f32 0.0, %v1556
    %v1558 = vpop.f32.mrb[0].mxu0
    %1559 = vmatprep.mubr.bf16.mxu0 0
    %1560 = vmatmul.mubr.bf16.gmra.mrb[0].mxu0 %v1499
    %v1561 = vpop.f32.mrb[0].mxu0
    %v1562 = vadd.f32 0.0, %v1561
    %v1563 = vpop.f32.mrb[0].mxu0
    %v1564 = vpop.f32.mrb[0].mxu0
    %v1565 = vadd.f32 0.0, %v1564
    %v1566 = vpop.f32.mrb[0].mxu0
    %1567 = vmatprep.mubr.bf16.mxu0 0
    %1568 = vmatmul.mubr.bf16.gmra.mrb[0].mxu0 %v1502
    %v1569 = vpop.f32.mrb[0].mxu0
    %v1570 = vadd.f32 0.0, %v1569
    %v1571 = vpop.f32.mrb[0].mxu0
    %v1572 = vpop.f32.mrb[0].mxu0
    %v1573 = vadd.f32 0.0, %v1572
    %v1574 = vpop.f32.mrb[0].mxu0
    %1575 = vmatprep.mubr.bf16.mxu0 0
    %1576 = vmatmul.mubr.bf16.gmra.mrb[0].mxu0 %v1505
    %v1577 = vpop.f32.mrb[0].mxu0
    %v1578 = vadd.f32 0.0, %v1577
    %v1579 = vpop.f32.mrb[0].mxu0
    %v1580 = vpop.f32.mrb[0].mxu0
    %v1581 = vadd.f32 0.0, %v1580
    %v1582 = vpop.f32.mrb[0].mxu0
    %1583 = vmatprep.mubr.bf16.mxu0 0
    %1584 = vmatmul.mubr.bf16.gmra.mrb[0].mxu0 %v1508
    %v1585 = vpop.f32.mrb[0].mxu0
    %v1586 = vadd.f32 0.0, %v1585
    %v1587 = vpop.f32.mrb[0].mxu0
    %v1588 = vpop.f32.mrb[0].mxu0
    %v1589 = vadd.f32 0.0, %v1588
    %v1590 = vpop.f32.mrb[0].mxu0
    %1591 = vmatprep.mubr.bf16.mxu0 0
    %1592 = vmatmul.mubr.bf16.gmra.mrb[0].mxu0 %v1511
    %v1593 = vpop.f32.mrb[0].mxu0
    %v1594 = vadd.f32 0.0, %v1593
    %v1595 = vpop.f32.mrb[0].mxu0
    %v1596 = vpop.f32.mrb[0].mxu0
    %v1597 = vadd.f32 0.0, %v1596
    %v1598 = vpop.f32.mrb[0].mxu0
    %1599 = vmatprep.mubr.bf16.mxu0 0
    %1600 = vmatmul.mubr.bf16.gmra.mrb[0].mxu0 %v1514
    %v1601 = vpop.f32.mrb[0].mxu0
    %v1602 = vadd.f32 0.0, %v1601
    %v1603 = vpop.f32.mrb[0].mxu0
    %v1604 = vpop.f32.mrb[0].mxu0
    %v1605 = vadd.f32 0.0, %v1604
    %v1606 = vpop.f32.mrb[0].mxu0
    %1607 = vmatprep.mubr.bf16.mxu0 0
    %1608 = vmatmul.mubr.bf16.gmra.mrb[0].mxu0 %v1517
    %v1609 = vpop.f32.mrb[0].mxu0
    %v1610 = vadd.f32 0.0, %v1609
    %v1611 = vpop.f32.mrb[0].mxu0
    %v1612 = vpop.f32.mrb[0].mxu0
    %v1613 = vadd.f32 0.0, %v1612
    %v1614 = vpop.f32.mrb[0].mxu0
    %1615 = vdwg.mxu0
    %v1616 = vadd.f32 %v1179, %v1554
    %v1617 = vadd.f32 %v1180, %v1557
    %v1618 = vadd.f32 %v1181, %v1562
    %v1619 = vadd.f32 %v1182, %v1565
    %v1620 = vadd.f32 %v1183, %v1570
    %v1621 = vadd.f32 %v1184, %v1573
    %v1622 = vadd.f32 %v1185, %v1578
    %v1623 = vadd.f32 %v1186, %v1581
    %v1624 = vadd.f32 %v1187, %v1586
    %v1625 = vadd.f32 %v1188, %v1589
    %v1626 = vadd.f32 %v1189, %v1594
    %v1627 = vadd.f32 %v1190, %v1597
    %v1628 = vadd.f32 %v1191, %v1602
    %v1629 = vadd.f32 %v1192, %v1605
    %v1630 = vadd.f32 %v1193, %v1610
    %v1631 = vadd.f32 %v1194, %v1613
    %v1632 = vld [vmem:[#allocation2] sm:$0xe]
    %v1633 = vld [vmem:[#allocation2 + $0x8] sm:$0xe]
    %v1634 = vld [vmem:[#allocation2 + $0x10] sm:$0xe]
    %v1635 = vld [vmem:[#allocation2 + $0x18] sm:$0xe]
    %v1636 = vld [vmem:[#allocation2 + $0x20] sm:$0xe]
    %v1637 = vld [vmem:[#allocation2 + $0x28] sm:$0xe]
    %v1638 = vld [vmem:[#allocation2 + $0x30] sm:$0xe]
    %v1639 = vld [vmem:[#allocation2 + $0x38] sm:$0xe]
    %v1640 = vld [vmem:[#allocation2 + $0x50] sm:$0xe]
    %v1641 = vld [vmem:[#allocation2 + $0x58] sm:$0xe]
    %v1642 = vld [vmem:[#allocation2 + $0x60] sm:$0xe]
    %v1643 = vld [vmem:[#allocation2 + $0x68] sm:$0xe]
    %v1644 = vld [vmem:[#allocation2 + $0x70] sm:$0xe]
    %v1645 = vld [vmem:[#allocation2 + $0x78] sm:$0xe]
    %v1646 = vld [vmem:[#allocation2 + $0x80] sm:$0xe]
    %v1647 = vld [vmem:[#allocation2 + $0x88] sm:$0xe]
    %vm1680 = vcmask 1042432
    %vm1681 = vcmask 1046532
    %vm1682 = vmor %vm1680, %vm1681
    %v1683 = vrot.slane %v1632, 5
    %v1684 = vrot.slane %v1683, 4
    %v1685 = vrot.slane %v1196, 5
    %v1686 = vsel %vm1682, %v1684, %v1685
    %v1687 = vrot.slane %v1633, 5
    %v1688 = vrot.slane %v1687, 4
    %v1689 = vrot.slane %v1198, 5
    %v1690 = vsel %vm1682, %v1688, %v1689
    %v1691 = vrot.slane %v1634, 5
    %v1692 = vrot.slane %v1691, 4
    %v1693 = vrot.slane %v1200, 5
    %v1694 = vsel %vm1682, %v1692, %v1693
    %v1695 = vrot.slane %v1635, 5
    %v1696 = vrot.slane %v1695, 4
    %v1697 = vrot.slane %v1202, 5
    %v1698 = vsel %vm1682, %v1696, %v1697
    %v1699 = vrot.slane %v1636, 5
    %v1700 = vrot.slane %v1699, 4
    %v1701 = vrot.slane %v1204, 5
    %v1702 = vsel %vm1682, %v1700, %v1701
    %v1703 = vrot.slane %v1637, 5
    %v1704 = vrot.slane %v1703, 4
    %v1705 = vrot.slane %v1206, 5
    %v1706 = vsel %vm1682, %v1704, %v1705
    %v1707 = vrot.slane %v1638, 5
    %v1708 = vrot.slane %v1707, 4
    %v1709 = vrot.slane %v1208, 5
    %v1710 = vsel %vm1682, %v1708, %v1709
    %v1711 = vrot.slane %v1639, 5
    %v1712 = vrot.slane %v1711, 4
    %v1713 = vrot.slane %v1210, 5
    %v1714 = vsel %vm1682, %v1712, %v1713
    %v1715 = vrot.slane %v1640, 5
    %v1716 = vrot.slane %v1715, 4
    %v1717 = vrot.slane %v1212, 5
    %v1718 = vsel %vm1682, %v1716, %v1717
    %v1719 = vrot.slane %v1641, 5
    %v1720 = vrot.slane %v1719, 4
    %v1721 = vrot.slane %v1214, 5
    %v1722 = vsel %vm1682, %v1720, %v1721
    %v1723 = vrot.slane %v1642, 5
    %v1724 = vrot.slane %v1723, 4
    %v1725 = vrot.slane %v1216, 5
    %v1726 = vsel %vm1682, %v1724, %v1725
    %v1727 = vrot.slane %v1643, 5
    %v1728 = vrot.slane %v1727, 4
    %v1729 = vrot.slane %v1218, 5
    %v1730 = vsel %vm1682, %v1728, %v1729
    %v1731 = vrot.slane %v1644, 5
    %v1732 = vrot.slane %v1731, 4
    %v1733 = vrot.slane %v1220, 5
    %v1734 = vsel %vm1682, %v1732, %v1733
    %v1735 = vrot.slane %v1645, 5
    %v1736 = vrot.slane %v1735, 4
    %v1737 = vrot.slane %v1222, 5
    %v1738 = vsel %vm1682, %v1736, %v1737
    %v1739 = vrot.slane %v1646, 5
    %v1740 = vrot.slane %v1739, 4
    %v1741 = vrot.slane %v1224, 5
    %v1742 = vsel %vm1682, %v1740, %v1741
    %v1743 = vrot.slane %v1647, 5
    %v1744 = vrot.slane %v1743, 4
    %v1745 = vrot.slane %v1226, 5
    %v1746 = vsel %vm1682, %v1744, %v1745
    %s1747 = scalar_lea.vmem %s4, 32
    %v1748 = vld [vmem:[%s1747] sm:$0xf]
    %v1749 = vld [vmem:[%s1747 + $0x4] sm:$0xf]
    %v1750 = vld [vmem:[%s1747 + $0x8] sm:$0xf]
    %v1751 = vld [vmem:[%s1747 + $0xc] sm:$0xf]
    %v1752 = vunpack.c.l.b16 %v1686
    %v1753 = vunpack.c.l.b16 %v1690
    %v1754 = vunpack.c.l.b16 %v1694
    %v1755 = vunpack.c.l.b16 %v1698
    %v1756 = vunpack.c.l.b16 %v1702
    %v1757 = vunpack.c.l.b16 %v1706
    %v1758 = vunpack.c.l.b16 %v1710
    %v1759 = vunpack.c.l.b16 %v1714
    %v1760 = vunpack.c.l.b16 %v1718
    %v1761 = vunpack.c.l.b16 %v1722
    %v1762 = vunpack.c.l.b16 %v1726
    %v1763 = vunpack.c.l.b16 %v1730
    %v1764 = vunpack.c.l.b16 %v1734
    %v1765 = vunpack.c.l.b16 %v1738
    %v1766 = vunpack.c.l.b16 %v1742
    %v1767 = vunpack.c.l.b16 %v1746
    %v1768 = vpack.c.b16 %v1753, %v1752
    %v1769 = vpack.c.b16 %v1755, %v1754
    %v1770 = vpack.c.b16 %v1757, %v1756
    %v1771 = vpack.c.b16 %v1759, %v1758
    %v1772 = vpack.c.b16 %v1761, %v1760
    %v1773 = vpack.c.b16 %v1763, %v1762
    %v1774 = vpack.c.b16 %v1765, %v1764
    %v1775 = vpack.c.b16 %v1767, %v1766
    %v1780 = vunpack.c.l.b16 %v1748
    %v1781 = vunpack.c.l.b16 %v1749
    %v1782 = vunpack.c.l.b16 %v1750
    %v1783 = vunpack.c.l.b16 %v1751
    %v1784 = vpack.c.b16 %v1781, %v1780
    %v1785 = vpack.c.b16 %v1783, %v1782
    %v1789 = vsel %vm58, %v1768, 0
    %v1792 = vsel %vm58, %v1769, 0
    %v1795 = vsel %vm58, %v1770, 0
    %v1798 = vsel %vm58, %v1771, 0
    %v1801 = vsel %vm58, %v1772, 0
    %v1804 = vsel %vm58, %v1773, 0
    %v1807 = vsel %vm58, %v1774, 0
    %v1810 = vsel %vm58, %v1775, 0
    %1812 = vmatprep.subr.bf16.mxu0 0
    %1813 = vmatpush1.bf16.msra.mxu0 %v1784
    %1814 = vmatprep.subr.bf16.mxu0 0
    %1815 = vmatpush1.bf16.msra.mxu0 %v1785
    %1816 = vmatprep.subr.bf16.mxu0 0
    %1817 = vmatpush1.bf16.msra.mxu0 0
    %1818 = vmatprep.subr.bf16.mxu0 0
    %1819 = vmatpush1.bf16.msra.mxu0 0
    %1820 = vmatprep.subr.bf16.mxu0 0
    %1821 = vmatpush1.bf16.msra.mxu0 0
    %1822 = vmatprep.subr.bf16.mxu0 0
    %1823 = vmatpush1.bf16.msra.mxu0 0
    %1824 = vmatprep.subr.bf16.mxu0 0
    %1825 = vmatpush1.bf16.msra.mxu0 0
    %1826 = vmatprep.subr.bf16.mxu0 0
    %1827 = vmatpush1.bf16.msra.mxu0 0
    %1828 = vmatprep.subr.bf16.mxu0 0
    %1829 = vmatpush1.bf16.msra.mxu0 0
    %1830 = vmatprep.subr.bf16.mxu0 0
    %1831 = vmatpush1.bf16.msra.mxu0 0
    %1832 = vmatprep.subr.bf16.mxu0 0
    %1833 = vmatpush1.bf16.msra.mxu0 0
    %1834 = vmatprep.subr.bf16.mxu0 0
    %1835 = vmatpush1.bf16.msra.mxu0 0
    %1836 = vmatprep.subr.bf16.mxu0 0
    %1837 = vmatpush1.bf16.msra.mxu0 0
    %1838 = vmatprep.subr.bf16.mxu0 0
    %1839 = vmatpush1.bf16.msra.mxu0 0
    %1840 = vmatprep.subr.bf16.mxu0 0
    %1841 = vmatpush1.bf16.msra.mxu0 0
    %1842 = vmatprep.subr.bf16.mxu0 0
    %1843 = vmatpush1.bf16.msra.mxu0 0
    %1844 = vmatprep.mubr.bf16.mxu0 0
    %1845 = vmatmul.mubr.bf16.gmra.mrb[0].mxu0 %v1789
    %v1846 = vpop.f32.mrb[0].mxu0
    %v1847 = vadd.f32 0.0, %v1846
    %v1848 = vpop.f32.mrb[0].mxu0
    %v1849 = vpop.f32.mrb[0].mxu0
    %v1850 = vadd.f32 0.0, %v1849
    %v1851 = vpop.f32.mrb[0].mxu0
    %1852 = vmatprep.mubr.bf16.mxu0 0
    %1853 = vmatmul.mubr.bf16.gmra.mrb[0].mxu0 %v1792
    %v1854 = vpop.f32.mrb[0].mxu0
    %v1855 = vadd.f32 0.0, %v1854
    %v1856 = vpop.f32.mrb[0].mxu0
    %v1857 = vpop.f32.mrb[0].mxu0
    %v1858 = vadd.f32 0.0, %v1857
    %v1859 = vpop.f32.mrb[0].mxu0
    %1860 = vmatprep.mubr.bf16.mxu0 0
    %1861 = vmatmul.mubr.bf16.gmra.mrb[0].mxu0 %v1795
    %v1862 = vpop.f32.mrb[0].mxu0
    %v1863 = vadd.f32 0.0, %v1862
    %v1864 = vpop.f32.mrb[0].mxu0
    %v1865 = vpop.f32.mrb[0].mxu0
    %v1866 = vadd.f32 0.0, %v1865
    %v1867 = vpop.f32.mrb[0].mxu0
    %1868 = vmatprep.mubr.bf16.mxu0 0
    %1869 = vmatmul.mubr.bf16.gmra.mrb[0].mxu0 %v1798
    %v1870 = vpop.f32.mrb[0].mxu0
    %v1871 = vadd.f32 0.0, %v1870
    %v1872 = vpop.f32.mrb[0].mxu0
    %v1873 = vpop.f32.mrb[0].mxu0
    %v1874 = vadd.f32 0.0, %v1873
    %v1875 = vpop.f32.mrb[0].mxu0
    %1876 = vmatprep.mubr.bf16.mxu0 0
    %1877 = vmatmul.mubr.bf16.gmra.mrb[0].mxu0 %v1801
    %v1878 = vpop.f32.mrb[0].mxu0
    %v1879 = vadd.f32 0.0, %v1878
    %v1880 = vpop.f32.mrb[0].mxu0
    %v1881 = vpop.f32.mrb[0].mxu0
    %v1882 = vadd.f32 0.0, %v1881
    %v1883 = vpop.f32.mrb[0].mxu0
    %1884 = vmatprep.mubr.bf16.mxu0 0
    %1885 = vmatmul.mubr.bf16.gmra.mrb[0].mxu0 %v1804
    %v1886 = vpop.f32.mrb[0].mxu0
    %v1887 = vadd.f32 0.0, %v1886
    %v1888 = vpop.f32.mrb[0].mxu0
    %v1889 = vpop.f32.mrb[0].mxu0
    %v1890 = vadd.f32 0.0, %v1889
    %v1891 = vpop.f32.mrb[0].mxu0
    %1892 = vmatprep.mubr.bf16.mxu0 0
    %1893 = vmatmul.mubr.bf16.gmra.mrb[0].mxu0 %v1807
    %v1894 = vpop.f32.mrb[0].mxu0
    %v1895 = vadd.f32 0.0, %v1894
    %v1896 = vpop.f32.mrb[0].mxu0
    %v1897 = vpop.f32.mrb[0].mxu0
    %v1898 = vadd.f32 0.0, %v1897
    %v1899 = vpop.f32.mrb[0].mxu0
    %1900 = vmatprep.mubr.bf16.mxu0 0
    %1901 = vmatmul.mubr.bf16.gmra.mrb[0].mxu0 %v1810
    %v1902 = vpop.f32.mrb[0].mxu0
    %v1903 = vadd.f32 0.0, %v1902
    %v1904 = vpop.f32.mrb[0].mxu0
    %v1905 = vpop.f32.mrb[0].mxu0
    %v1906 = vadd.f32 0.0, %v1905
    %v1907 = vpop.f32.mrb[0].mxu0
    %1908 = vdwg.mxu0
    %v1909 = vadd.f32 %v1616, %v1847
    %v1910 = vadd.f32 %v1617, %v1850
    %v1911 = vadd.f32 %v1618, %v1855
    %v1912 = vadd.f32 %v1619, %v1858
    %v1913 = vadd.f32 %v1620, %v1863
    %v1914 = vadd.f32 %v1621, %v1866
    %v1915 = vadd.f32 %v1622, %v1871
    %v1916 = vadd.f32 %v1623, %v1874
    %v1917 = vadd.f32 %v1624, %v1879
    %v1918 = vadd.f32 %v1625, %v1882
    %v1919 = vadd.f32 %v1626, %v1887
    %v1920 = vadd.f32 %v1627, %v1890
    %v1921 = vadd.f32 %v1628, %v1895
    %v1922 = vadd.f32 %v1629, %v1898
    %v1923 = vadd.f32 %v1630, %v1903
    %v1924 = vadd.f32 %v1631, %v1906
    %v1925 = vld [vmem:[%s725] sm:$0xf]
    %v1926 = vld [vmem:[%s725 + $0x8] sm:$0xf]
    %v1927 = vld [vmem:[%s725 + $0x10] sm:$0xf]
    %v1928 = vld [vmem:[%s725 + $0x18] sm:$0xf]
    %v1929 = vld [vmem:[%s725 + $0x20] sm:$0xf]
    %v1930 = vld [vmem:[%s725 + $0x28] sm:$0xf]
    %v1931 = vld [vmem:[%s725 + $0x30] sm:$0xf]
    %v1932 = vld [vmem:[%s725 + $0x38] sm:$0xf]
    %v1933 = vld [vmem:[%s725 + $0x50] sm:$0xf]
    %v1934 = vld [vmem:[%s725 + $0x58] sm:$0xf]
    %v1935 = vld [vmem:[%s725 + $0x60] sm:$0xf]
    %v1936 = vld [vmem:[%s725 + $0x68] sm:$0xf]
    %v1937 = vld [vmem:[%s725 + $0x70] sm:$0xf]
    %v1938 = vld [vmem:[%s725 + $0x78] sm:$0xf]
    %v1939 = vld [vmem:[%s725 + $0x80] sm:$0xf]
    %v1940 = vld [vmem:[%s725 + $0x88] sm:$0xf]
    %s1941 = scalar_lea.vmem %s4, 48
    %v1942 = vld [vmem:[%s1941] sm:$0xf]
    %v1943 = vld [vmem:[%s1941 + $0x4] sm:$0xf]
    %v1944 = vld [vmem:[%s1941 + $0x8] sm:$0xf]
    %v1945 = vld [vmem:[%s1941 + $0xc] sm:$0xf]
    %v1962 = vunpack.c.l.b16 %v1925
    %v1963 = vunpack.c.l.b16 %v1926
    %v1964 = vunpack.c.l.b16 %v1927
    %v1965 = vunpack.c.l.b16 %v1928
    %v1966 = vunpack.c.l.b16 %v1929
    %v1967 = vunpack.c.l.b16 %v1930
    %v1968 = vunpack.c.l.b16 %v1931
    %v1969 = vunpack.c.l.b16 %v1932
    %v1970 = vunpack.c.l.b16 %v1933
    %v1971 = vunpack.c.l.b16 %v1934
    %v1972 = vunpack.c.l.b16 %v1935
    %v1973 = vunpack.c.l.b16 %v1936
    %v1974 = vunpack.c.l.b16 %v1937
    %v1975 = vunpack.c.l.b16 %v1938
    %v1976 = vunpack.c.l.b16 %v1939
    %v1977 = vunpack.c.l.b16 %v1940
    %v1978 = vpack.c.b16 %v1963, %v1962
    %v1979 = vpack.c.b16 %v1965, %v1964
    %v1980 = vpack.c.b16 %v1967, %v1966
    %v1981 = vpack.c.b16 %v1969, %v1968
    %v1982 = vpack.c.b16 %v1971, %v1970
    %v1983 = vpack.c.b16 %v1973, %v1972
    %v1984 = vpack.c.b16 %v1975, %v1974
    %v1985 = vpack.c.b16 %v1977, %v1976
    %v1990 = vunpack.c.l.b16 %v1942
    %v1991 = vunpack.c.l.b16 %v1943
    %v1992 = vunpack.c.l.b16 %v1944
    %v1993 = vunpack.c.l.b16 %v1945
    %v1994 = vpack.c.b16 %v1991, %v1990
    %v1995 = vpack.c.b16 %v1993, %v1992
    %v1999 = vsel %vm58, %v1978, 0
    %v2002 = vsel %vm58, %v1979, 0
    %v2005 = vsel %vm58, %v1980, 0
    %v2008 = vsel %vm58, %v1981, 0
    %v2011 = vsel %vm58, %v1982, 0
    %v2014 = vsel %vm58, %v1983, 0
    %v2017 = vsel %vm58, %v1984, 0
    %v2020 = vsel %vm58, %v1985, 0
    %2022 = vmatprep.subr.bf16.mxu0 0
    %2023 = vmatpush1.bf16.msra.mxu0 %v1994
    %2024 = vmatprep.subr.bf16.mxu0 0
    %2025 = vmatpush1.bf16.msra.mxu0 %v1995
    %2026 = vmatprep.subr.bf16.mxu0 0
    %2027 = vmatpush1.bf16.msra.mxu0 0
    %2028 = vmatprep.subr.bf16.mxu0 0
    %2029 = vmatpush1.bf16.msra.mxu0 0
    %2030 = vmatprep.subr.bf16.mxu0 0
    %2031 = vmatpush1.bf16.msra.mxu0 0
    %2032 = vmatprep.subr.bf16.mxu0 0
    %2033 = vmatpush1.bf16.msra.mxu0 0
    %2034 = vmatprep.subr.bf16.mxu0 0
    %2035 = vmatpush1.bf16.msra.mxu0 0
    %2036 = vmatprep.subr.bf16.mxu0 0
    %2037 = vmatpush1.bf16.msra.mxu0 0
    %2038 = vmatprep.subr.bf16.mxu0 0
    %2039 = vmatpush1.bf16.msra.mxu0 0
    %2040 = vmatprep.subr.bf16.mxu0 0
    %2041 = vmatpush1.bf16.msra.mxu0 0
    %2042 = vmatprep.subr.bf16.mxu0 0
    %2043 = vmatpush1.bf16.msra.mxu0 0
    %2044 = vmatprep.subr.bf16.mxu0 0
    %2045 = vmatpush1.bf16.msra.mxu0 0
    %2046 = vmatprep.subr.bf16.mxu0 0
    %2047 = vmatpush1.bf16.msra.mxu0 0
    %2048 = vmatprep.subr.bf16.mxu0 0
    %2049 = vmatpush1.bf16.msra.mxu0 0
    %2050 = vmatprep.subr.bf16.mxu0 0
    %2051 = vmatpush1.bf16.msra.mxu0 0
    %2052 = vmatprep.subr.bf16.mxu0 0
    %2053 = vmatpush1.bf16.msra.mxu0 0
    %2054 = vmatprep.mubr.bf16.mxu0 0
    %2055 = vmatmul.mubr.bf16.gmra.mrb[0].mxu0 %v1999
    %v2056 = vpop.f32.mrb[0].mxu0
    %v2057 = vadd.f32 0.0, %v2056
    %v2058 = vpop.f32.mrb[0].mxu0
    %v2059 = vpop.f32.mrb[0].mxu0
    %v2060 = vadd.f32 0.0, %v2059
    %v2061 = vpop.f32.mrb[0].mxu0
    %2062 = vmatprep.mubr.bf16.mxu0 0
    %2063 = vmatmul.mubr.bf16.gmra.mrb[0].mxu0 %v2002
    %v2064 = vpop.f32.mrb[0].mxu0
    %v2065 = vadd.f32 0.0, %v2064
    %v2066 = vpop.f32.mrb[0].mxu0
    %v2067 = vpop.f32.mrb[0].mxu0
    %v2068 = vadd.f32 0.0, %v2067
    %v2069 = vpop.f32.mrb[0].mxu0
    %2070 = vmatprep.mubr.bf16.mxu0 0
    %2071 = vmatmul.mubr.bf16.gmra.mrb[0].mxu0 %v2005
    %v2072 = vpop.f32.mrb[0].mxu0
    %v2073 = vadd.f32 0.0, %v2072
    %v2074 = vpop.f32.mrb[0].mxu0
    %v2075 = vpop.f32.mrb[0].mxu0
    %v2076 = vadd.f32 0.0, %v2075
    %v2077 = vpop.f32.mrb[0].mxu0
    %2078 = vmatprep.mubr.bf16.mxu0 0
    %2079 = vmatmul.mubr.bf16.gmra.mrb[0].mxu0 %v2008
    %v2080 = vpop.f32.mrb[0].mxu0
    %v2081 = vadd.f32 0.0, %v2080
    %v2082 = vpop.f32.mrb[0].mxu0
    %v2083 = vpop.f32.mrb[0].mxu0
    %v2084 = vadd.f32 0.0, %v2083
    %v2085 = vpop.f32.mrb[0].mxu0
    %2086 = vmatprep.mubr.bf16.mxu0 0
    %2087 = vmatmul.mubr.bf16.gmra.mrb[0].mxu0 %v2011
    %v2088 = vpop.f32.mrb[0].mxu0
    %v2089 = vadd.f32 0.0, %v2088
    %v2090 = vpop.f32.mrb[0].mxu0
    %v2091 = vpop.f32.mrb[0].mxu0
    %v2092 = vadd.f32 0.0, %v2091
    %v2093 = vpop.f32.mrb[0].mxu0
    %2094 = vmatprep.mubr.bf16.mxu0 0
    %2095 = vmatmul.mubr.bf16.gmra.mrb[0].mxu0 %v2014
    %v2096 = vpop.f32.mrb[0].mxu0
    %v2097 = vadd.f32 0.0, %v2096
    %v2098 = vpop.f32.mrb[0].mxu0
    %v2099 = vpop.f32.mrb[0].mxu0
    %v2100 = vadd.f32 0.0, %v2099
    %v2101 = vpop.f32.mrb[0].mxu0
    %2102 = vmatprep.mubr.bf16.mxu0 0
    %2103 = vmatmul.mubr.bf16.gmra.mrb[0].mxu0 %v2017
    %v2104 = vpop.f32.mrb[0].mxu0
    %v2105 = vadd.f32 0.0, %v2104
    %v2106 = vpop.f32.mrb[0].mxu0
    %v2107 = vpop.f32.mrb[0].mxu0
    %v2108 = vadd.f32 0.0, %v2107
    %v2109 = vpop.f32.mrb[0].mxu0
    %2110 = vmatprep.mubr.bf16.mxu0 0
    %2111 = vmatmul.mubr.bf16.gmra.mrb[0].mxu0 %v2020
    %v2112 = vpop.f32.mrb[0].mxu0
    %v2113 = vadd.f32 0.0, %v2112
    %v2114 = vpop.f32.mrb[0].mxu0
    %v2115 = vpop.f32.mrb[0].mxu0
    %v2116 = vadd.f32 0.0, %v2115
    %v2117 = vpop.f32.mrb[0].mxu0
    %2118 = vdwg.mxu0
    %v2119 = vadd.f32 %v1909, %v2057
    %v2120 = vadd.f32 %v1910, %v2060
    %v2121 = vadd.f32 %v1911, %v2065
    %v2122 = vadd.f32 %v1912, %v2068
    %v2123 = vadd.f32 %v1913, %v2073
    %v2124 = vadd.f32 %v1914, %v2076
    %v2125 = vadd.f32 %v1915, %v2081
    %v2126 = vadd.f32 %v1916, %v2084
    %v2127 = vadd.f32 %v1917, %v2089
    %v2128 = vadd.f32 %v1918, %v2092
    %v2129 = vadd.f32 %v1919, %v2097
    %v2130 = vadd.f32 %v1920, %v2100
    %v2131 = vadd.f32 %v1921, %v2105
    %v2132 = vadd.f32 %v1922, %v2108
    %v2133 = vadd.f32 %v1923, %v2113
    %v2134 = vadd.f32 %v1924, %v2116
    %v2135 = vld [vmem:[%s725] sm:$0xf]
    %v2136 = vld [vmem:[%s725 + $0x4] sm:$0x1]
    %v2137 = vld [vmem:[%s725 + $0x8] sm:$0xf]
    %v2138 = vld [vmem:[%s725 + $0xc] sm:$0x1]
    %v2139 = vld [vmem:[%s725 + $0x10] sm:$0xf]
    %v2140 = vld [vmem:[%s725 + $0x14] sm:$0x1]
    %v2141 = vld [vmem:[%s725 + $0x18] sm:$0xf]
    %v2142 = vld [vmem:[%s725 + $0x1c] sm:$0x1]
    %v2143 = vld [vmem:[%s725 + $0x20] sm:$0xf]
    %v2144 = vld [vmem:[%s725 + $0x24] sm:$0x1]
    %v2145 = vld [vmem:[%s725 + $0x28] sm:$0xf]
    %v2146 = vld [vmem:[%s725 + $0x2c] sm:$0x1]
    %v2147 = vld [vmem:[%s725 + $0x30] sm:$0xf]
    %v2148 = vld [vmem:[%s725 + $0x34] sm:$0x1]
    %v2149 = vld [vmem:[%s725 + $0x38] sm:$0xf]
    %v2150 = vld [vmem:[%s725 + $0x3c] sm:$0x1]
    %v2151 = vld [vmem:[%s725 + $0x50] sm:$0xf]
    %v2152 = vld [vmem:[%s725 + $0x54] sm:$0x1]
    %v2153 = vld [vmem:[%s725 + $0x58] sm:$0xf]
    %v2154 = vld [vmem:[%s725 + $0x5c] sm:$0x1]
    %v2155 = vld [vmem:[%s725 + $0x60] sm:$0xf]
    %v2156 = vld [vmem:[%s725 + $0x64] sm:$0x1]
    %v2157 = vld [vmem:[%s725 + $0x68] sm:$0xf]
    %v2158 = vld [vmem:[%s725 + $0x6c] sm:$0x1]
    %v2159 = vld [vmem:[%s725 + $0x70] sm:$0xf]
    %v2160 = vld [vmem:[%s725 + $0x74] sm:$0x1]
    %v2161 = vld [vmem:[%s725 + $0x78] sm:$0xf]
    %v2162 = vld [vmem:[%s725 + $0x7c] sm:$0x1]
    %v2163 = vld [vmem:[%s725 + $0x80] sm:$0xf]
    %v2164 = vld [vmem:[%s725 + $0x84] sm:$0x1]
    %v2165 = vld [vmem:[%s725 + $0x88] sm:$0xf]
    %v2166 = vld [vmem:[%s725 + $0x8c] sm:$0x1]
    %v2168 = vshrl.u32 %v2135, 16
    %v2170 = vrot.slane %v2168, 4
    %v2171 = vshll.u32 %v2135, 16
    %v2173 = vrot.slane %v2171, 5
    %v2174 = vor.u32 %v2170, %v2173
    %v2175 = vrot.slane %v2174, 4
    %v2177 = vshll.u32 %v2136, 16
    %v2179 = vrot.slane %v2177, 5
    %v2180 = vsel %vm1229, %v2175, %v2179
    %v2182 = vshrl.u32 %v2137, 16
    %v2184 = vrot.slane %v2182, 4
    %v2185 = vshll.u32 %v2137, 16
    %v2187 = vrot.slane %v2185, 5
    %v2188 = vor.u32 %v2184, %v2187
    %v2189 = vrot.slane %v2188, 4
    %v2191 = vshll.u32 %v2138, 16
    %v2193 = vrot.slane %v2191, 5
    %v2194 = vsel %vm1229, %v2189, %v2193
    %v2196 = vshrl.u32 %v2139, 16
    %v2198 = vrot.slane %v2196, 4
    %v2199 = vshll.u32 %v2139, 16
    %v2201 = vrot.slane %v2199, 5
    %v2202 = vor.u32 %v2198, %v2201
    %v2203 = vrot.slane %v2202, 4
    %v2205 = vshll.u32 %v2140, 16
    %v2207 = vrot.slane %v2205, 5
    %v2208 = vsel %vm1229, %v2203, %v2207
    %v2210 = vshrl.u32 %v2141, 16
    %v2212 = vrot.slane %v2210, 4
    %v2213 = vshll.u32 %v2141, 16
    %v2215 = vrot.slane %v2213, 5
    %v2216 = vor.u32 %v2212, %v2215
    %v2217 = vrot.slane %v2216, 4
    %v2219 = vshll.u32 %v2142, 16
    %v2221 = vrot.slane %v2219, 5
    %v2222 = vsel %vm1229, %v2217, %v2221
    %v2224 = vshrl.u32 %v2143, 16
    %v2226 = vrot.slane %v2224, 4
    %v2227 = vshll.u32 %v2143, 16
    %v2229 = vrot.slane %v2227, 5
    %v2230 = vor.u32 %v2226, %v2229
    %v2231 = vrot.slane %v2230, 4
    %v2233 = vshll.u32 %v2144, 16
    %v2235 = vrot.slane %v2233, 5
    %v2236 = vsel %vm1229, %v2231, %v2235
    %v2238 = vshrl.u32 %v2145, 16
    %v2240 = vrot.slane %v2238, 4
    %v2241 = vshll.u32 %v2145, 16
    %v2243 = vrot.slane %v2241, 5
    %v2244 = vor.u32 %v2240, %v2243
    %v2245 = vrot.slane %v2244, 4
    %v2247 = vshll.u32 %v2146, 16
    %v2249 = vrot.slane %v2247, 5
    %v2250 = vsel %vm1229, %v2245, %v2249
    %v2252 = vshrl.u32 %v2147, 16
    %v2254 = vrot.slane %v2252, 4
    %v2255 = vshll.u32 %v2147, 16
    %v2257 = vrot.slane %v2255, 5
    %v2258 = vor.u32 %v2254, %v2257
    %v2259 = vrot.slane %v2258, 4
    %v2261 = vshll.u32 %v2148, 16
    %v2263 = vrot.slane %v2261, 5
    %v2264 = vsel %vm1229, %v2259, %v2263
    %v2266 = vshrl.u32 %v2149, 16
    %v2268 = vrot.slane %v2266, 4
    %v2269 = vshll.u32 %v2149, 16
    %v2271 = vrot.slane %v2269, 5
    %v2272 = vor.u32 %v2268, %v2271
    %v2273 = vrot.slane %v2272, 4
    %v2275 = vshll.u32 %v2150, 16
    %v2277 = vrot.slane %v2275, 5
    %v2278 = vsel %vm1229, %v2273, %v2277
    %v2280 = vshrl.u32 %v2151, 16
    %v2282 = vrot.slane %v2280, 4
    %v2283 = vshll.u32 %v2151, 16
    %v2285 = vrot.slane %v2283, 5
    %v2286 = vor.u32 %v2282, %v2285
    %v2287 = vrot.slane %v2286, 4
    %v2289 = vshll.u32 %v2152, 16
    %v2291 = vrot.slane %v2289, 5
    %v2292 = vsel %vm1229, %v2287, %v2291
    %v2294 = vshrl.u32 %v2153, 16
    %v2296 = vrot.slane %v2294, 4
    %v2297 = vshll.u32 %v2153, 16
    %v2299 = vrot.slane %v2297, 5
    %v2300 = vor.u32 %v2296, %v2299
    %v2301 = vrot.slane %v2300, 4
    %v2303 = vshll.u32 %v2154, 16
    %v2305 = vrot.slane %v2303, 5
    %v2306 = vsel %vm1229, %v2301, %v2305
    %v2308 = vshrl.u32 %v2155, 16
    %v2310 = vrot.slane %v2308, 4
    %v2311 = vshll.u32 %v2155, 16
    %v2313 = vrot.slane %v2311, 5
    %v2314 = vor.u32 %v2310, %v2313
    %v2315 = vrot.slane %v2314, 4
    %v2317 = vshll.u32 %v2156, 16
    %v2319 = vrot.slane %v2317, 5
    %v2320 = vsel %vm1229, %v2315, %v2319
    %v2322 = vshrl.u32 %v2157, 16
    %v2324 = vrot.slane %v2322, 4
    %v2325 = vshll.u32 %v2157, 16
    %v2327 = vrot.slane %v2325, 5
    %v2328 = vor.u32 %v2324, %v2327
    %v2329 = vrot.slane %v2328, 4
    %v2331 = vshll.u32 %v2158, 16
    %v2333 = vrot.slane %v2331, 5
    %v2334 = vsel %vm1229, %v2329, %v2333
    %v2336 = vshrl.u32 %v2159, 16
    %v2338 = vrot.slane %v2336, 4
    %v2339 = vshll.u32 %v2159, 16
    %v2341 = vrot.slane %v2339, 5
    %v2342 = vor.u32 %v2338, %v2341
    %v2343 = vrot.slane %v2342, 4
    %v2345 = vshll.u32 %v2160, 16
    %v2347 = vrot.slane %v2345, 5
    %v2348 = vsel %vm1229, %v2343, %v2347
    %v2350 = vshrl.u32 %v2161, 16
    %v2352 = vrot.slane %v2350, 4
    %v2353 = vshll.u32 %v2161, 16
    %v2355 = vrot.slane %v2353, 5
    %v2356 = vor.u32 %v2352, %v2355
    %v2357 = vrot.slane %v2356, 4
    %v2359 = vshll.u32 %v2162, 16
    %v2361 = vrot.slane %v2359, 5
    %v2362 = vsel %vm1229, %v2357, %v2361
    %v2364 = vshrl.u32 %v2163, 16
    %v2366 = vrot.slane %v2364, 4
    %v2367 = vshll.u32 %v2163, 16
    %v2369 = vrot.slane %v2367, 5
    %v2370 = vor.u32 %v2366, %v2369
    %v2371 = vrot.slane %v2370, 4
    %v2373 = vshll.u32 %v2164, 16
    %v2375 = vrot.slane %v2373, 5
    %v2376 = vsel %vm1229, %v2371, %v2375
    %v2378 = vshrl.u32 %v2165, 16
    %v2380 = vrot.slane %v2378, 4
    %v2381 = vshll.u32 %v2165, 16
    %v2383 = vrot.slane %v2381, 5
    %v2384 = vor.u32 %v2380, %v2383
    %v2385 = vrot.slane %v2384, 4
    %v2387 = vshll.u32 %v2166, 16
    %v2389 = vrot.slane %v2387, 5
    %v2390 = vsel %vm1229, %v2385, %v2389
    %s2391 = scalar_lea.vmem %s4, 64
    %v2392 = vld [vmem:[%s2391] sm:$0xf]
    %v2393 = vld [vmem:[%s2391 + $0x4] sm:$0xf]
    %v2394 = vld [vmem:[%s2391 + $0x8] sm:$0xf]
    %v2395 = vld [vmem:[%s2391 + $0xc] sm:$0xf]
    %v2396 = vunpack.c.l.b16 %v2180
    %v2397 = vunpack.c.l.b16 %v2194
    %v2398 = vunpack.c.l.b16 %v2208
    %v2399 = vunpack.c.l.b16 %v2222
    %v2400 = vunpack.c.l.b16 %v2236
    %v2401 = vunpack.c.l.b16 %v2250
    %v2402 = vunpack.c.l.b16 %v2264
    %v2403 = vunpack.c.l.b16 %v2278
    %v2404 = vunpack.c.l.b16 %v2292
    %v2405 = vunpack.c.l.b16 %v2306
    %v2406 = vunpack.c.l.b16 %v2320
    %v2407 = vunpack.c.l.b16 %v2334
    %v2408 = vunpack.c.l.b16 %v2348
    %v2409 = vunpack.c.l.b16 %v2362
    %v2410 = vunpack.c.l.b16 %v2376
    %v2411 = vunpack.c.l.b16 %v2390
    %v2412 = vpack.c.b16 %v2397, %v2396
    %v2413 = vpack.c.b16 %v2399, %v2398
    %v2414 = vpack.c.b16 %v2401, %v2400
    %v2415 = vpack.c.b16 %v2403, %v2402
    %v2416 = vpack.c.b16 %v2405, %v2404
    %v2417 = vpack.c.b16 %v2407, %v2406
    %v2418 = vpack.c.b16 %v2409, %v2408
    %v2419 = vpack.c.b16 %v2411, %v2410
    %v2424 = vunpack.c.l.b16 %v2392
    %v2425 = vunpack.c.l.b16 %v2393
    %v2426 = vunpack.c.l.b16 %v2394
    %v2427 = vunpack.c.l.b16 %v2395
    %v2428 = vpack.c.b16 %v2425, %v2424
    %v2429 = vpack.c.b16 %v2427, %v2426
    %v2433 = vsel %vm58, %v2412, 0
    %v2436 = vsel %vm58, %v2413, 0
    %v2439 = vsel %vm58, %v2414, 0
    %v2442 = vsel %vm58, %v2415, 0
    %v2445 = vsel %vm58, %v2416, 0
    %v2448 = vsel %vm58, %v2417, 0
    %v2451 = vsel %vm58, %v2418, 0
    %v2454 = vsel %vm58, %v2419, 0
    %2456 = vmatprep.subr.bf16.mxu0 0
    %2457 = vmatpush1.bf16.msra.mxu0 %v2428
    %2458 = vmatprep.subr.bf16.mxu0 0
    %2459 = vmatpush1.bf16.msra.mxu0 %v2429
    %2460 = vmatprep.subr.bf16.mxu0 0
    %2461 = vmatpush1.bf16.msra.mxu0 0
    %2462 = vmatprep.subr.bf16.mxu0 0
    %2463 = vmatpush1.bf16.msra.mxu0 0
    %2464 = vmatprep.subr.bf16.mxu0 0
    %2465 = vmatpush1.bf16.msra.mxu0 0
    %2466 = vmatprep.subr.bf16.mxu0 0
    %2467 = vmatpush1.bf16.msra.mxu0 0
    %2468 = vmatprep.subr.bf16.mxu0 0
    %2469 = vmatpush1.bf16.msra.mxu0 0
    %2470 = vmatprep.subr.bf16.mxu0 0
    %2471 = vmatpush1.bf16.msra.mxu0 0
    %2472 = vmatprep.subr.bf16.mxu0 0
    %2473 = vmatpush1.bf16.msra.mxu0 0
    %2474 = vmatprep.subr.bf16.mxu0 0
    %2475 = vmatpush1.bf16.msra.mxu0 0
    %2476 = vmatprep.subr.bf16.mxu0 0
    %2477 = vmatpush1.bf16.msra.mxu0 0
    %2478 = vmatprep.subr.bf16.mxu0 0
    %2479 = vmatpush1.bf16.msra.mxu0 0
    %2480 = vmatprep.subr.bf16.mxu0 0
    %2481 = vmatpush1.bf16.msra.mxu0 0
    %2482 = vmatprep.subr.bf16.mxu0 0
    %2483 = vmatpush1.bf16.msra.mxu0 0
    %2484 = vmatprep.subr.bf16.mxu0 0
    %2485 = vmatpush1.bf16.msra.mxu0 0
    %2486 = vmatprep.subr.bf16.mxu0 0
    %2487 = vmatpush1.bf16.msra.mxu0 0
    %2488 = vmatprep.mubr.bf16.mxu0 0
    %2489 = vmatmul.mubr.bf16.gmra.mrb[0].mxu0 %v2433
    %v2490 = vpop.f32.mrb[0].mxu0
    %v2491 = vadd.f32 0.0, %v2490
    %v2492 = vpop.f32.mrb[0].mxu0
    %v2493 = vpop.f32.mrb[0].mxu0
    %v2494 = vadd.f32 0.0, %v2493
    %v2495 = vpop.f32.mrb[0].mxu0
    %2496 = vmatprep.mubr.bf16.mxu0 0
    %2497 = vmatmul.mubr.bf16.gmra.mrb[0].mxu0 %v2436
    %v2498 = vpop.f32.mrb[0].mxu0
    %v2499 = vadd.f32 0.0, %v2498
    %v2500 = vpop.f32.mrb[0].mxu0
    %v2501 = vpop.f32.mrb[0].mxu0
    %v2502 = vadd.f32 0.0, %v2501
    %v2503 = vpop.f32.mrb[0].mxu0
    %2504 = vmatprep.mubr.bf16.mxu0 0
    %2505 = vmatmul.mubr.bf16.gmra.mrb[0].mxu0 %v2439
    %v2506 = vpop.f32.mrb[0].mxu0
    %v2507 = vadd.f32 0.0, %v2506
    %v2508 = vpop.f32.mrb[0].mxu0
    %v2509 = vpop.f32.mrb[0].mxu0
    %v2510 = vadd.f32 0.0, %v2509
    %v2511 = vpop.f32.mrb[0].mxu0
    %2512 = vmatprep.mubr.bf16.mxu0 0
    %2513 = vmatmul.mubr.bf16.gmra.mrb[0].mxu0 %v2442
    %v2514 = vpop.f32.mrb[0].mxu0
    %v2515 = vadd.f32 0.0, %v2514
    %v2516 = vpop.f32.mrb[0].mxu0
    %v2517 = vpop.f32.mrb[0].mxu0
    %v2518 = vadd.f32 0.0, %v2517
    %v2519 = vpop.f32.mrb[0].mxu0
    %2520 = vmatprep.mubr.bf16.mxu0 0
    %2521 = vmatmul.mubr.bf16.gmra.mrb[0].mxu0 %v2445
    %v2522 = vpop.f32.mrb[0].mxu0
    %v2523 = vadd.f32 0.0, %v2522
    %v2524 = vpop.f32.mrb[0].mxu0
    %v2525 = vpop.f32.mrb[0].mxu0
    %v2526 = vadd.f32 0.0, %v2525
    %v2527 = vpop.f32.mrb[0].mxu0
    %2528 = vmatprep.mubr.bf16.mxu0 0
    %2529 = vmatmul.mubr.bf16.gmra.mrb[0].mxu0 %v2448
    %v2530 = vpop.f32.mrb[0].mxu0
    %v2531 = vadd.f32 0.0, %v2530
    %v2532 = vpop.f32.mrb[0].mxu0
    %v2533 = vpop.f32.mrb[0].mxu0
    %v2534 = vadd.f32 0.0, %v2533
    %v2535 = vpop.f32.mrb[0].mxu0
    %2536 = vmatprep.mubr.bf16.mxu0 0
    %2537 = vmatmul.mubr.bf16.gmra.mrb[0].mxu0 %v2451
    %v2538 = vpop.f32.mrb[0].mxu0
    %v2539 = vadd.f32 0.0, %v2538
    %v2540 = vpop.f32.mrb[0].mxu0
    %v2541 = vpop.f32.mrb[0].mxu0
    %v2542 = vadd.f32 0.0, %v2541
    %v2543 = vpop.f32.mrb[0].mxu0
    %2544 = vmatprep.mubr.bf16.mxu0 0
    %2545 = vmatmul.mubr.bf16.gmra.mrb[0].mxu0 %v2454
    %v2546 = vpop.f32.mrb[0].mxu0
    %v2547 = vadd.f32 0.0, %v2546
    %v2548 = vpop.f32.mrb[0].mxu0
    %v2549 = vpop.f32.mrb[0].mxu0
    %v2550 = vadd.f32 0.0, %v2549
    %v2551 = vpop.f32.mrb[0].mxu0
    %2552 = vdwg.mxu0
    %v2553 = vadd.f32 %v2119, %v2491
    %v2554 = vadd.f32 %v2120, %v2494
    %v2555 = vadd.f32 %v2121, %v2499
    %v2556 = vadd.f32 %v2122, %v2502
    %v2557 = vadd.f32 %v2123, %v2507
    %v2558 = vadd.f32 %v2124, %v2510
    %v2559 = vadd.f32 %v2125, %v2515
    %v2560 = vadd.f32 %v2126, %v2518
    %v2561 = vadd.f32 %v2127, %v2523
    %v2562 = vadd.f32 %v2128, %v2526
    %v2563 = vadd.f32 %v2129, %v2531
    %v2564 = vadd.f32 %v2130, %v2534
    %v2565 = vadd.f32 %v2131, %v2539
    %v2566 = vadd.f32 %v2132, %v2542
    %v2567 = vadd.f32 %v2133, %v2547
    %v2568 = vadd.f32 %v2134, %v2550
    %v2569 = vld [vmem:[%s725] sm:$0xe]
    %v2570 = vld [vmem:[%s725 + $0x8] sm:$0xe]
    %v2571 = vld [vmem:[%s725 + $0x10] sm:$0xe]
    %v2572 = vld [vmem:[%s725 + $0x18] sm:$0xe]
    %v2573 = vld [vmem:[%s725 + $0x20] sm:$0xe]
    %v2574 = vld [vmem:[%s725 + $0x28] sm:$0xe]
    %v2575 = vld [vmem:[%s725 + $0x30] sm:$0xe]
    %v2576 = vld [vmem:[%s725 + $0x38] sm:$0xe]
    %v2577 = vld [vmem:[%s725 + $0x50] sm:$0xe]
    %v2578 = vld [vmem:[%s725 + $0x58] sm:$0xe]
    %v2579 = vld [vmem:[%s725 + $0x60] sm:$0xe]
    %v2580 = vld [vmem:[%s725 + $0x68] sm:$0xe]
    %v2581 = vld [vmem:[%s725 + $0x70] sm:$0xe]
    %v2582 = vld [vmem:[%s725 + $0x78] sm:$0xe]
    %v2583 = vld [vmem:[%s725 + $0x80] sm:$0xe]
    %v2584 = vld [vmem:[%s725 + $0x88] sm:$0xe]
    %v2617 = vrot.slane %v2569, 5
    %v2618 = vrot.slane %v2617, 4
    %v2619 = vrot.slane %v2136, 5
    %v2620 = vsel %vm1682, %v2618, %v2619
    %v2621 = vrot.slane %v2570, 5
    %v2622 = vrot.slane %v2621, 4
    %v2623 = vrot.slane %v2138, 5
    %v2624 = vsel %vm1682, %v2622, %v2623
    %v2625 = vrot.slane %v2571, 5
    %v2626 = vrot.slane %v2625, 4
    %v2627 = vrot.slane %v2140, 5
    %v2628 = vsel %vm1682, %v2626, %v2627
    %v2629 = vrot.slane %v2572, 5
    %v2630 = vrot.slane %v2629, 4
    %v2631 = vrot.slane %v2142, 5
    %v2632 = vsel %vm1682, %v2630, %v2631
    %v2633 = vrot.slane %v2573, 5
    %v2634 = vrot.slane %v2633, 4
    %v2635 = vrot.slane %v2144, 5
    %v2636 = vsel %vm1682, %v2634, %v2635
    %v2637 = vrot.slane %v2574, 5
    %v2638 = vrot.slane %v2637, 4
    %v2639 = vrot.slane %v2146, 5
    %v2640 = vsel %vm1682, %v2638, %v2639
    %v2641 = vrot.slane %v2575, 5
    %v2642 = vrot.slane %v2641, 4
    %v2643 = vrot.slane %v2148, 5
    %v2644 = vsel %vm1682, %v2642, %v2643
    %v2645 = vrot.slane %v2576, 5
    %v2646 = vrot.slane %v2645, 4
    %v2647 = vrot.slane %v2150, 5
    %v2648 = vsel %vm1682, %v2646, %v2647
    %v2649 = vrot.slane %v2577, 5
    %v2650 = vrot.slane %v2649, 4
    %v2651 = vrot.slane %v2152, 5
    %v2652 = vsel %vm1682, %v2650, %v2651
    %v2653 = vrot.slane %v2578, 5
    %v2654 = vrot.slane %v2653, 4
    %v2655 = vrot.slane %v2154, 5
    %v2656 = vsel %vm1682, %v2654, %v2655
    %v2657 = vrot.slane %v2579, 5
    %v2658 = vrot.slane %v2657, 4
    %v2659 = vrot.slane %v2156, 5
    %v2660 = vsel %vm1682, %v2658, %v2659
    %v2661 = vrot.slane %v2580, 5
    %v2662 = vrot.slane %v2661, 4
    %v2663 = vrot.slane %v2158, 5
    %v2664 = vsel %vm1682, %v2662, %v2663
    %v2665 = vrot.slane %v2581, 5
    %v2666 = vrot.slane %v2665, 4
    %v2667 = vrot.slane %v2160, 5
    %v2668 = vsel %vm1682, %v2666, %v2667
    %v2669 = vrot.slane %v2582, 5
    %v2670 = vrot.slane %v2669, 4
    %v2671 = vrot.slane %v2162, 5
    %v2672 = vsel %vm1682, %v2670, %v2671
    %v2673 = vrot.slane %v2583, 5
    %v2674 = vrot.slane %v2673, 4
    %v2675 = vrot.slane %v2164, 5
    %v2676 = vsel %vm1682, %v2674, %v2675
    %v2677 = vrot.slane %v2584, 5
    %v2678 = vrot.slane %v2677, 4
    %v2679 = vrot.slane %v2166, 5
    %v2680 = vsel %vm1682, %v2678, %v2679
    %s2681 = scalar_lea.vmem %s4, 80
    %v2682 = vld [vmem:[%s2681] sm:$0xf]
    %v2683 = vld [vmem:[%s2681 + $0x4] sm:$0xf]
    %v2684 = vld [vmem:[%s2681 + $0x8] sm:$0xf]
    %v2685 = vld [vmem:[%s2681 + $0xc] sm:$0xf]
    %v2686 = vunpack.c.l.b16 %v2620
    %v2687 = vunpack.c.l.b16 %v2624
    %v2688 = vunpack.c.l.b16 %v2628
    %v2689 = vunpack.c.l.b16 %v2632
    %v2690 = vunpack.c.l.b16 %v2636
    %v2691 = vunpack.c.l.b16 %v2640
    %v2692 = vunpack.c.l.b16 %v2644
    %v2693 = vunpack.c.l.b16 %v2648
    %v2694 = vunpack.c.l.b16 %v2652
    %v2695 = vunpack.c.l.b16 %v2656
    %v2696 = vunpack.c.l.b16 %v2660
    %v2697 = vunpack.c.l.b16 %v2664
    %v2698 = vunpack.c.l.b16 %v2668
    %v2699 = vunpack.c.l.b16 %v2672
    %v2700 = vunpack.c.l.b16 %v2676
    %v2701 = vunpack.c.l.b16 %v2680
    %v2702 = vpack.c.b16 %v2687, %v2686
    %v2703 = vpack.c.b16 %v2689, %v2688
    %v2704 = vpack.c.b16 %v2691, %v2690
    %v2705 = vpack.c.b16 %v2693, %v2692
    %v2706 = vpack.c.b16 %v2695, %v2694
    %v2707 = vpack.c.b16 %v2697, %v2696
    %v2708 = vpack.c.b16 %v2699, %v2698
    %v2709 = vpack.c.b16 %v2701, %v2700
    %v2714 = vunpack.c.l.b16 %v2682
    %v2715 = vunpack.c.l.b16 %v2683
    %v2716 = vunpack.c.l.b16 %v2684
    %v2717 = vunpack.c.l.b16 %v2685
    %v2718 = vpack.c.b16 %v2715, %v2714
    %v2719 = vpack.c.b16 %v2717, %v2716
    %v2723 = vsel %vm58, %v2702, 0
    %v2726 = vsel %vm58, %v2703, 0
    %v2729 = vsel %vm58, %v2704, 0
    %v2732 = vsel %vm58, %v2705, 0
    %v2735 = vsel %vm58, %v2706, 0
    %v2738 = vsel %vm58, %v2707, 0
    %v2741 = vsel %vm58, %v2708, 0
    %v2744 = vsel %vm58, %v2709, 0
    %2746 = vmatprep.subr.bf16.mxu0 0
    %2747 = vmatpush1.bf16.msra.mxu0 %v2718
    %2748 = vmatprep.subr.bf16.mxu0 0
    %2749 = vmatpush1.bf16.msra.mxu0 %v2719
    %2750 = vmatprep.subr.bf16.mxu0 0
    %2751 = vmatpush1.bf16.msra.mxu0 0
    %2752 = vmatprep.subr.bf16.mxu0 0
    %2753 = vmatpush1.bf16.msra.mxu0 0
    %2754 = vmatprep.subr.bf16.mxu0 0
    %2755 = vmatpush1.bf16.msra.mxu0 0
    %2756 = vmatprep.subr.bf16.mxu0 0
    %2757 = vmatpush1.bf16.msra.mxu0 0
    %2758 = vmatprep.subr.bf16.mxu0 0
    %2759 = vmatpush1.bf16.msra.mxu0 0
    %2760 = vmatprep.subr.bf16.mxu0 0
    %2761 = vmatpush1.bf16.msra.mxu0 0
    %2762 = vmatprep.subr.bf16.mxu0 0
    %2763 = vmatpush1.bf16.msra.mxu0 0
    %2764 = vmatprep.subr.bf16.mxu0 0
    %2765 = vmatpush1.bf16.msra.mxu0 0
    %2766 = vmatprep.subr.bf16.mxu0 0
    %2767 = vmatpush1.bf16.msra.mxu0 0
    %2768 = vmatprep.subr.bf16.mxu0 0
    %2769 = vmatpush1.bf16.msra.mxu0 0
    %2770 = vmatprep.subr.bf16.mxu0 0
    %2771 = vmatpush1.bf16.msra.mxu0 0
    %2772 = vmatprep.subr.bf16.mxu0 0
    %2773 = vmatpush1.bf16.msra.mxu0 0
    %2774 = vmatprep.subr.bf16.mxu0 0
    %2775 = vmatpush1.bf16.msra.mxu0 0
    %2776 = vmatprep.subr.bf16.mxu0 0
    %2777 = vmatpush1.bf16.msra.mxu0 0
    %2778 = vmatprep.mubr.bf16.mxu0 0
    %2779 = vmatmul.mubr.bf16.gmra.mrb[0].mxu0 %v2723
    %v2780 = vpop.f32.mrb[0].mxu0
    %v2781 = vadd.f32 0.0, %v2780
    %v2782 = vpop.f32.mrb[0].mxu0
    %v2783 = vpop.f32.mrb[0].mxu0
    %v2784 = vadd.f32 0.0, %v2783
    %v2785 = vpop.f32.mrb[0].mxu0
    %2786 = vmatprep.mubr.bf16.mxu0 0
    %2787 = vmatmul.mubr.bf16.gmra.mrb[0].mxu0 %v2726
    %v2788 = vpop.f32.mrb[0].mxu0
    %v2789 = vadd.f32 0.0, %v2788
    %v2790 = vpop.f32.mrb[0].mxu0
    %v2791 = vpop.f32.mrb[0].mxu0
    %v2792 = vadd.f32 0.0, %v2791
    %v2793 = vpop.f32.mrb[0].mxu0
    %2794 = vmatprep.mubr.bf16.mxu0 0
    %2795 = vmatmul.mubr.bf16.gmra.mrb[0].mxu0 %v2729
    %v2796 = vpop.f32.mrb[0].mxu0
    %v2797 = vadd.f32 0.0, %v2796
    %v2798 = vpop.f32.mrb[0].mxu0
    %v2799 = vpop.f32.mrb[0].mxu0
    %v2800 = vadd.f32 0.0, %v2799
    %v2801 = vpop.f32.mrb[0].mxu0
    %2802 = vmatprep.mubr.bf16.mxu0 0
    %2803 = vmatmul.mubr.bf16.gmra.mrb[0].mxu0 %v2732
    %v2804 = vpop.f32.mrb[0].mxu0
    %v2805 = vadd.f32 0.0, %v2804
    %v2806 = vpop.f32.mrb[0].mxu0
    %v2807 = vpop.f32.mrb[0].mxu0
    %v2808 = vadd.f32 0.0, %v2807
    %v2809 = vpop.f32.mrb[0].mxu0
    %2810 = vmatprep.mubr.bf16.mxu0 0
    %2811 = vmatmul.mubr.bf16.gmra.mrb[0].mxu0 %v2735
    %v2812 = vpop.f32.mrb[0].mxu0
    %v2813 = vadd.f32 0.0, %v2812
    %v2814 = vpop.f32.mrb[0].mxu0
    %v2815 = vpop.f32.mrb[0].mxu0
    %v2816 = vadd.f32 0.0, %v2815
    %v2817 = vpop.f32.mrb[0].mxu0
    %2818 = vmatprep.mubr.bf16.mxu0 0
    %2819 = vmatmul.mubr.bf16.gmra.mrb[0].mxu0 %v2738
    %v2820 = vpop.f32.mrb[0].mxu0
    %v2821 = vadd.f32 0.0, %v2820
    %v2822 = vpop.f32.mrb[0].mxu0
    %v2823 = vpop.f32.mrb[0].mxu0
    %v2824 = vadd.f32 0.0, %v2823
    %v2825 = vpop.f32.mrb[0].mxu0
    %2826 = vmatprep.mubr.bf16.mxu0 0
    %2827 = vmatmul.mubr.bf16.gmra.mrb[0].mxu0 %v2741
    %v2828 = vpop.f32.mrb[0].mxu0
    %v2829 = vadd.f32 0.0, %v2828
    %v2830 = vpop.f32.mrb[0].mxu0
    %v2831 = vpop.f32.mrb[0].mxu0
    %v2832 = vadd.f32 0.0, %v2831
    %v2833 = vpop.f32.mrb[0].mxu0
    %2834 = vmatprep.mubr.bf16.mxu0 0
    %2835 = vmatmul.mubr.bf16.gmra.mrb[0].mxu0 %v2744
    %v2836 = vpop.f32.mrb[0].mxu0
    %v2837 = vadd.f32 0.0, %v2836
    %v2838 = vpop.f32.mrb[0].mxu0
    %v2839 = vpop.f32.mrb[0].mxu0
    %v2840 = vadd.f32 0.0, %v2839
    %v2841 = vpop.f32.mrb[0].mxu0
    %2842 = vdwg.mxu0
    %v2843 = vadd.f32 %v2553, %v2781
    %v2844 = vadd.f32 %v2554, %v2784
    %v2845 = vadd.f32 %v2555, %v2789
    %v2846 = vadd.f32 %v2556, %v2792
    %v2847 = vadd.f32 %v2557, %v2797
    %v2848 = vadd.f32 %v2558, %v2800
    %v2849 = vadd.f32 %v2559, %v2805
    %v2850 = vadd.f32 %v2560, %v2808
    %v2851 = vadd.f32 %v2561, %v2813
    %v2852 = vadd.f32 %v2562, %v2816
    %v2853 = vadd.f32 %v2563, %v2821
    %v2854 = vadd.f32 %v2564, %v2824
    %v2855 = vadd.f32 %v2565, %v2829
    %v2856 = vadd.f32 %v2566, %v2832
    %v2857 = vadd.f32 %v2567, %v2837
    %v2858 = vadd.f32 %v2568, %v2840
    %s2859 = scalar_lea.vmem [#allocation2], 16
    %v2860 = vld [vmem:[%s2859] sm:$0xf]
    %v2861 = vld [vmem:[%s2859 + $0x8] sm:$0xf]
    %v2862 = vld [vmem:[%s2859 + $0x10] sm:$0xf]
    %v2863 = vld [vmem:[%s2859 + $0x18] sm:$0xf]
    %v2864 = vld [vmem:[%s2859 + $0x20] sm:$0xf]
    %v2865 = vld [vmem:[%s2859 + $0x28] sm:$0xf]
    %v2866 = vld [vmem:[%s2859 + $0x30] sm:$0xf]
    %v2867 = vld [vmem:[%s2859 + $0x38] sm:$0xf]
    %v2868 = vld [vmem:[%s2859 + $0x50] sm:$0xf]
    %v2869 = vld [vmem:[%s2859 + $0x58] sm:$0xf]
    %v2870 = vld [vmem:[%s2859 + $0x60] sm:$0xf]
    %v2871 = vld [vmem:[%s2859 + $0x68] sm:$0xf]
    %v2872 = vld [vmem:[%s2859 + $0x70] sm:$0xf]
    %v2873 = vld [vmem:[%s2859 + $0x78] sm:$0xf]
    %v2874 = vld [vmem:[%s2859 + $0x80] sm:$0xf]
    %v2875 = vld [vmem:[%s2859 + $0x88] sm:$0xf]
    %s2876 = scalar_lea.vmem %s4, 96
    %v2877 = vld [vmem:[%s2876] sm:$0xf]
    %v2878 = vld [vmem:[%s2876 + $0x4] sm:$0xf]
    %v2879 = vld [vmem:[%s2876 + $0x8] sm:$0xf]
    %v2880 = vld [vmem:[%s2876 + $0xc] sm:$0xf]
    %v2897 = vunpack.c.l.b16 %v2860
    %v2898 = vunpack.c.l.b16 %v2861
    %v2899 = vunpack.c.l.b16 %v2862
    %v2900 = vunpack.c.l.b16 %v2863
    %v2901 = vunpack.c.l.b16 %v2864
    %v2902 = vunpack.c.l.b16 %v2865
    %v2903 = vunpack.c.l.b16 %v2866
    %v2904 = vunpack.c.l.b16 %v2867
    %v2905 = vunpack.c.l.b16 %v2868
    %v2906 = vunpack.c.l.b16 %v2869
    %v2907 = vunpack.c.l.b16 %v2870
    %v2908 = vunpack.c.l.b16 %v2871
    %v2909 = vunpack.c.l.b16 %v2872
    %v2910 = vunpack.c.l.b16 %v2873
    %v2911 = vunpack.c.l.b16 %v2874
    %v2912 = vunpack.c.l.b16 %v2875
    %v2913 = vpack.c.b16 %v2898, %v2897
    %v2914 = vpack.c.b16 %v2900, %v2899
    %v2915 = vpack.c.b16 %v2902, %v2901
    %v2916 = vpack.c.b16 %v2904, %v2903
    %v2917 = vpack.c.b16 %v2906, %v2905
    %v2918 = vpack.c.b16 %v2908, %v2907
    %v2919 = vpack.c.b16 %v2910, %v2909
    %v2920 = vpack.c.b16 %v2912, %v2911
    %v2925 = vunpack.c.l.b16 %v2877
    %v2926 = vunpack.c.l.b16 %v2878
    %v2927 = vunpack.c.l.b16 %v2879
    %v2928 = vunpack.c.l.b16 %v2880
    %v2929 = vpack.c.b16 %v2926, %v2925
    %v2930 = vpack.c.b16 %v2928, %v2927
    %v2934 = vsel %vm58, %v2913, 0
    %v2937 = vsel %vm58, %v2914, 0
    %v2940 = vsel %vm58, %v2915, 0
    %v2943 = vsel %vm58, %v2916, 0
    %v2946 = vsel %vm58, %v2917, 0
    %v2949 = vsel %vm58, %v2918, 0
    %v2952 = vsel %vm58, %v2919, 0
    %v2955 = vsel %vm58, %v2920, 0
    %2957 = vmatprep.subr.bf16.mxu0 0
    %2958 = vmatpush1.bf16.msra.mxu0 %v2929
    %2959 = vmatprep.subr.bf16.mxu0 0
    %2960 = vmatpush1.bf16.msra.mxu0 %v2930
    %2961 = vmatprep.subr.bf16.mxu0 0
    %2962 = vmatpush1.bf16.msra.mxu0 0
    %2963 = vmatprep.subr.bf16.mxu0 0
    %2964 = vmatpush1.bf16.msra.mxu0 0
    %2965 = vmatprep.subr.bf16.mxu0 0
    %2966 = vmatpush1.bf16.msra.mxu0 0
    %2967 = vmatprep.subr.bf16.mxu0 0
    %2968 = vmatpush1.bf16.msra.mxu0 0
    %2969 = vmatprep.subr.bf16.mxu0 0
    %2970 = vmatpush1.bf16.msra.mxu0 0
    %2971 = vmatprep.subr.bf16.mxu0 0
    %2972 = vmatpush1.bf16.msra.mxu0 0
    %2973 = vmatprep.subr.bf16.mxu0 0
    %2974 = vmatpush1.bf16.msra.mxu0 0
    %2975 = vmatprep.subr.bf16.mxu0 0
    %2976 = vmatpush1.bf16.msra.mxu0 0
    %2977 = vmatprep.subr.bf16.mxu0 0
    %2978 = vmatpush1.bf16.msra.mxu0 0
    %2979 = vmatprep.subr.bf16.mxu0 0
    %2980 = vmatpush1.bf16.msra.mxu0 0
    %2981 = vmatprep.subr.bf16.mxu0 0
    %2982 = vmatpush1.bf16.msra.mxu0 0
    %2983 = vmatprep.subr.bf16.mxu0 0
    %2984 = vmatpush1.bf16.msra.mxu0 0
    %2985 = vmatprep.subr.bf16.mxu0 0
    %2986 = vmatpush1.bf16.msra.mxu0 0
    %2987 = vmatprep.subr.bf16.mxu0 0
    %2988 = vmatpush1.bf16.msra.mxu0 0
    %2989 = vmatprep.mubr.bf16.mxu0 0
    %2990 = vmatmul.mubr.bf16.gmra.mrb[0].mxu0 %v2934
    %v2991 = vpop.f32.mrb[0].mxu0
    %v2992 = vadd.f32 0.0, %v2991
    %v2993 = vpop.f32.mrb[0].mxu0
    %v2994 = vpop.f32.mrb[0].mxu0
    %v2995 = vadd.f32 0.0, %v2994
    %v2996 = vpop.f32.mrb[0].mxu0
    %2997 = vmatprep.mubr.bf16.mxu0 0
    %2998 = vmatmul.mubr.bf16.gmra.mrb[0].mxu0 %v2937
    %v2999 = vpop.f32.mrb[0].mxu0
    %v3000 = vadd.f32 0.0, %v2999
    %v3001 = vpop.f32.mrb[0].mxu0
    %v3002 = vpop.f32.mrb[0].mxu0
    %v3003 = vadd.f32 0.0, %v3002
    %v3004 = vpop.f32.mrb[0].mxu0
    %3005 = vmatprep.mubr.bf16.mxu0 0
    %3006 = vmatmul.mubr.bf16.gmra.mrb[0].mxu0 %v2940
    %v3007 = vpop.f32.mrb[0].mxu0
    %v3008 = vadd.f32 0.0, %v3007
    %v3009 = vpop.f32.mrb[0].mxu0
    %v3010 = vpop.f32.mrb[0].mxu0
    %v3011 = vadd.f32 0.0, %v3010
    %v3012 = vpop.f32.mrb[0].mxu0
    %3013 = vmatprep.mubr.bf16.mxu0 0
    %3014 = vmatmul.mubr.bf16.gmra.mrb[0].mxu0 %v2943
    %v3015 = vpop.f32.mrb[0].mxu0
    %v3016 = vadd.f32 0.0, %v3015
    %v3017 = vpop.f32.mrb[0].mxu0
    %v3018 = vpop.f32.mrb[0].mxu0
    %v3019 = vadd.f32 0.0, %v3018
    %v3020 = vpop.f32.mrb[0].mxu0
    %3021 = vmatprep.mubr.bf16.mxu0 0
    %3022 = vmatmul.mubr.bf16.gmra.mrb[0].mxu0 %v2946
    %v3023 = vpop.f32.mrb[0].mxu0
    %v3024 = vadd.f32 0.0, %v3023
    %v3025 = vpop.f32.mrb[0].mxu0
    %v3026 = vpop.f32.mrb[0].mxu0
    %v3027 = vadd.f32 0.0, %v3026
    %v3028 = vpop.f32.mrb[0].mxu0
    %3029 = vmatprep.mubr.bf16.mxu0 0
    %3030 = vmatmul.mubr.bf16.gmra.mrb[0].mxu0 %v2949
    %v3031 = vpop.f32.mrb[0].mxu0
    %v3032 = vadd.f32 0.0, %v3031
    %v3033 = vpop.f32.mrb[0].mxu0
    %v3034 = vpop.f32.mrb[0].mxu0
    %v3035 = vadd.f32 0.0, %v3034
    %v3036 = vpop.f32.mrb[0].mxu0
    %3037 = vmatprep.mubr.bf16.mxu0 0
    %3038 = vmatmul.mubr.bf16.gmra.mrb[0].mxu0 %v2952
    %v3039 = vpop.f32.mrb[0].mxu0
    %v3040 = vadd.f32 0.0, %v3039
    %v3041 = vpop.f32.mrb[0].mxu0
    %v3042 = vpop.f32.mrb[0].mxu0
    %v3043 = vadd.f32 0.0, %v3042
    %v3044 = vpop.f32.mrb[0].mxu0
    %3045 = vmatprep.mubr.bf16.mxu0 0
    %3046 = vmatmul.mubr.bf16.gmra.mrb[0].mxu0 %v2955
    %v3047 = vpop.f32.mrb[0].mxu0
    %v3048 = vadd.f32 0.0, %v3047
    %v3049 = vpop.f32.mrb[0].mxu0
    %v3050 = vpop.f32.mrb[0].mxu0
    %v3051 = vadd.f32 0.0, %v3050
    %v3052 = vpop.f32.mrb[0].mxu0
    %3053 = vdwg.mxu0
    %v3054 = vadd.f32 %v2843, %v2992
    %v3055 = vadd.f32 %v2844, %v2995
    %v3056 = vadd.f32 %v2845, %v3000
    %v3057 = vadd.f32 %v2846, %v3003
    %v3058 = vadd.f32 %v2847, %v3008
    %v3059 = vadd.f32 %v2848, %v3011
    %v3060 = vadd.f32 %v2849, %v3016
    %v3061 = vadd.f32 %v2850, %v3019
    %v3062 = vadd.f32 %v2851, %v3024
    %v3063 = vadd.f32 %v2852, %v3027
    %v3064 = vadd.f32 %v2853, %v3032
    %v3065 = vadd.f32 %v2854, %v3035
    %v3066 = vadd.f32 %v2855, %v3040
    %v3067 = vadd.f32 %v2856, %v3043
    %v3068 = vadd.f32 %v2857, %v3048
    %v3069 = vadd.f32 %v2858, %v3051
    %v3070 = vld [vmem:[%s2859] sm:$0xf]
    %v3071 = vld [vmem:[%s2859 + $0x4] sm:$0x1]
    %v3072 = vld [vmem:[%s2859 + $0x8] sm:$0xf]
    %v3073 = vld [vmem:[%s2859 + $0xc] sm:$0x1]
    %v3074 = vld [vmem:[%s2859 + $0x10] sm:$0xf]
    %v3075 = vld [vmem:[%s2859 + $0x14] sm:$0x1]
    %v3076 = vld [vmem:[%s2859 + $0x18] sm:$0xf]
    %v3077 = vld [vmem:[%s2859 + $0x1c] sm:$0x1]
    %v3078 = vld [vmem:[%s2859 + $0x20] sm:$0xf]
    %v3079 = vld [vmem:[%s2859 + $0x24] sm:$0x1]
    %v3080 = vld [vmem:[%s2859 + $0x28] sm:$0xf]
    %v3081 = vld [vmem:[%s2859 + $0x2c] sm:$0x1]
    %v3082 = vld [vmem:[%s2859 + $0x30] sm:$0xf]
    %v3083 = vld [vmem:[%s2859 + $0x34] sm:$0x1]
    %v3084 = vld [vmem:[%s2859 + $0x38] sm:$0xf]
    %v3085 = vld [vmem:[%s2859 + $0x3c] sm:$0x1]
    %v3086 = vld [vmem:[%s2859 + $0x50] sm:$0xf]
    %v3087 = vld [vmem:[%s2859 + $0x54] sm:$0x1]
    %v3088 = vld [vmem:[%s2859 + $0x58] sm:$0xf]
    %v3089 = vld [vmem:[%s2859 + $0x5c] sm:$0x1]
    %v3090 = vld [vmem:[%s2859 + $0x60] sm:$0xf]
    %v3091 = vld [vmem:[%s2859 + $0x64] sm:$0x1]
    %v3092 = vld [vmem:[%s2859 + $0x68] sm:$0xf]
    %v3093 = vld [vmem:[%s2859 + $0x6c] sm:$0x1]
    %v3094 = vld [vmem:[%s2859 + $0x70] sm:$0xf]
    %v3095 = vld [vmem:[%s2859 + $0x74] sm:$0x1]
    %v3096 = vld [vmem:[%s2859 + $0x78] sm:$0xf]
    %v3097 = vld [vmem:[%s2859 + $0x7c] sm:$0x1]
    %v3098 = vld [vmem:[%s2859 + $0x80] sm:$0xf]
    %v3099 = vld [vmem:[%s2859 + $0x84] sm:$0x1]
    %v3100 = vld [vmem:[%s2859 + $0x88] sm:$0xf]
    %v3101 = vld [vmem:[%s2859 + $0x8c] sm:$0x1]
    %v3103 = vshrl.u32 %v3070, 16
    %v3105 = vrot.slane %v3103, 4
    %v3106 = vshll.u32 %v3070, 16
    %v3108 = vrot.slane %v3106, 5
    %v3109 = vor.u32 %v3105, %v3108
    %v3110 = vrot.slane %v3109, 4
    %v3112 = vshll.u32 %v3071, 16
    %v3114 = vrot.slane %v3112, 5
    %v3115 = vsel %vm1229, %v3110, %v3114
    %v3117 = vshrl.u32 %v3072, 16
    %v3119 = vrot.slane %v3117, 4
    %v3120 = vshll.u32 %v3072, 16
    %v3122 = vrot.slane %v3120, 5
    %v3123 = vor.u32 %v3119, %v3122
    %v3124 = vrot.slane %v3123, 4
    %v3126 = vshll.u32 %v3073, 16
    %v3128 = vrot.slane %v3126, 5
    %v3129 = vsel %vm1229, %v3124, %v3128
    %v3131 = vshrl.u32 %v3074, 16
    %v3133 = vrot.slane %v3131, 4
    %v3134 = vshll.u32 %v3074, 16
    %v3136 = vrot.slane %v3134, 5
    %v3137 = vor.u32 %v3133, %v3136
    %v3138 = vrot.slane %v3137, 4
    %v3140 = vshll.u32 %v3075, 16
    %v3142 = vrot.slane %v3140, 5
    %v3143 = vsel %vm1229, %v3138, %v3142
    %v3145 = vshrl.u32 %v3076, 16
    %v3147 = vrot.slane %v3145, 4
    %v3148 = vshll.u32 %v3076, 16
    %v3150 = vrot.slane %v3148, 5
    %v3151 = vor.u32 %v3147, %v3150
    %v3152 = vrot.slane %v3151, 4
    %v3154 = vshll.u32 %v3077, 16
    %v3156 = vrot.slane %v3154, 5
    %v3157 = vsel %vm1229, %v3152, %v3156
    %v3159 = vshrl.u32 %v3078, 16
    %v3161 = vrot.slane %v3159, 4
    %v3162 = vshll.u32 %v3078, 16
    %v3164 = vrot.slane %v3162, 5
    %v3165 = vor.u32 %v3161, %v3164
    %v3166 = vrot.slane %v3165, 4
    %v3168 = vshll.u32 %v3079, 16
    %v3170 = vrot.slane %v3168, 5
    %v3171 = vsel %vm1229, %v3166, %v3170
    %v3173 = vshrl.u32 %v3080, 16
    %v3175 = vrot.slane %v3173, 4
    %v3176 = vshll.u32 %v3080, 16
    %v3178 = vrot.slane %v3176, 5
    %v3179 = vor.u32 %v3175, %v3178
    %v3180 = vrot.slane %v3179, 4
    %v3182 = vshll.u32 %v3081, 16
    %v3184 = vrot.slane %v3182, 5
    %v3185 = vsel %vm1229, %v3180, %v3184
    %v3187 = vshrl.u32 %v3082, 16
    %v3189 = vrot.slane %v3187, 4
    %v3190 = vshll.u32 %v3082, 16
    %v3192 = vrot.slane %v3190, 5
    %v3193 = vor.u32 %v3189, %v3192
    %v3194 = vrot.slane %v3193, 4
    %v3196 = vshll.u32 %v3083, 16
    %v3198 = vrot.slane %v3196, 5
    %v3199 = vsel %vm1229, %v3194, %v3198
    %v3201 = vshrl.u32 %v3084, 16
    %v3203 = vrot.slane %v3201, 4
    %v3204 = vshll.u32 %v3084, 16
    %v3206 = vrot.slane %v3204, 5
    %v3207 = vor.u32 %v3203, %v3206
    %v3208 = vrot.slane %v3207, 4
    %v3210 = vshll.u32 %v3085, 16
    %v3212 = vrot.slane %v3210, 5
    %v3213 = vsel %vm1229, %v3208, %v3212
    %v3215 = vshrl.u32 %v3086, 16
    %v3217 = vrot.slane %v3215, 4
    %v3218 = vshll.u32 %v3086, 16
    %v3220 = vrot.slane %v3218, 5
    %v3221 = vor.u32 %v3217, %v3220
    %v3222 = vrot.slane %v3221, 4
    %v3224 = vshll.u32 %v3087, 16
    %v3226 = vrot.slane %v3224, 5
    %v3227 = vsel %vm1229, %v3222, %v3226
    %v3229 = vshrl.u32 %v3088, 16
    %v3231 = vrot.slane %v3229, 4
    %v3232 = vshll.u32 %v3088, 16
    %v3234 = vrot.slane %v3232, 5
    %v3235 = vor.u32 %v3231, %v3234
    %v3236 = vrot.slane %v3235, 4
    %v3238 = vshll.u32 %v3089, 16
    %v3240 = vrot.slane %v3238, 5
    %v3241 = vsel %vm1229, %v3236, %v3240
    %v3243 = vshrl.u32 %v3090, 16
    %v3245 = vrot.slane %v3243, 4
    %v3246 = vshll.u32 %v3090, 16
    %v3248 = vrot.slane %v3246, 5
    %v3249 = vor.u32 %v3245, %v3248
    %v3250 = vrot.slane %v3249, 4
    %v3252 = vshll.u32 %v3091, 16
    %v3254 = vrot.slane %v3252, 5
    %v3255 = vsel %vm1229, %v3250, %v3254
    %v3257 = vshrl.u32 %v3092, 16
    %v3259 = vrot.slane %v3257, 4
    %v3260 = vshll.u32 %v3092, 16
    %v3262 = vrot.slane %v3260, 5
    %v3263 = vor.u32 %v3259, %v3262
    %v3264 = vrot.slane %v3263, 4
    %v3266 = vshll.u32 %v3093, 16
    %v3268 = vrot.slane %v3266, 5
    %v3269 = vsel %vm1229, %v3264, %v3268
    %v3271 = vshrl.u32 %v3094, 16
    %v3273 = vrot.slane %v3271, 4
    %v3274 = vshll.u32 %v3094, 16
    %v3276 = vrot.slane %v3274, 5
    %v3277 = vor.u32 %v3273, %v3276
    %v3278 = vrot.slane %v3277, 4
    %v3280 = vshll.u32 %v3095, 16
    %v3282 = vrot.slane %v3280, 5
    %v3283 = vsel %vm1229, %v3278, %v3282
    %v3285 = vshrl.u32 %v3096, 16
    %v3287 = vrot.slane %v3285, 4
    %v3288 = vshll.u32 %v3096, 16
    %v3290 = vrot.slane %v3288, 5
    %v3291 = vor.u32 %v3287, %v3290
    %v3292 = vrot.slane %v3291, 4
    %v3294 = vshll.u32 %v3097, 16
    %v3296 = vrot.slane %v3294, 5
    %v3297 = vsel %vm1229, %v3292, %v3296
    %v3299 = vshrl.u32 %v3098, 16
    %v3301 = vrot.slane %v3299, 4
    %v3302 = vshll.u32 %v3098, 16
    %v3304 = vrot.slane %v3302, 5
    %v3305 = vor.u32 %v3301, %v3304
    %v3306 = vrot.slane %v3305, 4
    %v3308 = vshll.u32 %v3099, 16
    %v3310 = vrot.slane %v3308, 5
    %v3311 = vsel %vm1229, %v3306, %v3310
    %v3313 = vshrl.u32 %v3100, 16
    %v3315 = vrot.slane %v3313, 4
    %v3316 = vshll.u32 %v3100, 16
    %v3318 = vrot.slane %v3316, 5
    %v3319 = vor.u32 %v3315, %v3318
    %v3320 = vrot.slane %v3319, 4
    %v3322 = vshll.u32 %v3101, 16
    %v3324 = vrot.slane %v3322, 5
    %v3325 = vsel %vm1229, %v3320, %v3324
    %s3326 = scalar_lea.vmem %s4, 112
    %v3327 = vld [vmem:[%s3326] sm:$0xf]
    %v3328 = vld [vmem:[%s3326 + $0x4] sm:$0xf]
    %v3329 = vld [vmem:[%s3326 + $0x8] sm:$0xf]
    %v3330 = vld [vmem:[%s3326 + $0xc] sm:$0xf]
    %v3331 = vunpack.c.l.b16 %v3115
    %v3332 = vunpack.c.l.b16 %v3129
    %v3333 = vunpack.c.l.b16 %v3143
    %v3334 = vunpack.c.l.b16 %v3157
    %v3335 = vunpack.c.l.b16 %v3171
    %v3336 = vunpack.c.l.b16 %v3185
    %v3337 = vunpack.c.l.b16 %v3199
    %v3338 = vunpack.c.l.b16 %v3213
    %v3339 = vunpack.c.l.b16 %v3227
    %v3340 = vunpack.c.l.b16 %v3241
    %v3341 = vunpack.c.l.b16 %v3255
    %v3342 = vunpack.c.l.b16 %v3269
    %v3343 = vunpack.c.l.b16 %v3283
    %v3344 = vunpack.c.l.b16 %v3297
    %v3345 = vunpack.c.l.b16 %v3311
    %v3346 = vunpack.c.l.b16 %v3325
    %v3347 = vpack.c.b16 %v3332, %v3331
    %v3348 = vpack.c.b16 %v3334, %v3333
    %v3349 = vpack.c.b16 %v3336, %v3335
    %v3350 = vpack.c.b16 %v3338, %v3337
    %v3351 = vpack.c.b16 %v3340, %v3339
    %v3352 = vpack.c.b16 %v3342, %v3341
    %v3353 = vpack.c.b16 %v3344, %v3343
    %v3354 = vpack.c.b16 %v3346, %v3345
    %v3359 = vunpack.c.l.b16 %v3327
    %v3360 = vunpack.c.l.b16 %v3328
    %v3361 = vunpack.c.l.b16 %v3329
    %v3362 = vunpack.c.l.b16 %v3330
    %v3363 = vpack.c.b16 %v3360, %v3359
    %v3364 = vpack.c.b16 %v3362, %v3361
    %v3368 = vsel %vm58, %v3347, 0
    %v3371 = vsel %vm58, %v3348, 0
    %v3374 = vsel %vm58, %v3349, 0
    %v3377 = vsel %vm58, %v3350, 0
    %v3380 = vsel %vm58, %v3351, 0
    %v3383 = vsel %vm58, %v3352, 0
    %v3386 = vsel %vm58, %v3353, 0
    %v3389 = vsel %vm58, %v3354, 0
    %3391 = vmatprep.subr.bf16.mxu0 0
    %3392 = vmatpush1.bf16.msra.mxu0 %v3363
    %3393 = vmatprep.subr.bf16.mxu0 0
    %3394 = vmatpush1.bf16.msra.mxu0 %v3364
    %3395 = vmatprep.subr.bf16.mxu0 0
    %3396 = vmatpush1.bf16.msra.mxu0 0
    %3397 = vmatprep.subr.bf16.mxu0 0
    %3398 = vmatpush1.bf16.msra.mxu0 0
    %3399 = vmatprep.subr.bf16.mxu0 0
    %3400 = vmatpush1.bf16.msra.mxu0 0
    %3401 = vmatprep.subr.bf16.mxu0 0
    %3402 = vmatpush1.bf16.msra.mxu0 0
    %3403 = vmatprep.subr.bf16.mxu0 0
    %3404 = vmatpush1.bf16.msra.mxu0 0
    %3405 = vmatprep.subr.bf16.mxu0 0
    %3406 = vmatpush1.bf16.msra.mxu0 0
    %3407 = vmatprep.subr.bf16.mxu0 0
    %3408 = vmatpush1.bf16.msra.mxu0 0
    %3409 = vmatprep.subr.bf16.mxu0 0
    %3410 = vmatpush1.bf16.msra.mxu0 0
    %3411 = vmatprep.subr.bf16.mxu0 0
    %3412 = vmatpush1.bf16.msra.mxu0 0
    %3413 = vmatprep.subr.bf16.mxu0 0
    %3414 = vmatpush1.bf16.msra.mxu0 0
    %3415 = vmatprep.subr.bf16.mxu0 0
    %3416 = vmatpush1.bf16.msra.mxu0 0
    %3417 = vmatprep.subr.bf16.mxu0 0
    %3418 = vmatpush1.bf16.msra.mxu0 0
    %3419 = vmatprep.subr.bf16.mxu0 0
    %3420 = vmatpush1.bf16.msra.mxu0 0
    %3421 = vmatprep.subr.bf16.mxu0 0
    %3422 = vmatpush1.bf16.msra.mxu0 0
    %3423 = vmatprep.mubr.bf16.mxu0 0
    %3424 = vmatmul.mubr.bf16.gmra.mrb[0].mxu0 %v3368
    %v3425 = vpop.f32.mrb[0].mxu0
    %v3426 = vadd.f32 0.0, %v3425
    %v3427 = vpop.f32.mrb[0].mxu0
    %v3428 = vpop.f32.mrb[0].mxu0
    %v3429 = vadd.f32 0.0, %v3428
    %v3430 = vpop.f32.mrb[0].mxu0
    %3431 = vmatprep.mubr.bf16.mxu0 0
    %3432 = vmatmul.mubr.bf16.gmra.mrb[0].mxu0 %v3371
    %v3433 = vpop.f32.mrb[0].mxu0
    %v3434 = vadd.f32 0.0, %v3433
    %v3435 = vpop.f32.mrb[0].mxu0
    %v3436 = vpop.f32.mrb[0].mxu0
    %v3437 = vadd.f32 0.0, %v3436
    %v3438 = vpop.f32.mrb[0].mxu0
    %3439 = vmatprep.mubr.bf16.mxu0 0
    %3440 = vmatmul.mubr.bf16.gmra.mrb[0].mxu0 %v3374
    %v3441 = vpop.f32.mrb[0].mxu0
    %v3442 = vadd.f32 0.0, %v3441
    %v3443 = vpop.f32.mrb[0].mxu0
    %v3444 = vpop.f32.mrb[0].mxu0
    %v3445 = vadd.f32 0.0, %v3444
    %v3446 = vpop.f32.mrb[0].mxu0
    %3447 = vmatprep.mubr.bf16.mxu0 0
    %3448 = vmatmul.mubr.bf16.gmra.mrb[0].mxu0 %v3377
    %v3449 = vpop.f32.mrb[0].mxu0
    %v3450 = vadd.f32 0.0, %v3449
    %v3451 = vpop.f32.mrb[0].mxu0
    %v3452 = vpop.f32.mrb[0].mxu0
    %v3453 = vadd.f32 0.0, %v3452
    %v3454 = vpop.f32.mrb[0].mxu0
    %3455 = vmatprep.mubr.bf16.mxu0 0
    %3456 = vmatmul.mubr.bf16.gmra.mrb[0].mxu0 %v3380
    %v3457 = vpop.f32.mrb[0].mxu0
    %v3458 = vadd.f32 0.0, %v3457
    %v3459 = vpop.f32.mrb[0].mxu0
    %v3460 = vpop.f32.mrb[0].mxu0
    %v3461 = vadd.f32 0.0, %v3460
    %v3462 = vpop.f32.mrb[0].mxu0
    %3463 = vmatprep.mubr.bf16.mxu0 0
    %3464 = vmatmul.mubr.bf16.gmra.mrb[0].mxu0 %v3383
    %v3465 = vpop.f32.mrb[0].mxu0
    %v3466 = vadd.f32 0.0, %v3465
    %v3467 = vpop.f32.mrb[0].mxu0
    %v3468 = vpop.f32.mrb[0].mxu0
    %v3469 = vadd.f32 0.0, %v3468
    %v3470 = vpop.f32.mrb[0].mxu0
    %3471 = vmatprep.mubr.bf16.mxu0 0
    %3472 = vmatmul.mubr.bf16.gmra.mrb[0].mxu0 %v3386
    %v3473 = vpop.f32.mrb[0].mxu0
    %v3474 = vadd.f32 0.0, %v3473
    %v3475 = vpop.f32.mrb[0].mxu0
    %v3476 = vpop.f32.mrb[0].mxu0
    %v3477 = vadd.f32 0.0, %v3476
    %v3478 = vpop.f32.mrb[0].mxu0
    %3479 = vmatprep.mubr.bf16.mxu0 0
    %3480 = vmatmul.mubr.bf16.gmra.mrb[0].mxu0 %v3389
    %v3481 = vpop.f32.mrb[0].mxu0
    %v3482 = vadd.f32 0.0, %v3481
    %v3483 = vpop.f32.mrb[0].mxu0
    %v3484 = vpop.f32.mrb[0].mxu0
    %v3485 = vadd.f32 0.0, %v3484
    %v3486 = vpop.f32.mrb[0].mxu0
    %3487 = vdwg.mxu0
    %v3488 = vadd.f32 %v3054, %v3426
    %v3489 = vadd.f32 %v3055, %v3429
    %v3490 = vadd.f32 %v3056, %v3434
    %v3491 = vadd.f32 %v3057, %v3437
    %v3492 = vadd.f32 %v3058, %v3442
    %v3493 = vadd.f32 %v3059, %v3445
    %v3494 = vadd.f32 %v3060, %v3450
    %v3495 = vadd.f32 %v3061, %v3453
    %v3496 = vadd.f32 %v3062, %v3458
    %v3497 = vadd.f32 %v3063, %v3461
    %v3498 = vadd.f32 %v3064, %v3466
    %v3499 = vadd.f32 %v3065, %v3469
    %v3500 = vadd.f32 %v3066, %v3474
    %v3501 = vadd.f32 %v3067, %v3477
    %v3502 = vadd.f32 %v3068, %v3482
    %v3503 = vadd.f32 %v3069, %v3485
    %v3504 = vld [vmem:[%s2859] sm:$0xe]
    %v3505 = vld [vmem:[%s2859 + $0x8] sm:$0xe]
    %v3506 = vld [vmem:[%s2859 + $0x10] sm:$0xe]
    %v3507 = vld [vmem:[%s2859 + $0x18] sm:$0xe]
    %v3508 = vld [vmem:[%s2859 + $0x20] sm:$0xe]
    %v3509 = vld [vmem:[%s2859 + $0x28] sm:$0xe]
    %v3510 = vld [vmem:[%s2859 + $0x30] sm:$0xe]
    %v3511 = vld [vmem:[%s2859 + $0x38] sm:$0xe]
    %v3512 = vld [vmem:[%s2859 + $0x50] sm:$0xe]
    %v3513 = vld [vmem:[%s2859 + $0x58] sm:$0xe]
    %v3514 = vld [vmem:[%s2859 + $0x60] sm:$0xe]
    %v3515 = vld [vmem:[%s2859 + $0x68] sm:$0xe]
    %v3516 = vld [vmem:[%s2859 + $0x70] sm:$0xe]
    %v3517 = vld [vmem:[%s2859 + $0x78] sm:$0xe]
    %v3518 = vld [vmem:[%s2859 + $0x80] sm:$0xe]
    %v3519 = vld [vmem:[%s2859 + $0x88] sm:$0xe]
    %v3552 = vrot.slane %v3504, 5
    %v3553 = vrot.slane %v3552, 4
    %v3554 = vrot.slane %v3071, 5
    %v3555 = vsel %vm1682, %v3553, %v3554
    %v3556 = vrot.slane %v3505, 5
    %v3557 = vrot.slane %v3556, 4
    %v3558 = vrot.slane %v3073, 5
    %v3559 = vsel %vm1682, %v3557, %v3558
    %v3560 = vrot.slane %v3506, 5
    %v3561 = vrot.slane %v3560, 4
    %v3562 = vrot.slane %v3075, 5
    %v3563 = vsel %vm1682, %v3561, %v3562
    %v3564 = vrot.slane %v3507, 5
    %v3565 = vrot.slane %v3564, 4
    %v3566 = vrot.slane %v3077, 5
    %v3567 = vsel %vm1682, %v3565, %v3566
    %v3568 = vrot.slane %v3508, 5
    %v3569 = vrot.slane %v3568, 4
    %v3570 = vrot.slane %v3079, 5
    %v3571 = vsel %vm1682, %v3569, %v3570
    %v3572 = vrot.slane %v3509, 5
    %v3573 = vrot.slane %v3572, 4
    %v3574 = vrot.slane %v3081, 5
    %v3575 = vsel %vm1682, %v3573, %v3574
    %v3576 = vrot.slane %v3510, 5
    %v3577 = vrot.slane %v3576, 4
    %v3578 = vrot.slane %v3083, 5
    %v3579 = vsel %vm1682, %v3577, %v3578
    %v3580 = vrot.slane %v3511, 5
    %v3581 = vrot.slane %v3580, 4
    %v3582 = vrot.slane %v3085, 5
    %v3583 = vsel %vm1682, %v3581, %v3582
    %v3584 = vrot.slane %v3512, 5
    %v3585 = vrot.slane %v3584, 4
    %v3586 = vrot.slane %v3087, 5
    %v3587 = vsel %vm1682, %v3585, %v3586
    %v3588 = vrot.slane %v3513, 5
    %v3589 = vrot.slane %v3588, 4
    %v3590 = vrot.slane %v3089, 5
    %v3591 = vsel %vm1682, %v3589, %v3590
    %v3592 = vrot.slane %v3514, 5
    %v3593 = vrot.slane %v3592, 4
    %v3594 = vrot.slane %v3091, 5
    %v3595 = vsel %vm1682, %v3593, %v3594
    %v3596 = vrot.slane %v3515, 5
    %v3597 = vrot.slane %v3596, 4
    %v3598 = vrot.slane %v3093, 5
    %v3599 = vsel %vm1682, %v3597, %v3598
    %v3600 = vrot.slane %v3516, 5
    %v3601 = vrot.slane %v3600, 4
    %v3602 = vrot.slane %v3095, 5
    %v3603 = vsel %vm1682, %v3601, %v3602
    %v3604 = vrot.slane %v3517, 5
    %v3605 = vrot.slane %v3604, 4
    %v3606 = vrot.slane %v3097, 5
    %v3607 = vsel %vm1682, %v3605, %v3606
    %v3608 = vrot.slane %v3518, 5
    %v3609 = vrot.slane %v3608, 4
    %v3610 = vrot.slane %v3099, 5
    %v3611 = vsel %vm1682, %v3609, %v3610
    %v3612 = vrot.slane %v3519, 5
    %v3613 = vrot.slane %v3612, 4
    %v3614 = vrot.slane %v3101, 5
    %v3615 = vsel %vm1682, %v3613, %v3614
    %s3616 = scalar_lea.vmem %s4, 128
    %v3617 = vld [vmem:[%s3616] sm:$0xf]
    %v3618 = vld [vmem:[%s3616 + $0x4] sm:$0xf]
    %v3619 = vld [vmem:[%s3616 + $0x8] sm:$0xf]
    %v3620 = vld [vmem:[%s3616 + $0xc] sm:$0xf]
    %v3621 = vunpack.c.l.b16 %v3555
    %v3622 = vunpack.c.l.b16 %v3559
    %v3623 = vunpack.c.l.b16 %v3563
    %v3624 = vunpack.c.l.b16 %v3567
    %v3625 = vunpack.c.l.b16 %v3571
    %v3626 = vunpack.c.l.b16 %v3575
    %v3627 = vunpack.c.l.b16 %v3579
    %v3628 = vunpack.c.l.b16 %v3583
    %v3629 = vunpack.c.l.b16 %v3587
    %v3630 = vunpack.c.l.b16 %v3591
    %v3631 = vunpack.c.l.b16 %v3595
    %v3632 = vunpack.c.l.b16 %v3599
    %v3633 = vunpack.c.l.b16 %v3603
    %v3634 = vunpack.c.l.b16 %v3607
    %v3635 = vunpack.c.l.b16 %v3611
    %v3636 = vunpack.c.l.b16 %v3615
    %v3637 = vpack.c.b16 %v3622, %v3621
    %v3638 = vpack.c.b16 %v3624, %v3623
    %v3639 = vpack.c.b16 %v3626, %v3625
    %v3640 = vpack.c.b16 %v3628, %v3627
    %v3641 = vpack.c.b16 %v3630, %v3629
    %v3642 = vpack.c.b16 %v3632, %v3631
    %v3643 = vpack.c.b16 %v3634, %v3633
    %v3644 = vpack.c.b16 %v3636, %v3635
    %v3649 = vunpack.c.l.b16 %v3617
    %v3650 = vunpack.c.l.b16 %v3618
    %v3651 = vunpack.c.l.b16 %v3619
    %v3652 = vunpack.c.l.b16 %v3620
    %v3653 = vpack.c.b16 %v3650, %v3649
    %v3654 = vpack.c.b16 %v3652, %v3651
    %v3658 = vsel %vm58, %v3637, 0
    %v3661 = vsel %vm58, %v3638, 0
    %v3664 = vsel %vm58, %v3639, 0
    %v3667 = vsel %vm58, %v3640, 0
    %v3670 = vsel %vm58, %v3641, 0
    %v3673 = vsel %vm58, %v3642, 0
    %v3676 = vsel %vm58, %v3643, 0
    %v3679 = vsel %vm58, %v3644, 0
    %3681 = vmatprep.subr.bf16.mxu0 0
    %3682 = vmatpush1.bf16.msra.mxu0 %v3653
    %3683 = vmatprep.subr.bf16.mxu0 0
    %3684 = vmatpush1.bf16.msra.mxu0 %v3654
    %3685 = vmatprep.subr.bf16.mxu0 0
    %3686 = vmatpush1.bf16.msra.mxu0 0
    %3687 = vmatprep.subr.bf16.mxu0 0
    %3688 = vmatpush1.bf16.msra.mxu0 0
    %3689 = vmatprep.subr.bf16.mxu0 0
    %3690 = vmatpush1.bf16.msra.mxu0 0
    %3691 = vmatprep.subr.bf16.mxu0 0
    %3692 = vmatpush1.bf16.msra.mxu0 0
    %3693 = vmatprep.subr.bf16.mxu0 0
    %3694 = vmatpush1.bf16.msra.mxu0 0
    %3695 = vmatprep.subr.bf16.mxu0 0
    %3696 = vmatpush1.bf16.msra.mxu0 0
    %3697 = vmatprep.subr.bf16.mxu0 0
    %3698 = vmatpush1.bf16.msra.mxu0 0
    %3699 = vmatprep.subr.bf16.mxu0 0
    %3700 = vmatpush1.bf16.msra.mxu0 0
    %3701 = vmatprep.subr.bf16.mxu0 0
    %3702 = vmatpush1.bf16.msra.mxu0 0
    %3703 = vmatprep.subr.bf16.mxu0 0
    %3704 = vmatpush1.bf16.msra.mxu0 0
    %3705 = vmatprep.subr.bf16.mxu0 0
    %3706 = vmatpush1.bf16.msra.mxu0 0
    %3707 = vmatprep.subr.bf16.mxu0 0
    %3708 = vmatpush1.bf16.msra.mxu0 0
    %3709 = vmatprep.subr.bf16.mxu0 0
    %3710 = vmatpush1.bf16.msra.mxu0 0
    %3711 = vmatprep.subr.bf16.mxu0 0
    %3712 = vmatpush1.bf16.msra.mxu0 0
    %3713 = vmatprep.mubr.bf16.mxu0 0
    %3714 = vmatmul.mubr.bf16.gmra.mrb[0].mxu0 %v3658
    %v3715 = vpop.f32.mrb[0].mxu0
    %v3716 = vadd.f32 0.0, %v3715
    %v3717 = vpop.f32.mrb[0].mxu0
    %v3718 = vpop.f32.mrb[0].mxu0
    %v3719 = vadd.f32 0.0, %v3718
    %v3720 = vpop.f32.mrb[0].mxu0
    %3721 = vmatprep.mubr.bf16.mxu0 0
    %3722 = vmatmul.mubr.bf16.gmra.mrb[0].mxu0 %v3661
    %v3723 = vpop.f32.mrb[0].mxu0
    %v3724 = vadd.f32 0.0, %v3723
    %v3725 = vpop.f32.mrb[0].mxu0
    %v3726 = vpop.f32.mrb[0].mxu0
    %v3727 = vadd.f32 0.0, %v3726
    %v3728 = vpop.f32.mrb[0].mxu0
    %3729 = vmatprep.mubr.bf16.mxu0 0
    %3730 = vmatmul.mubr.bf16.gmra.mrb[0].mxu0 %v3664
    %v3731 = vpop.f32.mrb[0].mxu0
    %v3732 = vadd.f32 0.0, %v3731
    %v3733 = vpop.f32.mrb[0].mxu0
    %v3734 = vpop.f32.mrb[0].mxu0
    %v3735 = vadd.f32 0.0, %v3734
    %v3736 = vpop.f32.mrb[0].mxu0
    %3737 = vmatprep.mubr.bf16.mxu0 0
    %3738 = vmatmul.mubr.bf16.gmra.mrb[0].mxu0 %v3667
    %v3739 = vpop.f32.mrb[0].mxu0
    %v3740 = vadd.f32 0.0, %v3739
    %v3741 = vpop.f32.mrb[0].mxu0
    %v3742 = vpop.f32.mrb[0].mxu0
    %v3743 = vadd.f32 0.0, %v3742
    %v3744 = vpop.f32.mrb[0].mxu0
    %3745 = vmatprep.mubr.bf16.mxu0 0
    %3746 = vmatmul.mubr.bf16.gmra.mrb[0].mxu0 %v3670
    %v3747 = vpop.f32.mrb[0].mxu0
    %v3748 = vadd.f32 0.0, %v3747
    %v3749 = vpop.f32.mrb[0].mxu0
    %v3750 = vpop.f32.mrb[0].mxu0
    %v3751 = vadd.f32 0.0, %v3750
    %v3752 = vpop.f32.mrb[0].mxu0
    %3753 = vmatprep.mubr.bf16.mxu0 0
    %3754 = vmatmul.mubr.bf16.gmra.mrb[0].mxu0 %v3673
    %v3755 = vpop.f32.mrb[0].mxu0
    %v3756 = vadd.f32 0.0, %v3755
    %v3757 = vpop.f32.mrb[0].mxu0
    %v3758 = vpop.f32.mrb[0].mxu0
    %v3759 = vadd.f32 0.0, %v3758
    %v3760 = vpop.f32.mrb[0].mxu0
    %3761 = vmatprep.mubr.bf16.mxu0 0
    %3762 = vmatmul.mubr.bf16.gmra.mrb[0].mxu0 %v3676
    %v3763 = vpop.f32.mrb[0].mxu0
    %v3764 = vadd.f32 0.0, %v3763
    %v3765 = vpop.f32.mrb[0].mxu0
    %v3766 = vpop.f32.mrb[0].mxu0
    %v3767 = vadd.f32 0.0, %v3766
    %v3768 = vpop.f32.mrb[0].mxu0
    %3769 = vmatprep.mubr.bf16.mxu0 0
    %3770 = vmatmul.mubr.bf16.gmra.mrb[0].mxu0 %v3679
    %v3771 = vpop.f32.mrb[0].mxu0
    %v3772 = vadd.f32 0.0, %v3771
    %v3773 = vpop.f32.mrb[0].mxu0
    %v3774 = vpop.f32.mrb[0].mxu0
    %v3775 = vadd.f32 0.0, %v3774
    %v3776 = vpop.f32.mrb[0].mxu0
    %3777 = vdwg.mxu0
    %v3778 = vadd.f32 %v3488, %v3716
    %v3779 = vadd.f32 %v3489, %v3719
    %v3780 = vadd.f32 %v3490, %v3724
    %v3781 = vadd.f32 %v3491, %v3727
    %v3782 = vadd.f32 %v3492, %v3732
    %v3783 = vadd.f32 %v3493, %v3735
    %v3784 = vadd.f32 %v3494, %v3740
    %v3785 = vadd.f32 %v3495, %v3743
    %v3786 = vadd.f32 %v3496, %v3748
    %v3787 = vadd.f32 %v3497, %v3751
    %v3788 = vadd.f32 %v3498, %v3756
    %v3789 = vadd.f32 %v3499, %v3759
    %v3790 = vadd.f32 %v3500, %v3764
    %v3791 = vadd.f32 %v3501, %v3767
    %v3792 = vadd.f32 %v3502, %v3772
    %v3793 = vadd.f32 %v3503, %v3775
    %v3794 = vmax.f32 %v3778, 0.0
    %v3795 = vmax.f32 %v3779, 0.0
    %v3796 = vmax.f32 %v3780, 0.0
    %v3797 = vmax.f32 %v3781, 0.0
    %v3798 = vmax.f32 %v3782, 0.0
    %v3799 = vmax.f32 %v3783, 0.0
    %v3800 = vmax.f32 %v3784, 0.0
    %v3801 = vmax.f32 %v3785, 0.0
    %v3802 = vmax.f32 %v3786, 0.0
    %v3803 = vmax.f32 %v3787, 0.0
    %v3804 = vmax.f32 %v3788, 0.0
    %v3805 = vmax.f32 %v3789, 0.0
    %v3806 = vmax.f32 %v3790, 0.0
    %v3807 = vmax.f32 %v3791, 0.0
    %v3808 = vmax.f32 %v3792, 0.0
    %v3809 = vmax.f32 %v3793, 0.0
    %3810 = vst.msk [vmem:[#allocation3] sm:$0xff] %vm58, %v3794
    %3811 = vst.msk [vmem:[#allocation3 + $0x8] sm:$0xff] %vm58, %v3795
    %3812 = vst.msk [vmem:[#allocation3 + $0x10] sm:$0xff] %vm58, %v3796
    %3813 = vst.msk [vmem:[#allocation3 + $0x18] sm:$0xff] %vm58, %v3797
    %3814 = vst.msk [vmem:[#allocation3 + $0x20] sm:$0xff] %vm58, %v3798
    %3815 = vst.msk [vmem:[#allocation3 + $0x28] sm:$0xff] %vm58, %v3799
    %3816 = vst.msk [vmem:[#allocation3 + $0x30] sm:$0xff] %vm58, %v3800
    %3817 = vst.msk [vmem:[#allocation3 + $0x38] sm:$0xff] %vm58, %v3801
    %3818 = vst.msk [vmem:[#allocation3 + $0x40] sm:$0xff] %vm58, %v3802
    %3819 = vst.msk [vmem:[#allocation3 + $0x48] sm:$0xff] %vm58, %v3803
    %3820 = vst.msk [vmem:[#allocation3 + $0x50] sm:$0xff] %vm58, %v3804
    %3821 = vst.msk [vmem:[#allocation3 + $0x58] sm:$0xff] %vm58, %v3805
    %3822 = vst.msk [vmem:[#allocation3 + $0x60] sm:$0xff] %vm58, %v3806
    %3823 = vst.msk [vmem:[#allocation3 + $0x68] sm:$0xff] %vm58, %v3807
    %3824 = vst.msk [vmem:[#allocation3 + $0x70] sm:$0xff] %vm58, %v3808
    %3825 = vst.msk [vmem:[#allocation3 + $0x78] sm:$0xff] %vm58, %v3809
    // Predicated region
    $region38: #{run.1} parent=1 // pred_check
      _
    $region39: #{run.1} parent=1 // pred_check_branch
      %3827 = sbr.rel (0) target = $region41
    $region40: #{run.1} parent=1 // pred_region
      %s3829 = ssub.s32 2048, 2048
      %3830 = vsyncadd [#allocation4], %s3829
      %s3831 = sshll.u32 [#allocation3], 4
      %s3832 = int_to_ptr.vmem [resolvable:$true] %s3831
      %3837 = dma.vmem_to_hbm [thread:$0]  %s3832, 2048, %s9, [#allocation4], 128, 128, 8
    $region41: #{run.1} parent=1 // pred_fallthru
      _
    // Predicated region
    $region42: #{run.1} parent=1 // pred_check
      _
    $region43: #{run.1} parent=1 // pred_check_branch
      %3839 = sbr.rel (0) target = $region45
    $region44: #{run.1} parent=1 // pred_region
      %3840 = dma.done [#allocation4], 2048
    $region45: #{run.1} parent=1 // pred_fallthru
      _
    %3841 = vsyncpa [#allocation4], 1

</llo_original>
